<compile_context>
chip_gen: v5e
topology: v5e:2x2
jax: 0.10.0
libtpu: 0.0.40
codegen_flags: <defaults>
</compile_context>

<pallas_src>
import jax
import jax.numpy as jnp
from jax import lax
from jax.experimental import pallas as pl
from jax.experimental.pallas import tpu as pltpu

EPS = 1e-5


# ----------------------------------------------------------------------------
# Stage 1: BN1 (precomputed scale/shift) + ReLU + ConvTranspose2d(3, s=2, p=1, op=1)
# ----------------------------------------------------------------------------
def _stage1_kernel(x_ref, s_ref, b_ref, w_ref, y_ref, ssum_ref, ssq_ref, pad_ref):
    """Per-image: 4 accumulating bf16 matmuls -> parity-packed upsampled map.

    x_ref    : (1, H, W, Ci)   f32   input tile (one image)
    s_ref    : (1, 1, Ci)      f32   BN1 scale  (gamma / sqrt(var+eps))
    b_ref    : (1, 1, Ci)      f32   BN1 shift  (beta - mean*scale)
    w_ref    : (4, Ci, 4*Co)   bf16  per-source-slab packed ConvTranspose weight
    y_ref    : (1, H, W, 4*Co) bf16  parity-packed output [ee|eo|oe|oo]
    ssum_ref : (1, 1, 4*Co)    f32   per-step column sums   (for BN2 stats)
    ssq_ref  : (1, 1, 4*Co)    f32   per-step column sum-sq (for BN2 stats)
    pad_ref  : (H+1, W+1, Ci)  f32   VMEM scratch, zero halo on bottom/right
    """
    _, H, W, Ci = x_ref.shape
    Co4 = y_ref.shape[3]

    act = jnp.maximum(x_ref[0] * s_ref[...] + b_ref[...], 0.0)          # (H, W, Ci)

    # Halo-only zero (scratch persists across grid steps; re-zero every step so
    # correctness does not depend on core/grid assignment), then interior.
    pad_ref[H:H + 1, :, :] = jnp.zeros((1, W + 1, Ci), jnp.float32)
    pad_ref[:, W:W + 1, :] = jnp.zeros((H + 1, 1, Ci), jnp.float32)
    pad_ref[0:H, 0:W, :] = act

    # Four sub-pixel source slabs -> accumulating bf16 matmuls against the
    # matching (Ci, 4*Co) weight blocks.  No concat, no im2col buffer.
    slabs = (act.reshape(H * W, Ci),                                     # a[i  , j  ]
             pad_ref[0:H, 1:W + 1, :].reshape(H * W, Ci),                # a[i  , j+1]
             pad_ref[1:H + 1, 0:W, :].reshape(H * W, Ci),                # a[i+1, j  ]
             pad_ref[1:H + 1, 1:W + 1, :].reshape(H * W, Ci))            # a[i+1, j+1]
    r = None
    for k, slab in enumerate(slabs):
        p = jnp.dot(slab.astype(jnp.bfloat16), w_ref[k],
                    preferred_element_type=jnp.float32)                  # (H*W, 4*Co)
        r = p if r is None else r + p

    y_ref[...] = r.astype(jnp.bfloat16).reshape(1, H, W, Co4)
    # Partial sums for the second BatchNorm's batch statistics (f32, from the
    # f32 accumulator rather than the rounded bf16 store).
    ssum_ref[...] = jnp.sum(r, axis=0, keepdims=True).reshape(1, 1, Co4)
    ssq_ref[...] = jnp.sum(r * r, axis=0, keepdims=True).reshape(1, 1, Co4)


# ----------------------------------------------------------------------------
# Stage 2: BN2 (precomputed scale/shift) + ReLU + Conv2d(3, s=1, p=1)
#          computed directly in the parity-packed domain.
# ----------------------------------------------------------------------------
def _stage2_kernel(y_ref, s_ref, b_ref, w_ref, o_ref, pad_ref):
    """y_ref   : (1, H, W, 4*Co)   bf16  parity-packed stage-1 output
    s_ref   : (1, 1, 4*Co)      f32   BN2 scale, tiled over the 4 parity slots
    b_ref   : (1, 1, 4*Co)      f32   BN2 shift, tiled over the 4 parity slots
    w_ref   : (9, 4*Co, 4*Co)   bf16  per-parity-shift packed 3x3 conv weight
    o_ref   : (1, H, W, 4*Co)   f32   parity-packed final output
    pad_ref : (H+2, W+2, 4*Co)  f32   VMEM scratch, zero halo all around
    """
    _, H, W, C4 = y_ref.shape

    act = jnp.maximum(y_ref[0].astype(jnp.float32) * s_ref[...] + b_ref[...], 0.0)

    # Halo-only zero + interior write (per-step, see stage-1 note).
    pad_ref[0:1, :, :] = jnp.zeros((1, W + 2, C4), jnp.float32)
    pad_ref[H + 1:H + 2, :, :] = jnp.zeros((1, W + 2, C4), jnp.float32)
    pad_ref[:, 0:1, :] = jnp.zeros((H + 2, 1, C4), jnp.float32)
    pad_ref[:, W + 1:W + 2, :] = jnp.zeros((H + 2, 1, C4), jnp.float32)
    pad_ref[1:H + 1, 1:W + 1, :] = act

    # 9 accumulating matmuls over parity-domain spatial shifts.  Every operand
    # is the full-lane-width (H*W, 4*Co) shifted view; which original 3x3 tap
    # feeds which (source parity, output parity) pair is absorbed into zero
    # blocks of w_ref[k].
    r = None
    k = 0
    for ri in (-1, 0, 1):
        for rj in (-1, 0, 1):
            slab = pad_ref[1 + ri:1 + ri + H, 1 + rj:1 + rj + W, :]
            p = jnp.dot(slab.reshape(H * W, C4).astype(jnp.bfloat16), w_ref[k],
                        preferred_element_type=jnp.float32)              # (H*W, 4*Co)
            r = p if r is None else r + p
            k += 1
    o_ref[...] = r.reshape(1, H, W, C4)


# ----------------------------------------------------------------------------
# Weight packing (host/XLA side, tiny)
# ----------------------------------------------------------------------------
def _pack_convtranspose_weight(wt):
    """(Ci, Co, 3, 3) ConvTranspose2d weight -> (4, Ci, 4*Co) bf16 block tensor.

    Slab index k runs over [a00, a01, a10, a11]; column blocks [ee|eo|oe|oo]:
      out[2i  ,2j  ] = a00@W(1,1)
      out[2i  ,2j+1] = a00@W(1,2) + a01@W(1,0)
      out[2i+1,2j  ] = a00@W(2,1) + a10@W(0,1)
      out[2i+1,2j+1] = a00@W(2,2) + a01@W(2,0) + a10@W(0,2) + a11@W(0,0)
    """
    Ci, Co = wt.shape[0], wt.shape[1]
    blocks = {(0, 0): (1, 1), (0, 1): (1, 2), (0, 2): (2, 1), (0, 3): (2, 2),
              (1, 1): (1, 0), (1, 3): (2, 0),
              (2, 2): (0, 1), (2, 3): (0, 2),
              (3, 3): (0, 0)}
    w = jnp.zeros((4, Ci, 4 * Co), jnp.float32)
    for (kb, cb), (ky, kx) in blocks.items():
        w = w.at[kb, :, cb * Co:(cb + 1) * Co].set(
            wt[:, :, ky, kx].astype(jnp.float32))
    return w.astype(jnp.bfloat16)


def _pack_conv_weight(w2):
    """(Co, Co, 3, 3) Conv2d weight -> (9, 4*Co, 4*Co) bf16 per-shift blocks.

    For parity-domain shift (ri, rj), output parity (a, b) and source parity
    (a', b'), the contributing original tap is (dy, dx) = (2*ri + a' - a,
    2*rj + b' - b) when it lies in {-1,0,1}^2, else a zero block.
    """
    Co = w2.shape[0]
    w = jnp.zeros((9, 4 * Co, 4 * Co), jnp.float32)
    shifts = (-1, 0, 1)
    for si, ri in enumerate(shifts):
        for sj, rj in enumerate(shifts):
            k = si * 3 + sj
            for a in (0, 1):
                for ap in (0, 1):
                    dy = 2 * ri + ap - a
                    if dy < -1 or dy > 1:
                        continue
                    for b in (0, 1):
                        for bp in (0, 1):
                            dx = 2 * rj + bp - b
                            if dx < -1 or dx > 1:
                                continue
                            srow = 2 * ap + bp
                            scol = 2 * a + b
                            tap = jnp.transpose(
                                w2[:, :, dy + 1, dx + 1]).astype(jnp.float32)
                            w = w.at[k, srow * Co:(srow + 1) * Co,
                                     scol * Co:(scol + 1) * Co].set(tap)
    return w.astype(jnp.bfloat16)


# ----------------------------------------------------------------------------
# Forward wrapper
# ----------------------------------------------------------------------------
def upsampling_sequence_forward(x_nchw, params):
    x = jnp.transpose(x_nchw, (0, 2, 3, 1)).astype(jnp.float32)          # NCHW -> NHWC
    N, H, W, Ci = x.shape
    Co = params["wt"].shape[1]

    # BN1 batch statistics: single fused pass (E[x], E[x^2]) in XLA.
    m1 = jnp.mean(x, axis=(0, 1, 2))
    v1 = jnp.mean(x * x, axis=(0, 1, 2)) - m1 * m1
    scale1 = params["gamma1"].astype(jnp.float32) * lax.rsqrt(v1 + EPS)
    shift1 = params["beta1"].astype(jnp.float32) - m1 * scale1

    wt_pack = _pack_convtranspose_weight(params["wt"])
    w2_pack = _pack_conv_weight(params["w2"])

    # 32 MiB = default scoped limit on v6e/v7x, raises v5e's 16 MiB; per-step
    # tiles here are tiny.
    # TODO(synk): for large H/W add a row-tile grid axis (1-row halo in stage 1,
    # 1 parity-row halo in stage 2) with a per-generation tile height so v7x's
    # 64 MiB VMEM is respected and the pipeline gets >2 steps per core.
    cparams = pltpu.CompilerParams(
        dimension_semantics=("parallel",),
        vmem_limit_bytes=32 * 1024 * 1024)

    cost1 = pl.CostEstimate(
        flops=2 * N * H * W * (4 * Ci) * (4 * Co),
        transcendentals=0,
        bytes_accessed=(N * H * W * Ci * 4 + 4 * Ci * 4 * Co * 2
                        + N * H * W * 4 * Co * 2 + 2 * N * 4 * Co * 4))

    y1p, psum, psq = pl.pallas_call(
        _stage1_kernel,
        out_shape=(jax.ShapeDtypeStruct((N, H, W, 4 * Co), jnp.bfloat16),
                   jax.ShapeDtypeStruct((N, 1, 4 * Co), jnp.float32),
                   jax.ShapeDtypeStruct((N, 1, 4 * Co), jnp.float32)),
        grid=(N,),
        in_specs=[pl.BlockSpec((1, H, W, Ci), lambda n: (n, 0, 0, 0)),
                  pl.BlockSpec((1, 1, Ci), lambda n: (0, 0, 0)),
                  pl.BlockSpec((1, 1, Ci), lambda n: (0, 0, 0)),
                  pl.BlockSpec((4, Ci, 4 * Co), lambda n: (0, 0, 0))],
        out_specs=(pl.BlockSpec((1, H, W, 4 * Co), lambda n: (n, 0, 0, 0)),
                   pl.BlockSpec((1, 1, 4 * Co), lambda n: (n, 0, 0)),
                   pl.BlockSpec((1, 1, 4 * Co), lambda n: (n, 0, 0))),
        scratch_shapes=[pltpu.VMEM((H + 1, W + 1, Ci), jnp.float32)],
        compiler_params=cparams,
        cost_estimate=cost1,
    )(x, scale1.reshape(1, 1, Ci), shift1.reshape(1, 1, Ci), wt_pack)

    # BN2 batch statistics from the kernel's f32 partial sums (over N, 2H, 2W).
    cnt = jnp.float32(N * H * W * 4)
    s_tot = jnp.sum(psum.reshape(N * 4, Co), axis=0)
    q_tot = jnp.sum(psq.reshape(N * 4, Co), axis=0)
    m2 = s_tot / cnt
    v2 = q_tot / cnt - m2 * m2
    scale2 = params["gamma2"].astype(jnp.float32) * lax.rsqrt(v2 + EPS)
    shift2 = params["beta2"].astype(jnp.float32) - m2 * scale2
    scale2p = jnp.tile(scale2, 4).reshape(1, 1, 4 * Co)
    shift2p = jnp.tile(shift2, 4).reshape(1, 1, 4 * Co)

    cost2 = pl.CostEstimate(
        flops=2 * N * H * W * 9 * (4 * Co) * (4 * Co),
        transcendentals=0,
        bytes_accessed=(N * H * W * 4 * Co * 2 + 9 * (4 * Co) * (4 * Co) * 2
                        + N * H * W * 4 * Co * 4))

    o2p = pl.pallas_call(
        _stage2_kernel,
        out_shape=jax.ShapeDtypeStruct((N, H, W, 4 * Co), jnp.float32),
        grid=(N,),
        in_specs=[pl.BlockSpec((1, H, W, 4 * Co), lambda n: (n, 0, 0, 0)),
                  pl.BlockSpec((1, 1, 4 * Co), lambda n: (0, 0, 0)),
                  pl.BlockSpec((1, 1, 4 * Co), lambda n: (0, 0, 0)),
                  pl.BlockSpec((9, 4 * Co, 4 * Co), lambda n: (0, 0, 0))],
        out_specs=pl.BlockSpec((1, H, W, 4 * Co), lambda n: (n, 0, 0, 0)),
        scratch_shapes=[pltpu.VMEM((H + 2, W + 2, 4 * Co), jnp.float32)],
        compiler_params=cparams,
        cost_estimate=cost2,
    )(y1p, scale2p, shift2p, w2_pack)

    # Final parity interleave + NHWC -> NCHW (one-time layout glue in XLA).
    o = o2p.reshape(N, H, W, 2, 2, Co)
    o = jnp.transpose(o, (0, 1, 3, 2, 4, 5)).reshape(N, 2 * H, 2 * W, Co)
    return jnp.transpose(o, (0, 3, 1, 2))


# ----------------------------------------------------------------------------
# Reference (pure XLA, NCHW) and parameter construction
# ----------------------------------------------------------------------------
def reference_forward(x, params):
    def bn_relu(t, g, b):
        mean = t.mean(axis=(0, 2, 3), keepdims=True)
        var = ((t - mean) ** 2).mean(axis=(0, 2, 3), keepdims=True)
        t = (t - mean) / jnp.sqrt(var + EPS) * g.reshape(1, -1, 1, 1) + b.reshape(1, -1, 1, 1)
        return jnp.maximum(t, 0.0)

    a1 = bn_relu(x, params["gamma1"], params["beta1"])
    rhs = jnp.transpose(params["wt"], (1, 0, 2, 3))[:, :, ::-1, ::-1]
    y1 = lax.conv_general_dilated(
        a1, rhs, window_strides=(1, 1), padding=((1, 2), (1, 2)),
        lhs_dilation=(2, 2), rhs_dilation=(1, 1),
        dimension_numbers=("NCHW", "OIHW", "NCHW"),
        precision=lax.Precision.HIGHEST)
    a2 = bn_relu(y1, params["gamma2"], params["beta2"])
    y2 = lax.conv_general_dilated(
        a2, params["w2"], window_strides=(1, 1), padding=((1, 1), (1, 1)),
        dimension_numbers=("NCHW", "OIHW", "NCHW"),
        precision=lax.Precision.HIGHEST)
    return y2


def init_params(key, n_in, n_out):
    ks = jax.random.split(key, 6)
    return dict(
        gamma1=1.0 + 0.1 * jax.random.normal(ks[0], (n_in,), jnp.float32),
        beta1=0.1 * jax.random.normal(ks[1], (n_in,), jnp.float32),
        wt=0.2 * jax.random.normal(ks[2], (n_in, n_out, 3, 3), jnp.float32),
        gamma2=1.0 + 0.1 * jax.random.normal(ks[3], (n_out,), jnp.float32),
        beta2=0.1 * jax.random.normal(ks[4], (n_out,), jnp.float32),
        w2=0.2 * jax.random.normal(ks[5], (n_out, n_out, 3, 3), jnp.float32),
    )


if __name__ == "__main__":
    # TODO(synk): BatchNorm running-stat (momentum) updates are training-time
    # state mutation with no effect on the returned tensor; not modeled here.
    key = jax.random.PRNGKey(0)
    kx1, kp1, kx2, kp2 = jax.random.split(key, 4)
    fwd = jax.jit(upsampling_sequence_forward)

    # bf16 MXU operands + bf16 HBM intermediate => check error relative to the
    # output magnitude (bf16-level relative accuracy vs an f32 XLA reference).
    REL_TOL = 2e-2

    def check(out, ref):
        err = float(jnp.max(jnp.abs(out - ref)))
        scale = float(jnp.max(jnp.abs(ref))) + 1e-6
        return err, err / scale

    # Primary small case: N=2, Cin=4, 16x16 -> (2, 8, 32, 32).
    n_in, n_out = 4, 8
    x = jax.random.normal(kx1, (2, n_in, 16, 16), jnp.float32)           # NCHW
    params = init_params(kp1, n_in, n_out)
    out = jax.block_until_ready(fwd(x, params))
    assert out.shape == (2, n_out, 32, 32), out.shape
    err, rel = check(out, reference_forward(x, params))
    assert rel < REL_TOL, f"case 1: max abs err {err} (rel {rel})"

    # Second case with more channels (4*Co == 128 -> fully lane-dense outputs).
    n_in2, n_out2 = 8, 32
    x2 = jax.random.normal(kx2, (2, n_in2, 16, 16), jnp.float32)
    params2 = init_params(kp2, n_in2, n_out2)
    out2 = jax.block_until_ready(fwd(x2, params2))
    assert out2.shape == (2, n_out2, 32, 32), out2.shape
    err2, rel2 = check(out2, reference_forward(x2, params2))
    assert rel2 < REL_TOL, f"case 2: max abs err {err2} (rel {rel2})"

    print("KERNEL_OK")
</pallas_src>

<mosaic_0001>
module attributes {stable_mosaic.version = 11 : i64} {
  func.func @_stage1_kernel(%arg0: i32, %arg1: memref<1x16x16x4xf32, #tpu.memory_space<vmem>>, %arg2: memref<1x1x4xf32, #tpu.memory_space<vmem>>, %arg3: memref<1x1x4xf32, #tpu.memory_space<vmem>>, %arg4: memref<4x4x32xbf16, #tpu.memory_space<vmem>>, %arg5: memref<1x16x16x32xbf16, #tpu.memory_space<vmem>>, %arg6: memref<1x1x32xf32, #tpu.memory_space<vmem>>, %arg7: memref<1x1x32xf32, #tpu.memory_space<vmem>>, %arg8: memref<17x17x4xf32, #tpu.memory_space<vmem>>) attributes {dimension_semantics = [#tpu.dimension_semantics<parallel>], iteration_bounds = array<i64: 2>, scalar_prefetch = 0 : i64, scratch_operands = 1 : i64, tpu.core_type = #tpu.core_type<tc>, window_params = [{transform_indices = @transform_0, window_bounds = array<i64: 1, 16, 16, 4>}, {pipeline_mode = #tpu.pipeline_mode<synchronous>, transform_indices = @transform_1, window_bounds = array<i64: 1, 1, 4>}, {pipeline_mode = #tpu.pipeline_mode<synchronous>, transform_indices = @transform_2, window_bounds = array<i64: 1, 1, 4>}, {pipeline_mode = #tpu.pipeline_mode<synchronous>, transform_indices = @transform_3, window_bounds = array<i64: 4, 4, 32>}, {transform_indices = @transform_4, window_bounds = array<i64: 1, 16, 16, 32>}, {transform_indices = @transform_5, window_bounds = array<i64: 1, 1, 32>}, {transform_indices = @transform_6, window_bounds = array<i64: 1, 1, 32>}]} {
    %c0 = arith.constant 0 : index
    %c0_0 = arith.constant 0 : index
    %c0_1 = arith.constant 0 : index
    %c0_2 = arith.constant 0 : index
    %0 = vector.load %arg1[%c0, %c0_0, %c0_1, %c0_2] : memref<1x16x16x4xf32, #tpu.memory_space<vmem>>, vector<1x16x16x4xf32>
    %1 = vector.shape_cast %0 : vector<1x16x16x4xf32> to vector<16x16x4xf32>
    %c0_3 = arith.constant 0 : index
    %c0_4 = arith.constant 0 : index
    %c0_5 = arith.constant 0 : index
    %2 = vector.load %arg2[%c0_3, %c0_4, %c0_5] : memref<1x1x4xf32, #tpu.memory_space<vmem>>, vector<1x1x4xf32>
    %3 = vector.broadcast %2 : vector<1x1x4xf32> to vector<16x16x4xf32>
    %4 = arith.mulf %1, %3 : vector<16x16x4xf32>
    %c0_6 = arith.constant 0 : index
    %c0_7 = arith.constant 0 : index
    %c0_8 = arith.constant 0 : index
    %5 = vector.load %arg3[%c0_6, %c0_7, %c0_8] : memref<1x1x4xf32, #tpu.memory_space<vmem>>, vector<1x1x4xf32>
    %6 = vector.broadcast %5 : vector<1x1x4xf32> to vector<16x16x4xf32>
    %7 = arith.addf %4, %6 : vector<16x16x4xf32>
    %cst = arith.constant 0.000000e+00 : f32
    %8 = vector.broadcast %cst : f32 to vector<16x16x4xf32>
    %9 = arith.maximumf %7, %8 : vector<16x16x4xf32>
    %cst_9 = arith.constant 0.000000e+00 : f32
    %10 = vector.broadcast %cst_9 : f32 to vector<1x17x4xf32>
    %c16 = arith.constant 16 : index
    %c0_10 = arith.constant 0 : index
    %c0_11 = arith.constant 0 : index
    %11 = vector.load %arg8[%c16, %c0_10, %c0_11] : memref<17x17x4xf32, #tpu.memory_space<vmem>>, vector<1x17x4xf32>
    tpu.vector_store %arg8[%c16, %c0_10, %c0_11], %10 {strides = array<i32>} : memref<17x17x4xf32, #tpu.memory_space<vmem>>, vector<1x17x4xf32>,
    %cst_12 = arith.constant 0.000000e+00 : f32
    %12 = vector.broadcast %cst_12 : f32 to vector<17x1x4xf32>
    %c0_13 = arith.constant 0 : index
    %c16_14 = arith.constant 16 : index
    %c0_15 = arith.constant 0 : index
    %13 = vector.load %arg8[%c0_13, %c16_14, %c0_15] : memref<17x17x4xf32, #tpu.memory_space<vmem>>, vector<17x1x4xf32>
    tpu.vector_store %arg8[%c0_13, %c16_14, %c0_15], %12 {strides = array<i32>} : memref<17x17x4xf32, #tpu.memory_space<vmem>>, vector<17x1x4xf32>,
    %c0_16 = arith.constant 0 : index
    %c0_17 = arith.constant 0 : index
    %c0_18 = arith.constant 0 : index
    %14 = vector.load %arg8[%c0_16, %c0_17, %c0_18] : memref<17x17x4xf32, #tpu.memory_space<vmem>>, vector<16x16x4xf32>
    tpu.vector_store %arg8[%c0_16, %c0_17, %c0_18], %9 {strides = array<i32>} : memref<17x17x4xf32, #tpu.memory_space<vmem>>, vector<16x16x4xf32>,
    %15 = vector.shape_cast %9 : vector<16x16x4xf32> to vector<256x4xf32>
    %c0_19 = arith.constant 0 : index
    %c1 = arith.constant 1 : index
    %c0_20 = arith.constant 0 : index
    %16 = vector.load %arg8[%c0_19, %c1, %c0_20] : memref<17x17x4xf32, #tpu.memory_space<vmem>>, vector<16x16x4xf32>
    %17 = vector.shape_cast %16 : vector<16x16x4xf32> to vector<256x4xf32>
    %c1_21 = arith.constant 1 : index
    %c0_22 = arith.constant 0 : index
    %c0_23 = arith.constant 0 : index
    %18 = vector.load %arg8[%c1_21, %c0_22, %c0_23] : memref<17x17x4xf32, #tpu.memory_space<vmem>>, vector<16x16x4xf32>
    %19 = vector.shape_cast %18 : vector<16x16x4xf32> to vector<256x4xf32>
    %c1_24 = arith.constant 1 : index
    %c1_25 = arith.constant 1 : index
    %c0_26 = arith.constant 0 : index
    %20 = vector.load %arg8[%c1_24, %c1_25, %c0_26] : memref<17x17x4xf32, #tpu.memory_space<vmem>>, vector<16x16x4xf32>
    %21 = vector.shape_cast %20 : vector<16x16x4xf32> to vector<256x4xf32>
    %22 = arith.truncf %15 : vector<256x4xf32> to vector<256x4xbf16>
    %c0_27 = arith.constant 0 : index
    %c0_28 = arith.constant 0 : index
    %c0_29 = arith.constant 0 : index
    %23 = vector.load %arg4[%c0_27, %c0_28, %c0_29] : memref<4x4x32xbf16, #tpu.memory_space<vmem>>, vector<1x4x32xbf16>
    %24 = vector.shape_cast %23 : vector<1x4x32xbf16> to vector<4x32xbf16>
    %cst_30 = arith.constant dense<0.000000e+00> : vector<256x32xf32>
    %25 = tpu.matmul %22, %24, %cst_30 {dimension_numbers = #tpu.dot_dimension_numbers<[1], [0], [0], [1], [0, 0, 1, 1], [], []>} : vector<256x4xbf16>, vector<4x32xbf16>, vector<256x32xf32> -> vector<256x32xf32>
    %26 = arith.truncf %17 : vector<256x4xf32> to vector<256x4xbf16>
    %c1_31 = arith.constant 1 : index
    %c0_32 = arith.constant 0 : index
    %c0_33 = arith.constant 0 : index
    %27 = vector.load %arg4[%c1_31, %c0_32, %c0_33] : memref<4x4x32xbf16, #tpu.memory_space<vmem>>, vector<1x4x32xbf16>
    %28 = vector.shape_cast %27 : vector<1x4x32xbf16> to vector<4x32xbf16>
    %cst_34 = arith.constant dense<0.000000e+00> : vector<256x32xf32>
    %29 = tpu.matmul %26, %28, %cst_34 {dimension_numbers = #tpu.dot_dimension_numbers<[1], [0], [0], [1], [0, 0, 1, 1], [], []>} : vector<256x4xbf16>, vector<4x32xbf16>, vector<256x32xf32> -> vector<256x32xf32>
    %30 = arith.addf %25, %29 : vector<256x32xf32>
    %31 = arith.truncf %19 : vector<256x4xf32> to vector<256x4xbf16>
    %c2 = arith.constant 2 : index
    %c0_35 = arith.constant 0 : index
    %c0_36 = arith.constant 0 : index
    %32 = vector.load %arg4[%c2, %c0_35, %c0_36] : memref<4x4x32xbf16, #tpu.memory_space<vmem>>, vector<1x4x32xbf16>
    %33 = vector.shape_cast %32 : vector<1x4x32xbf16> to vector<4x32xbf16>
    %cst_37 = arith.constant dense<0.000000e+00> : vector<256x32xf32>
    %34 = tpu.matmul %31, %33, %cst_37 {dimension_numbers = #tpu.dot_dimension_numbers<[1], [0], [0], [1], [0, 0, 1, 1], [], []>} : vector<256x4xbf16>, vector<4x32xbf16>, vector<256x32xf32> -> vector<256x32xf32>
    %35 = arith.addf %30, %34 : vector<256x32xf32>
    %36 = arith.truncf %21 : vector<256x4xf32> to vector<256x4xbf16>
    %c3 = arith.constant 3 : index
    %c0_38 = arith.constant 0 : index
    %c0_39 = arith.constant 0 : index
    %37 = vector.load %arg4[%c3, %c0_38, %c0_39] : memref<4x4x32xbf16, #tpu.memory_space<vmem>>, vector<1x4x32xbf16>
    %38 = vector.shape_cast %37 : vector<1x4x32xbf16> to vector<4x32xbf16>
    %cst_40 = arith.constant dense<0.000000e+00> : vector<256x32xf32>
    %39 = tpu.matmul %36, %38, %cst_40 {dimension_numbers = #tpu.dot_dimension_numbers<[1], [0], [0], [1], [0, 0, 1, 1], [], []>} : vector<256x4xbf16>, vector<4x32xbf16>, vector<256x32xf32> -> vector<256x32xf32>
    %40 = arith.addf %35, %39 : vector<256x32xf32>
    %41 = arith.truncf %40 : vector<256x32xf32> to vector<256x32xbf16>
    %42 = vector.shape_cast %41 : vector<256x32xbf16> to vector<1x16x16x32xbf16>
    %c0_41 = arith.constant 0 : index
    %c0_42 = arith.constant 0 : index
    %c0_43 = arith.constant 0 : index
    %c0_44 = arith.constant 0 : index
    %43 = vector.load %arg5[%c0_41, %c0_42, %c0_43, %c0_44] : memref<1x16x16x32xbf16, #tpu.memory_space<vmem>>, vector<1x16x16x32xbf16>
    tpu.vector_store %arg5[%c0_41, %c0_42, %c0_43, %c0_44], %42 {strides = array<i32>} : memref<1x16x16x32xbf16, #tpu.memory_space<vmem>>, vector<1x16x16x32xbf16>,
    %cst_45 = arith.constant dense<0.000000e+00> : vector<32xf32>
    %44 = vector.multi_reduction <add>, %40, %cst_45 [0] : vector<256x32xf32> to vector<32xf32>
    %45 = vector.shape_cast %44 : vector<32xf32> to vector<1x32xf32>
    %46 = vector.shape_cast %45 : vector<1x32xf32> to vector<1x1x32xf32>
    %c0_46 = arith.constant 0 : index
    %c0_47 = arith.constant 0 : index
    %c0_48 = arith.constant 0 : index
    %47 = vector.load %arg6[%c0_46, %c0_47, %c0_48] : memref<1x1x32xf32, #tpu.memory_space<vmem>>, vector<1x1x32xf32>
    tpu.vector_store %arg6[%c0_46, %c0_47, %c0_48], %46 {strides = array<i32>} : memref<1x1x32xf32, #tpu.memory_space<vmem>>, vector<1x1x32xf32>,
    %48 = arith.mulf %40, %40 : vector<256x32xf32>
    %cst_49 = arith.constant dense<0.000000e+00> : vector<32xf32>
    %49 = vector.multi_reduction <add>, %48, %cst_49 [0] : vector<256x32xf32> to vector<32xf32>
    %50 = vector.shape_cast %49 : vector<32xf32> to vector<1x32xf32>
    %51 = vector.shape_cast %50 : vector<1x32xf32> to vector<1x1x32xf32>
    %c0_50 = arith.constant 0 : index
    %c0_51 = arith.constant 0 : index
    %c0_52 = arith.constant 0 : index
    %52 = vector.load %arg7[%c0_50, %c0_51, %c0_52] : memref<1x1x32xf32, #tpu.memory_space<vmem>>, vector<1x1x32xf32>
    tpu.vector_store %arg7[%c0_50, %c0_51, %c0_52], %51 {strides = array<i32>} : memref<1x1x32xf32, #tpu.memory_space<vmem>>, vector<1x1x32xf32>,
    return
  }
  func.func @transform_0(%arg0: i32) -> (i32, i32, i32, i32) {
    %c0_i32 = arith.constant 0 : i32
    %c0_i32_0 = arith.constant 0 : i32
    %c0_i32_1 = arith.constant 0 : i32
    %c0_i32_2 = arith.constant 0 : i32
    return %arg0, %c0_i32, %c0_i32_0, %c0_i32_1 : i32, i32, i32, i32
  }
  func.func @transform_1(%arg0: i32) -> (i32, i32, i32) {
    %c0_i32 = arith.constant 0 : i32
    %c0_i32_0 = arith.constant 0 : i32
    %c0_i32_1 = arith.constant 0 : i32
    %c0_i32_2 = arith.constant 0 : i32
    return %c0_i32, %c0_i32_0, %c0_i32_1 : i32, i32, i32
  }
  func.func @transform_2(%arg0: i32) -> (i32, i32, i32) {
    %c0_i32 = arith.constant 0 : i32
    %c0_i32_0 = arith.constant 0 : i32
    %c0_i32_1 = arith.constant 0 : i32
    %c0_i32_2 = arith.constant 0 : i32
    return %c0_i32, %c0_i32_0, %c0_i32_1 : i32, i32, i32
  }
  func.func @transform_3(%arg0: i32) -> (i32, i32, i32) {
    %c0_i32 = arith.constant 0 : i32
    %c0_i32_0 = arith.constant 0 : i32
    %c0_i32_1 = arith.constant 0 : i32
    %c0_i32_2 = arith.constant 0 : i32
    return %c0_i32, %c0_i32_0, %c0_i32_1 : i32, i32, i32
  }
  func.func @transform_4(%arg0: i32) -> (i32, i32, i32, i32) {
    %c0_i32 = arith.constant 0 : i32
    %c0_i32_0 = arith.constant 0 : i32
    %c0_i32_1 = arith.constant 0 : i32
    %c0_i32_2 = arith.constant 0 : i32
    return %arg0, %c0_i32, %c0_i32_0, %c0_i32_1 : i32, i32, i32, i32
  }
  func.func @transform_5(%arg0: i32) -> (i32, i32, i32) {
    %c0_i32 = arith.constant 0 : i32
    %c0_i32_0 = arith.constant 0 : i32
    %c0_i32_1 = arith.constant 0 : i32
    return %arg0, %c0_i32, %c0_i32_0 : i32, i32, i32
  }
  func.func @transform_6(%arg0: i32) -> (i32, i32, i32) {
    %c0_i32 = arith.constant 0 : i32
    %c0_i32_0 = arith.constant 0 : i32
    %c0_i32_1 = arith.constant 0 : i32
    return %arg0, %c0_i32, %c0_i32_0 : i32, i32, i32
  }
}

module attributes {stable_mosaic.version = 11 : i64} {
  func.func @_stage2_kernel(%arg0: i32, %arg1: memref<1x16x16x32xbf16, #tpu.memory_space<vmem>>, %arg2: memref<1x1x32xf32, #tpu.memory_space<vmem>>, %arg3: memref<1x1x32xf32, #tpu.memory_space<vmem>>, %arg4: memref<9x32x32xbf16, #tpu.memory_space<vmem>>, %arg5: memref<1x16x16x32xf32, #tpu.memory_space<vmem>>, %arg6: memref<18x18x32xf32, #tpu.memory_space<vmem>>) attributes {dimension_semantics = [#tpu.dimension_semantics<parallel>], iteration_bounds = array<i64: 2>, scalar_prefetch = 0 : i64, scratch_operands = 1 : i64, tpu.core_type = #tpu.core_type<tc>, window_params = [{transform_indices = @transform_0, window_bounds = array<i64: 1, 16, 16, 32>}, {pipeline_mode = #tpu.pipeline_mode<synchronous>, transform_indices = @transform_1, window_bounds = array<i64: 1, 1, 32>}, {pipeline_mode = #tpu.pipeline_mode<synchronous>, transform_indices = @transform_2, window_bounds = array<i64: 1, 1, 32>}, {pipeline_mode = #tpu.pipeline_mode<synchronous>, transform_indices = @transform_3, window_bounds = array<i64: 9, 32, 32>}, {transform_indices = @transform_4, window_bounds = array<i64: 1, 16, 16, 32>}]} {
    %c0 = arith.constant 0 : index
    %c0_0 = arith.constant 0 : index
    %c0_1 = arith.constant 0 : index
    %c0_2 = arith.constant 0 : index
    %0 = vector.load %arg1[%c0, %c0_0, %c0_1, %c0_2] : memref<1x16x16x32xbf16, #tpu.memory_space<vmem>>, vector<1x16x16x32xbf16>
    %1 = vector.shape_cast %0 : vector<1x16x16x32xbf16> to vector<16x16x32xbf16>
    %2 = arith.extf %1 : vector<16x16x32xbf16> to vector<16x16x32xf32>
    %c0_3 = arith.constant 0 : index
    %c0_4 = arith.constant 0 : index
    %c0_5 = arith.constant 0 : index
    %3 = vector.load %arg2[%c0_3, %c0_4, %c0_5] : memref<1x1x32xf32, #tpu.memory_space<vmem>>, vector<1x1x32xf32>
    %4 = vector.broadcast %3 : vector<1x1x32xf32> to vector<16x16x32xf32>
    %5 = arith.mulf %2, %4 : vector<16x16x32xf32>
    %c0_6 = arith.constant 0 : index
    %c0_7 = arith.constant 0 : index
    %c0_8 = arith.constant 0 : index
    %6 = vector.load %arg3[%c0_6, %c0_7, %c0_8] : memref<1x1x32xf32, #tpu.memory_space<vmem>>, vector<1x1x32xf32>
    %7 = vector.broadcast %6 : vector<1x1x32xf32> to vector<16x16x32xf32>
    %8 = arith.addf %5, %7 : vector<16x16x32xf32>
    %cst = arith.constant 0.000000e+00 : f32
    %9 = vector.broadcast %cst : f32 to vector<16x16x32xf32>
    %10 = arith.maximumf %8, %9 : vector<16x16x32xf32>
    %cst_9 = arith.constant 0.000000e+00 : f32
    %11 = vector.broadcast %cst_9 : f32 to vector<1x18x32xf32>
    %c0_10 = arith.constant 0 : index
    %c0_11 = arith.constant 0 : index
    %c0_12 = arith.constant 0 : index
    %12 = vector.load %arg6[%c0_10, %c0_11, %c0_12] : memref<18x18x32xf32, #tpu.memory_space<vmem>>, vector<1x18x32xf32>
    tpu.vector_store %arg6[%c0_10, %c0_11, %c0_12], %11 {strides = array<i32>} : memref<18x18x32xf32, #tpu.memory_space<vmem>>, vector<1x18x32xf32>,
    %cst_13 = arith.constant 0.000000e+00 : f32
    %13 = vector.broadcast %cst_13 : f32 to vector<1x18x32xf32>
    %c17 = arith.constant 17 : index
    %c0_14 = arith.constant 0 : index
    %c0_15 = arith.constant 0 : index
    %14 = vector.load %arg6[%c17, %c0_14, %c0_15] : memref<18x18x32xf32, #tpu.memory_space<vmem>>, vector<1x18x32xf32>
    tpu.vector_store %arg6[%c17, %c0_14, %c0_15], %13 {strides = array<i32>} : memref<18x18x32xf32, #tpu.memory_space<vmem>>, vector<1x18x32xf32>,
    %cst_16 = arith.constant 0.000000e+00 : f32
    %15 = vector.broadcast %cst_16 : f32 to vector<18x1x32xf32>
    %c0_17 = arith.constant 0 : index
    %c0_18 = arith.constant 0 : index
    %c0_19 = arith.constant 0 : index
    %16 = vector.load %arg6[%c0_17, %c0_18, %c0_19] : memref<18x18x32xf32, #tpu.memory_space<vmem>>, vector<18x1x32xf32>
    tpu.vector_store %arg6[%c0_17, %c0_18, %c0_19], %15 {strides = array<i32>} : memref<18x18x32xf32, #tpu.memory_space<vmem>>, vector<18x1x32xf32>,
    %cst_20 = arith.constant 0.000000e+00 : f32
    %17 = vector.broadcast %cst_20 : f32 to vector<18x1x32xf32>
    %c0_21 = arith.constant 0 : index
    %c17_22 = arith.constant 17 : index
    %c0_23 = arith.constant 0 : index
    %18 = vector.load %arg6[%c0_21, %c17_22, %c0_23] : memref<18x18x32xf32, #tpu.memory_space<vmem>>, vector<18x1x32xf32>
    tpu.vector_store %arg6[%c0_21, %c17_22, %c0_23], %17 {strides = array<i32>} : memref<18x18x32xf32, #tpu.memory_space<vmem>>, vector<18x1x32xf32>,
    %c1 = arith.constant 1 : index
    %c1_24 = arith.constant 1 : index
    %c0_25 = arith.constant 0 : index
    %19 = vector.load %arg6[%c1, %c1_24, %c0_25] : memref<18x18x32xf32, #tpu.memory_space<vmem>>, vector<16x16x32xf32>
    tpu.vector_store %arg6[%c1, %c1_24, %c0_25], %10 {strides = array<i32>} : memref<18x18x32xf32, #tpu.memory_space<vmem>>, vector<16x16x32xf32>,
    %c0_26 = arith.constant 0 : index
    %c0_27 = arith.constant 0 : index
    %c0_28 = arith.constant 0 : index
    %20 = vector.load %arg6[%c0_26, %c0_27, %c0_28] : memref<18x18x32xf32, #tpu.memory_space<vmem>>, vector<16x16x32xf32>
    %21 = vector.shape_cast %20 : vector<16x16x32xf32> to vector<256x32xf32>
    %22 = arith.truncf %21 : vector<256x32xf32> to vector<256x32xbf16>
    %c0_29 = arith.constant 0 : index
    %c0_30 = arith.constant 0 : index
    %c0_31 = arith.constant 0 : index
    %23 = vector.load %arg4[%c0_29, %c0_30, %c0_31] : memref<9x32x32xbf16, #tpu.memory_space<vmem>>, vector<1x32x32xbf16>
    %24 = vector.shape_cast %23 : vector<1x32x32xbf16> to vector<32x32xbf16>
    %cst_32 = arith.constant dense<0.000000e+00> : vector<256x32xf32>
    %25 = tpu.matmul %22, %24, %cst_32 {dimension_numbers = #tpu.dot_dimension_numbers<[1], [0], [0], [1], [0, 0, 1, 1], [], []>} : vector<256x32xbf16>, vector<32x32xbf16>, vector<256x32xf32> -> vector<256x32xf32>
    %c0_33 = arith.constant 0 : index
    %c1_34 = arith.constant 1 : index
    %c0_35 = arith.constant 0 : index
    %26 = vector.load %arg6[%c0_33, %c1_34, %c0_35] : memref<18x18x32xf32, #tpu.memory_space<vmem>>, vector<16x16x32xf32>
    %27 = vector.shape_cast %26 : vector<16x16x32xf32> to vector<256x32xf32>
    %28 = arith.truncf %27 : vector<256x32xf32> to vector<256x32xbf16>
    %c1_36 = arith.constant 1 : index
    %c0_37 = arith.constant 0 : index
    %c0_38 = arith.constant 0 : index
    %29 = vector.load %arg4[%c1_36, %c0_37, %c0_38] : memref<9x32x32xbf16, #tpu.memory_space<vmem>>, vector<1x32x32xbf16>
    %30 = vector.shape_cast %29 : vector<1x32x32xbf16> to vector<32x32xbf16>
    %cst_39 = arith.constant dense<0.000000e+00> : vector<256x32xf32>
    %31 = tpu.matmul %28, %30, %cst_39 {dimension_numbers = #tpu.dot_dimension_numbers<[1], [0], [0], [1], [0, 0, 1, 1], [], []>} : vector<256x32xbf16>, vector<32x32xbf16>, vector<256x32xf32> -> vector<256x32xf32>
    %32 = arith.addf %25, %31 : vector<256x32xf32>
    %c0_40 = arith.constant 0 : index
    %c2 = arith.constant 2 : index
    %c0_41 = arith.constant 0 : index
    %33 = vector.load %arg6[%c0_40, %c2, %c0_41] : memref<18x18x32xf32, #tpu.memory_space<vmem>>, vector<16x16x32xf32>
    %34 = vector.shape_cast %33 : vector<16x16x32xf32> to vector<256x32xf32>
    %35 = arith.truncf %34 : vector<256x32xf32> to vector<256x32xbf16>
    %c2_42 = arith.constant 2 : index
    %c0_43 = arith.constant 0 : index
    %c0_44 = arith.constant 0 : index
    %36 = vector.load %arg4[%c2_42, %c0_43, %c0_44] : memref<9x32x32xbf16, #tpu.memory_space<vmem>>, vector<1x32x32xbf16>
    %37 = vector.shape_cast %36 : vector<1x32x32xbf16> to vector<32x32xbf16>
    %cst_45 = arith.constant dense<0.000000e+00> : vector<256x32xf32>
    %38 = tpu.matmul %35, %37, %cst_45 {dimension_numbers = #tpu.dot_dimension_numbers<[1], [0], [0], [1], [0, 0, 1, 1], [], []>} : vector<256x32xbf16>, vector<32x32xbf16>, vector<256x32xf32> -> vector<256x32xf32>
    %39 = arith.addf %32, %38 : vector<256x32xf32>
    %c1_46 = arith.constant 1 : index
    %c0_47 = arith.constant 0 : index
    %c0_48 = arith.constant 0 : index
    %40 = vector.load %arg6[%c1_46, %c0_47, %c0_48] : memref<18x18x32xf32, #tpu.memory_space<vmem>>, vector<16x16x32xf32>
    %41 = vector.shape_cast %40 : vector<16x16x32xf32> to vector<256x32xf32>
    %42 = arith.truncf %41 : vector<256x32xf32> to vector<256x32xbf16>
    %c3 = arith.constant 3 : index
    %c0_49 = arith.constant 0 : index
    %c0_50 = arith.constant 0 : index
    %43 = vector.load %arg4[%c3, %c0_49, %c0_50] : memref<9x32x32xbf16, #tpu.memory_space<vmem>>, vector<1x32x32xbf16>
    %44 = vector.shape_cast %43 : vector<1x32x32xbf16> to vector<32x32xbf16>
    %cst_51 = arith.constant dense<0.000000e+00> : vector<256x32xf32>
    %45 = tpu.matmul %42, %44, %cst_51 {dimension_numbers = #tpu.dot_dimension_numbers<[1], [0], [0], [1], [0, 0, 1, 1], [], []>} : vector<256x32xbf16>, vector<32x32xbf16>, vector<256x32xf32> -> vector<256x32xf32>
    %46 = arith.addf %39, %45 : vector<256x32xf32>
    %c1_52 = arith.constant 1 : index
    %c1_53 = arith.constant 1 : index
    %c0_54 = arith.constant 0 : index
    %47 = vector.load %arg6[%c1_52, %c1_53, %c0_54] : memref<18x18x32xf32, #tpu.memory_space<vmem>>, vector<16x16x32xf32>
    %48 = vector.shape_cast %47 : vector<16x16x32xf32> to vector<256x32xf32>
    %49 = arith.truncf %48 : vector<256x32xf32> to vector<256x32xbf16>
    %c4 = arith.constant 4 : index
    %c0_55 = arith.constant 0 : index
    %c0_56 = arith.constant 0 : index
    %50 = vector.load %arg4[%c4, %c0_55, %c0_56] : memref<9x32x32xbf16, #tpu.memory_space<vmem>>, vector<1x32x32xbf16>
    %51 = vector.shape_cast %50 : vector<1x32x32xbf16> to vector<32x32xbf16>
    %cst_57 = arith.constant dense<0.000000e+00> : vector<256x32xf32>
    %52 = tpu.matmul %49, %51, %cst_57 {dimension_numbers = #tpu.dot_dimension_numbers<[1], [0], [0], [1], [0, 0, 1, 1], [], []>} : vector<256x32xbf16>, vector<32x32xbf16>, vector<256x32xf32> -> vector<256x32xf32>
    %53 = arith.addf %46, %52 : vector<256x32xf32>
    %c1_58 = arith.constant 1 : index
    %c2_59 = arith.constant 2 : index
    %c0_60 = arith.constant 0 : index
    %54 = vector.load %arg6[%c1_58, %c2_59, %c0_60] : memref<18x18x32xf32, #tpu.memory_space<vmem>>, vector<16x16x32xf32>
    %55 = vector.shape_cast %54 : vector<16x16x32xf32> to vector<256x32xf32>
    %56 = arith.truncf %55 : vector<256x32xf32> to vector<256x32xbf16>
    %c5 = arith.constant 5 : index
    %c0_61 = arith.constant 0 : index
    %c0_62 = arith.constant 0 : index
    %57 = vector.load %arg4[%c5, %c0_61, %c0_62] : memref<9x32x32xbf16, #tpu.memory_space<vmem>>, vector<1x32x32xbf16>
    %58 = vector.shape_cast %57 : vector<1x32x32xbf16> to vector<32x32xbf16>
    %cst_63 = arith.constant dense<0.000000e+00> : vector<256x32xf32>
    %59 = tpu.matmul %56, %58, %cst_63 {dimension_numbers = #tpu.dot_dimension_numbers<[1], [0], [0], [1], [0, 0, 1, 1], [], []>} : vector<256x32xbf16>, vector<32x32xbf16>, vector<256x32xf32> -> vector<256x32xf32>
    %60 = arith.addf %53, %59 : vector<256x32xf32>
    %c2_64 = arith.constant 2 : index
    %c0_65 = arith.constant 0 : index
    %c0_66 = arith.constant 0 : index
    %61 = vector.load %arg6[%c2_64, %c0_65, %c0_66] : memref<18x18x32xf32, #tpu.memory_space<vmem>>, vector<16x16x32xf32>
    %62 = vector.shape_cast %61 : vector<16x16x32xf32> to vector<256x32xf32>
    %63 = arith.truncf %62 : vector<256x32xf32> to vector<256x32xbf16>
    %c6 = arith.constant 6 : index
    %c0_67 = arith.constant 0 : index
    %c0_68 = arith.constant 0 : index
    %64 = vector.load %arg4[%c6, %c0_67, %c0_68] : memref<9x32x32xbf16, #tpu.memory_space<vmem>>, vector<1x32x32xbf16>
    %65 = vector.shape_cast %64 : vector<1x32x32xbf16> to vector<32x32xbf16>
    %cst_69 = arith.constant dense<0.000000e+00> : vector<256x32xf32>
    %66 = tpu.matmul %63, %65, %cst_69 {dimension_numbers = #tpu.dot_dimension_numbers<[1], [0], [0], [1], [0, 0, 1, 1], [], []>} : vector<256x32xbf16>, vector<32x32xbf16>, vector<256x32xf32> -> vector<256x32xf32>
    %67 = arith.addf %60, %66 : vector<256x32xf32>
    %c2_70 = arith.constant 2 : index
    %c1_71 = arith.constant 1 : index
    %c0_72 = arith.constant 0 : index
    %68 = vector.load %arg6[%c2_70, %c1_71, %c0_72] : memref<18x18x32xf32, #tpu.memory_space<vmem>>, vector<16x16x32xf32>
    %69 = vector.shape_cast %68 : vector<16x16x32xf32> to vector<256x32xf32>
    %70 = arith.truncf %69 : vector<256x32xf32> to vector<256x32xbf16>
    %c7 = arith.constant 7 : index
    %c0_73 = arith.constant 0 : index
    %c0_74 = arith.constant 0 : index
    %71 = vector.load %arg4[%c7, %c0_73, %c0_74] : memref<9x32x32xbf16, #tpu.memory_space<vmem>>, vector<1x32x32xbf16>
    %72 = vector.shape_cast %71 : vector<1x32x32xbf16> to vector<32x32xbf16>
    %cst_75 = arith.constant dense<0.000000e+00> : vector<256x32xf32>
    %73 = tpu.matmul %70, %72, %cst_75 {dimension_numbers = #tpu.dot_dimension_numbers<[1], [0], [0], [1], [0, 0, 1, 1], [], []>} : vector<256x32xbf16>, vector<32x32xbf16>, vector<256x32xf32> -> vector<256x32xf32>
    %74 = arith.addf %67, %73 : vector<256x32xf32>
    %c2_76 = arith.constant 2 : index
    %c2_77 = arith.constant 2 : index
    %c0_78 = arith.constant 0 : index
    %75 = vector.load %arg6[%c2_76, %c2_77, %c0_78] : memref<18x18x32xf32, #tpu.memory_space<vmem>>, vector<16x16x32xf32>
    %76 = vector.shape_cast %75 : vector<16x16x32xf32> to vector<256x32xf32>
    %77 = arith.truncf %76 : vector<256x32xf32> to vector<256x32xbf16>
    %c8 = arith.constant 8 : index
    %c0_79 = arith.constant 0 : index
    %c0_80 = arith.constant 0 : index
    %78 = vector.load %arg4[%c8, %c0_79, %c0_80] : memref<9x32x32xbf16, #tpu.memory_space<vmem>>, vector<1x32x32xbf16>
    %79 = vector.shape_cast %78 : vector<1x32x32xbf16> to vector<32x32xbf16>
    %cst_81 = arith.constant dense<0.000000e+00> : vector<256x32xf32>
    %80 = tpu.matmul %77, %79, %cst_81 {dimension_numbers = #tpu.dot_dimension_numbers<[1], [0], [0], [1], [0, 0, 1, 1], [], []>} : vector<256x32xbf16>, vector<32x32xbf16>, vector<256x32xf32> -> vector<256x32xf32>
    %81 = arith.addf %74, %80 : vector<256x32xf32>
    %82 = vector.shape_cast %81 : vector<256x32xf32> to vector<1x16x16x32xf32>
    %c0_82 = arith.constant 0 : index
    %c0_83 = arith.constant 0 : index
    %c0_84 = arith.constant 0 : index
    %c0_85 = arith.constant 0 : index
    %83 = vector.load %arg5[%c0_82, %c0_83, %c0_84, %c0_85] : memref<1x16x16x32xf32, #tpu.memory_space<vmem>>, vector<1x16x16x32xf32>
    tpu.vector_store %arg5[%c0_82, %c0_83, %c0_84, %c0_85], %82 {strides = array<i32>} : memref<1x16x16x32xf32, #tpu.memory_space<vmem>>, vector<1x16x16x32xf32>,
    return
  }
  func.func @transform_0(%arg0: i32) -> (i32, i32, i32, i32) {
    %c0_i32 = arith.constant 0 : i32
    %c0_i32_0 = arith.constant 0 : i32
    %c0_i32_1 = arith.constant 0 : i32
    %c0_i32_2 = arith.constant 0 : i32
    return %arg0, %c0_i32, %c0_i32_0, %c0_i32_1 : i32, i32, i32, i32
  }
  func.func @transform_1(%arg0: i32) -> (i32, i32, i32) {
    %c0_i32 = arith.constant 0 : i32
    %c0_i32_0 = arith.constant 0 : i32
    %c0_i32_1 = arith.constant 0 : i32
    %c0_i32_2 = arith.constant 0 : i32
    return %c0_i32, %c0_i32_0, %c0_i32_1 : i32, i32, i32
  }
  func.func @transform_2(%arg0: i32) -> (i32, i32, i32) {
    %c0_i32 = arith.constant 0 : i32
    %c0_i32_0 = arith.constant 0 : i32
    %c0_i32_1 = arith.constant 0 : i32
    %c0_i32_2 = arith.constant 0 : i32
    return %c0_i32, %c0_i32_0, %c0_i32_1 : i32, i32, i32
  }
  func.func @transform_3(%arg0: i32) -> (i32, i32, i32) {
    %c0_i32 = arith.constant 0 : i32
    %c0_i32_0 = arith.constant 0 : i32
    %c0_i32_1 = arith.constant 0 : i32
    %c0_i32_2 = arith.constant 0 : i32
    return %c0_i32, %c0_i32_0, %c0_i32_1 : i32, i32, i32
  }
  func.func @transform_4(%arg0: i32) -> (i32, i32, i32, i32) {
    %c0_i32 = arith.constant 0 : i32
    %c0_i32_0 = arith.constant 0 : i32
    %c0_i32_1 = arith.constant 0 : i32
    %c0_i32_2 = arith.constant 0 : i32
    return %arg0, %c0_i32, %c0_i32_0, %c0_i32_1 : i32, i32, i32, i32
  }
}

</mosaic_0001>

<llo_original>
// kernel: tile.18
$region0: #{tile.18}
  #allocation0 [shape = 's32[1]{0}', space=sflag, size = 0x4, scoped, tag = 'scoped memory for tile.18']
  %s0 = inlined_call_operand.vmem [shape: f32[8], index: 0, kind: input, shape index: {}]
  %s1 = inlined_call_operand.vmem [shape: f32[4,8], index: 1, kind: output, shape index: {}]
  // Predicated region
  $region2: #{tile.18} parent=0 // pred_check
    _
  $region3: #{tile.18} parent=0 // pred_check_branch
    %3 = sbr.rel (0) target = $region5
  $region4: #{tile.18} parent=0 // pred_region
    _
  $region5: #{tile.18} parent=0 // pred_fallthru
    _
  %v4 = vld [vmem:[%s0] ss:$0 sm:$0xff]
  %5 = vst [vmem:[%s1] sm:$0xf] %v4

// kernel: tile.19
$region0: #{tile.19}
  %s0 = inlined_call_operand.vmem [shape: f32[4,8], index: 0, kind: input, shape index: {}]
  %s1 = inlined_call_operand.vmem [shape: f32[1,1,32], index: 1, kind: output, shape index: {}]
  $region1: #{tile.19} parent=0
    #allocation0 [shape = 'u8[4096]{0}', space=vmem, size = 0x1000, scoped, tag = 'scoped mem for output reshape']
    #allocation1 [shape = 'u8[4096]{0}', space=vmem, size = 0x1000, scoped, tag = 'scoped mem for input reshape']
    %s3 = ssub.s32 16, 1
    %v4 = vld [vmem:[%s0] sm:%s3]
    %5 = vst [vmem:[#allocation1] sm:%s3] %v4
    %v6 = vld [vmem:[#allocation1] sm:$0x1]
    %vm7 = vcmask 64512
    %8 = vst.msk [vmem:[#allocation0] sm:$0x1] %vm7, %v6
    %s9 = scalar_lea.vmem [#allocation1], 3
    %v10 = vld [vmem:[%s9] sm:$0x1]
    %11 = vrot.lane.b32.xlu0 %v10, 24
    %v12 = vpop.permute.xlu0 %11
    %vm13 = vcmask 261312
    %14 = vst.msk [vmem:[#allocation0] sm:$0x1] %vm13, %v12
    %s15 = scalar_lea.vmem [#allocation1], 2
    %v16 = vld [vmem:[%s15] sm:$0x1]
    %17 = vrot.lane.b32.xlu0 %v16, 16
    %v18 = vpop.permute.xlu0 %17
    %vm19 = vcmask 195712
    %20 = vst.msk [vmem:[#allocation0] sm:$0x1] %vm19, %v18
    %s21 = scalar_lea.vmem [#allocation1], 1
    %v22 = vld [vmem:[%s21] sm:$0x1]
    %23 = vrot.lane.b32.xlu0 %v22, 8
    %v24 = vpop.permute.xlu0 %23
    %vm25 = vcmask 130112
    %26 = vst.msk [vmem:[#allocation0] sm:$0x1] %vm25, %v24
    %s28 = ssub.s32 2, 1
    %v29 = vld [vmem:[#allocation0] sm:%s28]
    %s31 = ssub.s32 2, 1
    %32 = vst [vmem:[%s1] sm:%s31] %v29

// kernel: upsampling_sequence_forward.2
$region0: #{upsampling_sequence_forward.2}
  #allocation0 [shape = 'u32[]', space=smem, size = 0x4, offset = 0x4, fixed_abs, tag = 'smem constant byte address 0x4 - core index']
  #allocation1 [shape = 'u32[72,128]{1,0:T(1,128)}', space=vmem, size = 0x9000, scoped, tag = 'internal scratch']
  #allocation2 [shape = 'f32[17,17,4]{2,1,0:T(8,128)}', space=vmem, size = 0x33000, scoped, tag = 'scratch operand']
  %s0 = inlined_call_operand.vmem [shape: f32[2,16,16,4], index: 0, kind: input, shape index: {}]
  %s1 = inlined_call_operand.vmem [shape: f32[1,1,4], index: 1, kind: input, shape index: {}]
  %s2 = inlined_call_operand.vmem [shape: f32[1,1,4], index: 2, kind: input, shape index: {}]
  %s3 = inlined_call_operand.vmem [shape: bf16[4,4,32], index: 3, kind: input, shape index: {}]
  %s4 = inlined_call_operand.vmem [shape: bf16[2,16,16,32], index: 4, kind: output, shape index: {0}]
  %s5 = inlined_call_operand.vmem [shape: f32[2,1,32], index: 5, kind: output, shape index: {1}]
  %s6 = inlined_call_operand.vmem [shape: f32[2,1,32], index: 6, kind: output, shape index: {2}]
  %7 = xla_tuple %s4, %s5, %s6
  %s8 = sld [smem:[#allocation0]]
  $region65: #{upsampling_sequence_forward.2} parent=0
    _
  %s10 = ssub.s32 1, %s8
  %s11 = scalar_select 0, %s10, %s8
  loop: start=0, step=1, limit=4
  $region2: #{upsampling_sequence_forward.2} parent=0 // loop_pre_header
    _
  $region3: #{upsampling_sequence_forward.2} parent=0 // loop_header
    %s13 = sphi 0, %s17
    %p14 = scmp.ge.s32.totalorder %s13, 4
    %s23 = sphi 0, %s25
    %s26 = sphi 0, %s23
    %s27 = sphi 0, %s26
    %s43 = sphi 0, %s27
    %s47 = sphi 0, %s47
    %s49 = sphi 0, %s47
    %s50 = sphi 0, %s49
    %s64 = sphi 0, %s50
    %s68 = sphi 0, %s68
    %s70 = sphi 0, %s68
    %s71 = sphi 0, %s70
    %s85 = sphi 0, %s71
    %s89 = sphi 0, %s89
    %s91 = sphi 0, %s89
    %s92 = sphi 0, %s91
    %s106 = sphi 0, %s92
    %s112 = sphi 0, %s114
    %s115 = sphi 0, %s112
    %s116 = sphi 0, %s115
    %s132 = sphi 0, %s116
    %s138 = sphi 0, %s140
    %s141 = sphi 0, %s138
    %s142 = sphi 0, %s141
    %s158 = sphi 0, %s142
    %s164 = sphi 0, %s166
    %s167 = sphi 0, %s164
    %s168 = sphi 0, %s167
    %s184 = sphi 0, %s168
  $region4: #{upsampling_sequence_forward.2} parent=0 // loop_header_branch
    %16 = sbr.rel (%p14) target = $region8
  $region5: #{upsampling_sequence_forward.2} parent=0 // loop_body
    %s18 = ssub.s32 %s13, 1
    %s19 = ssub.s32 %s13, 2
    %s20 = sadd.s32 %s13, 1
    %s21 = ssub.s32 %s13, %s20
    %p22 = scmp.eq.s32.totalorder %s21, 0
    %s24 = sadd.s32 %s23, 1
    %s25 = scalar_select %p22, %s23, %s24
    %p28 = pneg %p22
    %p29 = scmp.eq.s32.totalorder %s13, 1
    %p30 = por %p28, %p29
    %p31 = scmp.ne.s32.totalorder %s23, %s26
    %p32 = scmp.eq.s32.totalorder %s13, 0
    %p33 = por %p31, %p32
    %p34 = scmp.ne.s32.totalorder %s23, %s26
    %p35 = scmp.eq.s32.totalorder %s18, 1
    %p36 = por %p34, %p35
    %p37 = scmp.ne.s32.totalorder %s26, %s27
    %p38 = scmp.eq.s32.totalorder %s18, 0
    %p39 = por %p37, %p38
    %p40 = scmp.ne.s32.totalorder %s26, %s27
    %p41 = scmp.eq.s32.totalorder %s19, 1
    %p42 = por %p40, %p41
    %p44 = scmp.ne.s32.totalorder %s27, %s43
    %p45 = scmp.eq.s32.totalorder %s19, 0
    %p46 = por %p44, %p45
    %s48 = sadd.s32 %s47, 1
    %p51 = scmp.eq.s32.totalorder %s13, 1
    %p52 = scmp.ne.s32.totalorder %s47, %s49
    %p53 = scmp.eq.s32.totalorder %s13, 0
    %p54 = por %p52, %p53
    %p55 = scmp.ne.s32.totalorder %s47, %s49
    %p56 = scmp.eq.s32.totalorder %s18, 1
    %p57 = por %p55, %p56
    %p58 = scmp.ne.s32.totalorder %s49, %s50
    %p59 = scmp.eq.s32.totalorder %s18, 0
    %p60 = por %p58, %p59
    %p61 = scmp.ne.s32.totalorder %s49, %s50
    %p62 = scmp.eq.s32.totalorder %s19, 1
    %p63 = por %p61, %p62
    %p65 = scmp.ne.s32.totalorder %s50, %s64
    %p66 = scmp.eq.s32.totalorder %s19, 0
    %p67 = por %p65, %p66
    %s69 = sadd.s32 %s68, 1
    %p72 = scmp.eq.s32.totalorder %s13, 1
    %p73 = scmp.ne.s32.totalorder %s68, %s70
    %p74 = scmp.eq.s32.totalorder %s13, 0
    %p75 = por %p73, %p74
    %p76 = scmp.ne.s32.totalorder %s68, %s70
    %p77 = scmp.eq.s32.totalorder %s18, 1
    %p78 = por %p76, %p77
    %p79 = scmp.ne.s32.totalorder %s70, %s71
    %p80 = scmp.eq.s32.totalorder %s18, 0
    %p81 = por %p79, %p80
    %p82 = scmp.ne.s32.totalorder %s70, %s71
    %p83 = scmp.eq.s32.totalorder %s19, 1
    %p84 = por %p82, %p83
    %p86 = scmp.ne.s32.totalorder %s71, %s85
    %p87 = scmp.eq.s32.totalorder %s19, 0
    %p88 = por %p86, %p87
    %s90 = sadd.s32 %s89, 1
    %p93 = scmp.eq.s32.totalorder %s13, 1
    %p94 = scmp.ne.s32.totalorder %s89, %s91
    %p95 = scmp.eq.s32.totalorder %s13, 0
    %p96 = por %p94, %p95
    %p97 = scmp.ne.s32.totalorder %s89, %s91
    %p98 = scmp.eq.s32.totalorder %s18, 1
    %p99 = por %p97, %p98
    %p100 = scmp.ne.s32.totalorder %s91, %s92
    %p101 = scmp.eq.s32.totalorder %s18, 0
    %p102 = por %p100, %p101
    %p103 = scmp.ne.s32.totalorder %s91, %s92
    %p104 = scmp.eq.s32.totalorder %s19, 1
    %p105 = por %p103, %p104
    %p107 = scmp.ne.s32.totalorder %s92, %s106
    %p108 = scmp.eq.s32.totalorder %s19, 0
    %p109 = por %p107, %p108
    %s110 = ssub.s32 %s13, %s20
    %p111 = scmp.eq.s32.totalorder %s110, 0
    %s113 = sadd.s32 %s112, 1
    %s114 = scalar_select %p111, %s112, %s113
    %p117 = pneg %p111
    %p118 = scmp.eq.s32.totalorder %s13, 1
    %p119 = por %p117, %p118
    %p120 = scmp.ne.s32.totalorder %s112, %s115
    %p121 = scmp.eq.s32.totalorder %s13, 0
    %p122 = por %p120, %p121
    %p123 = scmp.ne.s32.totalorder %s112, %s115
    %p124 = scmp.eq.s32.totalorder %s18, 1
    %p125 = por %p123, %p124
    %p126 = scmp.ne.s32.totalorder %s115, %s116
    %p127 = scmp.eq.s32.totalorder %s18, 0
    %p128 = por %p126, %p127
    %p129 = scmp.ne.s32.totalorder %s115, %s116
    %p130 = scmp.eq.s32.totalorder %s19, 1
    %p131 = por %p129, %p130
    %p133 = scmp.ne.s32.totalorder %s116, %s132
    %p134 = scmp.eq.s32.totalorder %s19, 0
    %p135 = por %p133, %p134
    %s136 = ssub.s32 %s13, %s20
    %p137 = scmp.eq.s32.totalorder %s136, 0
    %s139 = sadd.s32 %s138, 1
    %s140 = scalar_select %p137, %s138, %s139
    %p143 = pneg %p137
    %p144 = scmp.eq.s32.totalorder %s13, 1
    %p145 = por %p143, %p144
    %p146 = scmp.ne.s32.totalorder %s138, %s141
    %p147 = scmp.eq.s32.totalorder %s13, 0
    %p148 = por %p146, %p147
    %p149 = scmp.ne.s32.totalorder %s138, %s141
    %p150 = scmp.eq.s32.totalorder %s18, 1
    %p151 = por %p149, %p150
    %p152 = scmp.ne.s32.totalorder %s141, %s142
    %p153 = scmp.eq.s32.totalorder %s18, 0
    %p154 = por %p152, %p153
    %p155 = scmp.ne.s32.totalorder %s141, %s142
    %p156 = scmp.eq.s32.totalorder %s19, 1
    %p157 = por %p155, %p156
    %p159 = scmp.ne.s32.totalorder %s142, %s158
    %p160 = scmp.eq.s32.totalorder %s19, 0
    %p161 = por %p159, %p160
    %s162 = ssub.s32 %s13, %s20
    %p163 = scmp.eq.s32.totalorder %s162, 0
    %s165 = sadd.s32 %s164, 1
    %s166 = scalar_select %p163, %s164, %s165
    %p169 = pneg %p163
    %p170 = scmp.eq.s32.totalorder %s13, 1
    %p171 = por %p169, %p170
    %p172 = scmp.ne.s32.totalorder %s164, %s167
    %p173 = scmp.eq.s32.totalorder %s13, 0
    %p174 = por %p172, %p173
    %p175 = scmp.ne.s32.totalorder %s164, %s167
    %p176 = scmp.eq.s32.totalorder %s18, 1
    %p177 = por %p175, %p176
    %p178 = scmp.ne.s32.totalorder %s167, %s168
    %p179 = scmp.eq.s32.totalorder %s18, 0
    %p180 = por %p178, %p179
    %p181 = scmp.ne.s32.totalorder %s167, %s168
    %p182 = scmp.eq.s32.totalorder %s19, 1
    %p183 = por %p181, %p182
    %p185 = scmp.ne.s32.totalorder %s168, %s184
    %p186 = scmp.eq.s32.totalorder %s19, 0
    %p187 = por %p185, %p186
    %p188 = scmp.le.s32.totalorder 1, %s13
    %p189 = scmp.lt.s32.totalorder %s13, 3
    %p190 = pnand %p188, %p189
    %p191 = pneg %p190
    // Predicated region
    $region9: #{upsampling_sequence_forward.2} parent=5 // pred_check
      _
    $region10: #{upsampling_sequence_forward.2} parent=5 // pred_check_branch
      %193 = sbr.rel (%p190) target = $region12
    $region11: #{upsampling_sequence_forward.2} parent=5 // pred_region
      %s194 = ssub.s32 %s13, 1
      // Predicated region
      $region13: #{upsampling_sequence_forward.2} parent=11 // pred_check
        %p195 = pneg %p60
      $region14: #{upsampling_sequence_forward.2} parent=11 // pred_check_branch
        %197 = sbr.rel (%p195) target = $region16
      $region15: #{upsampling_sequence_forward.2} parent=11 // pred_region
        _
      $region16: #{upsampling_sequence_forward.2} parent=11 // pred_fallthru
        _
      // Predicated region
      $region17: #{upsampling_sequence_forward.2} parent=11 // pred_check
        %p198 = pneg %p81
      $region18: #{upsampling_sequence_forward.2} parent=11 // pred_check_branch
        %200 = sbr.rel (%p198) target = $region20
      $region19: #{upsampling_sequence_forward.2} parent=11 // pred_region
        _
      $region20: #{upsampling_sequence_forward.2} parent=11 // pred_fallthru
        _
      // Predicated region
      $region21: #{upsampling_sequence_forward.2} parent=11 // pred_check
        %p201 = pneg %p102
      $region22: #{upsampling_sequence_forward.2} parent=11 // pred_check_branch
        %203 = sbr.rel (%p201) target = $region24
      $region23: #{upsampling_sequence_forward.2} parent=11 // pred_region
        _
      $region24: #{upsampling_sequence_forward.2} parent=11 // pred_fallthru
        _
    $region12: #{upsampling_sequence_forward.2} parent=5 // pred_fallthru
      _
    %p204 = scmp.lt.s32.totalorder %s13, 2
    // Predicated region
    $region25: #{upsampling_sequence_forward.2} parent=5 // pred_check
      %p205 = pneg %p204
    $region26: #{upsampling_sequence_forward.2} parent=5 // pred_check_branch
      %207 = sbr.rel (%p205) target = $region28
    $region27: #{upsampling_sequence_forward.2} parent=5 // pred_region
      // Predicated region
      $region29: #{upsampling_sequence_forward.2} parent=27 // pred_check
        %p208 = pneg %p33
      $region30: #{upsampling_sequence_forward.2} parent=27 // pred_check_branch
        %210 = sbr.rel (%p208) target = $region32
      $region31: #{upsampling_sequence_forward.2} parent=27 // pred_region
        %p211 = scmp.lt.s32.totalorder %s13, 1
        %s212 = scalar_select %p211, %s13, 1
        %s213 = smul.addr %s212, 32
        %s214 = smul.addr %s213, 8
        %s215 = scalar_lea.vmem %s0, %s214
      $region32: #{upsampling_sequence_forward.2} parent=27 // pred_fallthru
        _
    $region28: #{upsampling_sequence_forward.2} parent=5 // pred_fallthru
      _
    %p216 = scmp.le.s32.totalorder 1, %s13
    %p217 = scmp.lt.s32.totalorder %s13, 3
    %p218 = pnand %p216, %p217
    %p219 = pneg %p218
    // Predicated region
    $region33: #{upsampling_sequence_forward.2} parent=5 // pred_check
      _
    $region34: #{upsampling_sequence_forward.2} parent=5 // pred_check_branch
      %221 = sbr.rel (%p218) target = $region36
    $region35: #{upsampling_sequence_forward.2} parent=5 // pred_region
      %s222 = ssub.s32 %s13, 1
      %p223 = scmp.lt.s32.totalorder %s18, 1
      %s224 = scalar_select %p223, %s18, 1
      %s225 = smul.addr %s224, 32
      %s226 = smul.addr %s225, 8
      %s227 = scalar_lea.vmem %s0, %s226
      %p228 = pneg %p39
      %p229 = pneg %p36
      %p230 = pneg %p60
      %p231 = pneg %p57
      %p232 = pneg %p81
      %p233 = pneg %p78
      %p234 = pneg %p102
      %p235 = pneg %p99
      %p236 = pneg %p128
      %p237 = pneg %p125
      %p238 = scmp.lt.s32.totalorder %s18, 1
      %s239 = scalar_select %p238, %s18, 1
      %s240 = smul.addr %s239, 32
      %s241 = smul.addr %s240, 4
      %s242 = scalar_lea.vmem %s4, %s241
      %p243 = pneg %p154
      %p244 = pneg %p151
      %p245 = scmp.lt.s32.totalorder %s18, 1
      %s246 = scalar_select %p245, %s18, 1
      %s247 = scalar_lea.vmem %s5, %s246
      %p248 = pneg %p180
      %p249 = pneg %p177
      %p250 = scmp.lt.s32.totalorder %s18, 1
      %s251 = scalar_select %p250, %s18, 1
      %s252 = scalar_lea.vmem %s6, %s251
      %p253 = scmp.lt.s32.totalorder %s18, 1
      %s254 = scalar_select %p253, %s18, 1
      %s255 = smul.addr %s254, 32
      %s256 = smul.addr %s255, 8
      %s257 = scalar_lea.vmem %s0, %s256
      %p258 = scmp.lt.s32.totalorder %s18, 1
      %s259 = scalar_select %p258, %s18, 1
      %s260 = smul.addr %s259, 32
      %s261 = smul.addr %s260, 4
      %s262 = scalar_lea.vmem %s4, %s261
      %p263 = scmp.lt.s32.totalorder %s18, 1
      %s264 = scalar_select %p263, %s18, 1
      %s265 = scalar_lea.vmem %s5, %s264
      %p266 = scmp.lt.s32.totalorder %s18, 1
      %s267 = scalar_select %p266, %s18, 1
      %s268 = scalar_lea.vmem %s6, %s267
      %v270 = vld [vmem:[%s257] sm:$0xff]
      %v271 = vld [vmem:[%s257 + $0x8] sm:$0xff]
      %v272 = vld [vmem:[%s257 + $0x10] sm:$0xff]
      %v273 = vld [vmem:[%s257 + $0x18] sm:$0xff]
      %v274 = vld [vmem:[%s257 + $0x20] sm:$0xff]
      %v275 = vld [vmem:[%s257 + $0x28] sm:$0xff]
      %v276 = vld [vmem:[%s257 + $0x30] sm:$0xff]
      %v277 = vld [vmem:[%s257 + $0x38] sm:$0xff]
      %v278 = vld [vmem:[%s257 + $0x40] sm:$0xff]
      %v279 = vld [vmem:[%s257 + $0x48] sm:$0xff]
      %v280 = vld [vmem:[%s257 + $0x50] sm:$0xff]
      %v281 = vld [vmem:[%s257 + $0x58] sm:$0xff]
      %v282 = vld [vmem:[%s257 + $0x60] sm:$0xff]
      %v283 = vld [vmem:[%s257 + $0x68] sm:$0xff]
      %v284 = vld [vmem:[%s257 + $0x70] sm:$0xff]
      %v285 = vld [vmem:[%s257 + $0x78] sm:$0xff]
      %v286 = vld [vmem:[%s257 + $0x80] sm:$0xff]
      %v287 = vld [vmem:[%s257 + $0x88] sm:$0xff]
      %v288 = vld [vmem:[%s257 + $0x90] sm:$0xff]
      %v289 = vld [vmem:[%s257 + $0x98] sm:$0xff]
      %v290 = vld [vmem:[%s257 + $0xa0] sm:$0xff]
      %v291 = vld [vmem:[%s257 + $0xa8] sm:$0xff]
      %v292 = vld [vmem:[%s257 + $0xb0] sm:$0xff]
      %v293 = vld [vmem:[%s257 + $0xb8] sm:$0xff]
      %v294 = vld [vmem:[%s257 + $0xc0] sm:$0xff]
      %v295 = vld [vmem:[%s257 + $0xc8] sm:$0xff]
      %v296 = vld [vmem:[%s257 + $0xd0] sm:$0xff]
      %v297 = vld [vmem:[%s257 + $0xd8] sm:$0xff]
      %v298 = vld [vmem:[%s257 + $0xe0] sm:$0xff]
      %v299 = vld [vmem:[%s257 + $0xe8] sm:$0xff]
      %v300 = vld [vmem:[%s257 + $0xf0] sm:$0xff]
      %v301 = vld [vmem:[%s257 + $0xf8] sm:$0xff]
      %v302 = vld [vmem:[%s1] sm:$0x1]
      %v304 = vperm.slane %v302, 0
      %v306 = vmul.f32 %v270, %v304
      %v307 = vmul.f32 %v271, %v304
      %v308 = vmul.f32 %v272, %v304
      %v309 = vmul.f32 %v273, %v304
      %v310 = vmul.f32 %v274, %v304
      %v311 = vmul.f32 %v275, %v304
      %v312 = vmul.f32 %v276, %v304
      %v313 = vmul.f32 %v277, %v304
      %v314 = vmul.f32 %v278, %v304
      %v315 = vmul.f32 %v279, %v304
      %v316 = vmul.f32 %v280, %v304
      %v317 = vmul.f32 %v281, %v304
      %v318 = vmul.f32 %v282, %v304
      %v319 = vmul.f32 %v283, %v304
      %v320 = vmul.f32 %v284, %v304
      %v321 = vmul.f32 %v285, %v304
      %v322 = vmul.f32 %v286, %v304
      %v323 = vmul.f32 %v287, %v304
      %v324 = vmul.f32 %v288, %v304
      %v325 = vmul.f32 %v289, %v304
      %v326 = vmul.f32 %v290, %v304
      %v327 = vmul.f32 %v291, %v304
      %v328 = vmul.f32 %v292, %v304
      %v329 = vmul.f32 %v293, %v304
      %v330 = vmul.f32 %v294, %v304
      %v331 = vmul.f32 %v295, %v304
      %v332 = vmul.f32 %v296, %v304
      %v333 = vmul.f32 %v297, %v304
      %v334 = vmul.f32 %v298, %v304
      %v335 = vmul.f32 %v299, %v304
      %v336 = vmul.f32 %v300, %v304
      %v337 = vmul.f32 %v301, %v304
      %v338 = vld [vmem:[%s2] sm:$0x1]
      %v340 = vperm.slane %v338, 0
      %v342 = vadd.f32 %v306, %v340
      %v343 = vadd.f32 %v307, %v340
      %v344 = vadd.f32 %v308, %v340
      %v345 = vadd.f32 %v309, %v340
      %v346 = vadd.f32 %v310, %v340
      %v347 = vadd.f32 %v311, %v340
      %v348 = vadd.f32 %v312, %v340
      %v349 = vadd.f32 %v313, %v340
      %v350 = vadd.f32 %v314, %v340
      %v351 = vadd.f32 %v315, %v340
      %v352 = vadd.f32 %v316, %v340
      %v353 = vadd.f32 %v317, %v340
      %v354 = vadd.f32 %v318, %v340
      %v355 = vadd.f32 %v319, %v340
      %v356 = vadd.f32 %v320, %v340
      %v357 = vadd.f32 %v321, %v340
      %v358 = vadd.f32 %v322, %v340
      %v359 = vadd.f32 %v323, %v340
      %v360 = vadd.f32 %v324, %v340
      %v361 = vadd.f32 %v325, %v340
      %v362 = vadd.f32 %v326, %v340
      %v363 = vadd.f32 %v327, %v340
      %v364 = vadd.f32 %v328, %v340
      %v365 = vadd.f32 %v329, %v340
      %v366 = vadd.f32 %v330, %v340
      %v367 = vadd.f32 %v331, %v340
      %v368 = vadd.f32 %v332, %v340
      %v369 = vadd.f32 %v333, %v340
      %v370 = vadd.f32 %v334, %v340
      %v371 = vadd.f32 %v335, %v340
      %v372 = vadd.f32 %v336, %v340
      %v373 = vadd.f32 %v337, %v340
      %v374 = vmax.f32 %v342, 0.0
      %v375 = vmax.f32 %v343, 0.0
      %v376 = vmax.f32 %v344, 0.0
      %v377 = vmax.f32 %v345, 0.0
      %v378 = vmax.f32 %v346, 0.0
      %v379 = vmax.f32 %v347, 0.0
      %v380 = vmax.f32 %v348, 0.0
      %v381 = vmax.f32 %v349, 0.0
      %v382 = vmax.f32 %v350, 0.0
      %v383 = vmax.f32 %v351, 0.0
      %v384 = vmax.f32 %v352, 0.0
      %v385 = vmax.f32 %v353, 0.0
      %v386 = vmax.f32 %v354, 0.0
      %v387 = vmax.f32 %v355, 0.0
      %v388 = vmax.f32 %v356, 0.0
      %v389 = vmax.f32 %v357, 0.0
      %v390 = vmax.f32 %v358, 0.0
      %v391 = vmax.f32 %v359, 0.0
      %v392 = vmax.f32 %v360, 0.0
      %v393 = vmax.f32 %v361, 0.0
      %v394 = vmax.f32 %v362, 0.0
      %v395 = vmax.f32 %v363, 0.0
      %v396 = vmax.f32 %v364, 0.0
      %v397 = vmax.f32 %v365, 0.0
      %v398 = vmax.f32 %v366, 0.0
      %v399 = vmax.f32 %v367, 0.0
      %v400 = vmax.f32 %v368, 0.0
      %v401 = vmax.f32 %v369, 0.0
      %v402 = vmax.f32 %v370, 0.0
      %v403 = vmax.f32 %v371, 0.0
      %v404 = vmax.f32 %v372, 0.0
      %v405 = vmax.f32 %v373, 0.0
      %s406 = scalar_lea.vmem [#allocation2], 384
      %vm407 = vcmask 31744
      %408 = vst.msk [vmem:[%s406] sm:$0xff] %vm407, 0.0
      %409 = vst.msk [vmem:[%s406 + $0x8] sm:$0xff] %vm407, 0.0
      %vm410 = vcmask 24576
      %411 = vst.msk [vmem:[%s406 + $0x10] sm:$0x1] %vm410, 0.0
      %412 = vst.msk [vmem:[#allocation2 + $0x10] sm:$0x1] %vm410, 0.0
      %413 = vst.msk [vmem:[#allocation2 + $0x28] sm:$0x1] %vm410, 0.0
      %414 = vst.msk [vmem:[#allocation2 + $0x40] sm:$0x1] %vm410, 0.0
      %415 = vst.msk [vmem:[#allocation2 + $0x58] sm:$0x1] %vm410, 0.0
      %416 = vst.msk [vmem:[#allocation2 + $0x70] sm:$0x1] %vm410, 0.0
      %417 = vst.msk [vmem:[#allocation2 + $0x88] sm:$0x1] %vm410, 0.0
      %418 = vst.msk [vmem:[#allocation2 + $0xa0] sm:$0x1] %vm410, 0.0
      %419 = vst.msk [vmem:[#allocation2 + $0xb8] sm:$0x1] %vm410, 0.0
      %420 = vst.msk [vmem:[#allocation2 + $0xd0] sm:$0x1] %vm410, 0.0
      %421 = vst.msk [vmem:[#allocation2 + $0xe8] sm:$0x1] %vm410, 0.0
      %422 = vst.msk [vmem:[#allocation2 + $0x100] sm:$0x1] %vm410, 0.0
      %423 = vst.msk [vmem:[#allocation2 + $0x118] sm:$0x1] %vm410, 0.0
      %424 = vst.msk [vmem:[#allocation2 + $0x130] sm:$0x1] %vm410, 0.0
      %425 = vst.msk [vmem:[#allocation2 + $0x148] sm:$0x1] %vm410, 0.0
      %426 = vst.msk [vmem:[#allocation2 + $0x160] sm:$0x1] %vm410, 0.0
      %427 = vst.msk [vmem:[#allocation2 + $0x178] sm:$0x1] %vm410, 0.0
      %428 = vst.msk [vmem:[#allocation2 + $0x190] sm:$0x1] %vm410, 0.0
      %429 = vst.msk [vmem:[#allocation2] sm:$0xff] %vm407, %v374
      %430 = vst.msk [vmem:[#allocation2 + $0x8] sm:$0xff] %vm407, %v375
      %431 = vst.msk [vmem:[#allocation2 + $0x18] sm:$0xff] %vm407, %v376
      %432 = vst.msk [vmem:[#allocation2 + $0x20] sm:$0xff] %vm407, %v377
      %433 = vst.msk [vmem:[#allocation2 + $0x30] sm:$0xff] %vm407, %v378
      %434 = vst.msk [vmem:[#allocation2 + $0x38] sm:$0xff] %vm407, %v379
      %435 = vst.msk [vmem:[#allocation2 + $0x48] sm:$0xff] %vm407, %v380
      %436 = vst.msk [vmem:[#allocation2 + $0x50] sm:$0xff] %vm407, %v381
      %437 = vst.msk [vmem:[#allocation2 + $0x60] sm:$0xff] %vm407, %v382
      %438 = vst.msk [vmem:[#allocation2 + $0x68] sm:$0xff] %vm407, %v383
      %439 = vst.msk [vmem:[#allocation2 + $0x78] sm:$0xff] %vm407, %v384
      %440 = vst.msk [vmem:[#allocation2 + $0x80] sm:$0xff] %vm407, %v385
      %441 = vst.msk [vmem:[#allocation2 + $0x90] sm:$0xff] %vm407, %v386
      %442 = vst.msk [vmem:[#allocation2 + $0x98] sm:$0xff] %vm407, %v387
      %443 = vst.msk [vmem:[#allocation2 + $0xa8] sm:$0xff] %vm407, %v388
      %444 = vst.msk [vmem:[#allocation2 + $0xb0] sm:$0xff] %vm407, %v389
      %445 = vst.msk [vmem:[#allocation2 + $0xc0] sm:$0xff] %vm407, %v390
      %446 = vst.msk [vmem:[#allocation2 + $0xc8] sm:$0xff] %vm407, %v391
      %447 = vst.msk [vmem:[#allocation2 + $0xd8] sm:$0xff] %vm407, %v392
      %448 = vst.msk [vmem:[#allocation2 + $0xe0] sm:$0xff] %vm407, %v393
      %449 = vst.msk [vmem:[#allocation2 + $0xf0] sm:$0xff] %vm407, %v394
      %450 = vst.msk [vmem:[#allocation2 + $0xf8] sm:$0xff] %vm407, %v395
      %451 = vst.msk [vmem:[#allocation2 + $0x108] sm:$0xff] %vm407, %v396
      %452 = vst.msk [vmem:[#allocation2 + $0x110] sm:$0xff] %vm407, %v397
      %453 = vst.msk [vmem:[#allocation2 + $0x120] sm:$0xff] %vm407, %v398
      %454 = vst.msk [vmem:[#allocation2 + $0x128] sm:$0xff] %vm407, %v399
      %455 = vst.msk [vmem:[#allocation2 + $0x138] sm:$0xff] %vm407, %v400
      %456 = vst.msk [vmem:[#allocation2 + $0x140] sm:$0xff] %vm407, %v401
      %457 = vst.msk [vmem:[#allocation2 + $0x150] sm:$0xff] %vm407, %v402
      %458 = vst.msk [vmem:[#allocation2 + $0x158] sm:$0xff] %vm407, %v403
      %459 = vst.msk [vmem:[#allocation2 + $0x168] sm:$0xff] %vm407, %v404
      %460 = vst.msk [vmem:[#allocation2 + $0x170] sm:$0xff] %vm407, %v405
      %v461 = vld [vmem:[#allocation2 + $0x1] sm:$0xff]
      %v462 = vld [vmem:[#allocation2 + $0x9] sm:$0xff]
      %v463 = vld [vmem:[#allocation2 + $0x19] sm:$0xff]
      %v464 = vld [vmem:[#allocation2 + $0x21] sm:$0xff]
      %v465 = vld [vmem:[#allocation2 + $0x31] sm:$0xff]
      %v466 = vld [vmem:[#allocation2 + $0x39] sm:$0xff]
      %v467 = vld [vmem:[#allocation2 + $0x49] sm:$0xff]
      %v468 = vld [vmem:[#allocation2 + $0x51] sm:$0xff]
      %v469 = vld [vmem:[#allocation2 + $0x61] sm:$0xff]
      %v470 = vld [vmem:[#allocation2 + $0x69] sm:$0xff]
      %v471 = vld [vmem:[#allocation2 + $0x79] sm:$0xff]
      %v472 = vld [vmem:[#allocation2 + $0x81] sm:$0xff]
      %v473 = vld [vmem:[#allocation2 + $0x91] sm:$0xff]
      %v474 = vld [vmem:[#allocation2 + $0x99] sm:$0xff]
      %v475 = vld [vmem:[#allocation2 + $0xa9] sm:$0xff]
      %v476 = vld [vmem:[#allocation2 + $0xb1] sm:$0xff]
      %v477 = vld [vmem:[#allocation2 + $0xc1] sm:$0xff]
      %v478 = vld [vmem:[#allocation2 + $0xc9] sm:$0xff]
      %v479 = vld [vmem:[#allocation2 + $0xd9] sm:$0xff]
      %v480 = vld [vmem:[#allocation2 + $0xe1] sm:$0xff]
      %v481 = vld [vmem:[#allocation2 + $0xf1] sm:$0xff]
      %v482 = vld [vmem:[#allocation2 + $0xf9] sm:$0xff]
      %v483 = vld [vmem:[#allocation2 + $0x109] sm:$0xff]
      %v484 = vld [vmem:[#allocation2 + $0x111] sm:$0xff]
      %v485 = vld [vmem:[#allocation2 + $0x121] sm:$0xff]
      %v486 = vld [vmem:[#allocation2 + $0x129] sm:$0xff]
      %v487 = vld [vmem:[#allocation2 + $0x139] sm:$0xff]
      %v488 = vld [vmem:[#allocation2 + $0x141] sm:$0xff]
      %v489 = vld [vmem:[#allocation2 + $0x151] sm:$0xff]
      %v490 = vld [vmem:[#allocation2 + $0x159] sm:$0xff]
      %v491 = vld [vmem:[#allocation2 + $0x169] sm:$0xff]
      %v492 = vld [vmem:[#allocation2 + $0x171] sm:$0xff]
      %s493 = scalar_lea.vmem [#allocation2], 24
      %v494 = vld [vmem:[%s493] sm:$0xff]
      %v495 = vld [vmem:[%s493 + $0x8] sm:$0xff]
      %v496 = vld [vmem:[%s493 + $0x18] sm:$0xff]
      %v497 = vld [vmem:[%s493 + $0x20] sm:$0xff]
      %v498 = vld [vmem:[%s493 + $0x30] sm:$0xff]
      %v499 = vld [vmem:[%s493 + $0x38] sm:$0xff]
      %v500 = vld [vmem:[%s493 + $0x48] sm:$0xff]
      %v501 = vld [vmem:[%s493 + $0x50] sm:$0xff]
      %v502 = vld [vmem:[%s493 + $0x60] sm:$0xff]
      %v503 = vld [vmem:[%s493 + $0x68] sm:$0xff]
      %v504 = vld [vmem:[%s493 + $0x78] sm:$0xff]
      %v505 = vld [vmem:[%s493 + $0x80] sm:$0xff]
      %v506 = vld [vmem:[%s493 + $0x90] sm:$0xff]
      %v507 = vld [vmem:[%s493 + $0x98] sm:$0xff]
      %v508 = vld [vmem:[%s493 + $0xa8] sm:$0xff]
      %v509 = vld [vmem:[%s493 + $0xb0] sm:$0xff]
      %v510 = vld [vmem:[%s493 + $0xc0] sm:$0xff]
      %v511 = vld [vmem:[%s493 + $0xc8] sm:$0xff]
      %v512 = vld [vmem:[%s493 + $0xd8] sm:$0xff]
      %v513 = vld [vmem:[%s493 + $0xe0] sm:$0xff]
      %v514 = vld [vmem:[%s493 + $0xf0] sm:$0xff]
      %v515 = vld [vmem:[%s493 + $0xf8] sm:$0xff]
      %v516 = vld [vmem:[%s493 + $0x108] sm:$0xff]
      %v517 = vld [vmem:[%s493 + $0x110] sm:$0xff]
      %v518 = vld [vmem:[%s493 + $0x120] sm:$0xff]
      %v519 = vld [vmem:[%s493 + $0x128] sm:$0xff]
      %v520 = vld [vmem:[%s493 + $0x138] sm:$0xff]
      %v521 = vld [vmem:[%s493 + $0x140] sm:$0xff]
      %v522 = vld [vmem:[%s493 + $0x150] sm:$0xff]
      %v523 = vld [vmem:[%s493 + $0x158] sm:$0xff]
      %v524 = vld [vmem:[%s493 + $0x168] sm:$0xff]
      %v525 = vld [vmem:[%s493 + $0x170] sm:$0xff]
      %v526 = vld [vmem:[%s493 + $0x1] sm:$0xff]
      %v527 = vld [vmem:[%s493 + $0x9] sm:$0xff]
      %v528 = vld [vmem:[%s493 + $0x19] sm:$0xff]
      %v529 = vld [vmem:[%s493 + $0x21] sm:$0xff]
      %v530 = vld [vmem:[%s493 + $0x31] sm:$0xff]
      %v531 = vld [vmem:[%s493 + $0x39] sm:$0xff]
      %v532 = vld [vmem:[%s493 + $0x49] sm:$0xff]
      %v533 = vld [vmem:[%s493 + $0x51] sm:$0xff]
      %v534 = vld [vmem:[%s493 + $0x61] sm:$0xff]
      %v535 = vld [vmem:[%s493 + $0x69] sm:$0xff]
      %v536 = vld [vmem:[%s493 + $0x79] sm:$0xff]
      %v537 = vld [vmem:[%s493 + $0x81] sm:$0xff]
      %v538 = vld [vmem:[%s493 + $0x91] sm:$0xff]
      %v539 = vld [vmem:[%s493 + $0x99] sm:$0xff]
      %v540 = vld [vmem:[%s493 + $0xa9] sm:$0xff]
      %v541 = vld [vmem:[%s493 + $0xb1] sm:$0xff]
      %v542 = vld [vmem:[%s493 + $0xc1] sm:$0xff]
      %v543 = vld [vmem:[%s493 + $0xc9] sm:$0xff]
      %v544 = vld [vmem:[%s493 + $0xd9] sm:$0xff]
      %v545 = vld [vmem:[%s493 + $0xe1] sm:$0xff]
      %v546 = vld [vmem:[%s493 + $0xf1] sm:$0xff]
      %v547 = vld [vmem:[%s493 + $0xf9] sm:$0xff]
      %v548 = vld [vmem:[%s493 + $0x109] sm:$0xff]
      %v549 = vld [vmem:[%s493 + $0x111] sm:$0xff]
      %v550 = vld [vmem:[%s493 + $0x121] sm:$0xff]
      %v551 = vld [vmem:[%s493 + $0x129] sm:$0xff]
      %v552 = vld [vmem:[%s493 + $0x139] sm:$0xff]
      %v553 = vld [vmem:[%s493 + $0x141] sm:$0xff]
      %v554 = vld [vmem:[%s493 + $0x151] sm:$0xff]
      %v555 = vld [vmem:[%s493 + $0x159] sm:$0xff]
      %v556 = vld [vmem:[%s493 + $0x169] sm:$0xff]
      %v557 = vld [vmem:[%s493 + $0x171] sm:$0xff]
      %v558 = vpack.c.bf16 %v375, %v374
      %v559 = vpack.c.bf16 %v377, %v376
      %v560 = vpack.c.bf16 %v379, %v378
      %v561 = vpack.c.bf16 %v381, %v380
      %v562 = vpack.c.bf16 %v383, %v382
      %v563 = vpack.c.bf16 %v385, %v384
      %v564 = vpack.c.bf16 %v387, %v386
      %v565 = vpack.c.bf16 %v389, %v388
      %v566 = vpack.c.bf16 %v391, %v390
      %v567 = vpack.c.bf16 %v393, %v392
      %v568 = vpack.c.bf16 %v395, %v394
      %v569 = vpack.c.bf16 %v397, %v396
      %v570 = vpack.c.bf16 %v399, %v398
      %v571 = vpack.c.bf16 %v401, %v400
      %v572 = vpack.c.bf16 %v403, %v402
      %v573 = vpack.c.bf16 %v405, %v404
      %v574 = vld [vmem:[%s3] sm:$0x3]
      %v575 = vpack.c.bf16 %v462, %v461
      %v576 = vpack.c.bf16 %v464, %v463
      %v577 = vpack.c.bf16 %v466, %v465
      %v578 = vpack.c.bf16 %v468, %v467
      %v579 = vpack.c.bf16 %v470, %v469
      %v580 = vpack.c.bf16 %v472, %v471
      %v581 = vpack.c.bf16 %v474, %v473
      %v582 = vpack.c.bf16 %v476, %v475
      %v583 = vpack.c.bf16 %v478, %v477
      %v584 = vpack.c.bf16 %v480, %v479
      %v585 = vpack.c.bf16 %v482, %v481
      %v586 = vpack.c.bf16 %v484, %v483
      %v587 = vpack.c.bf16 %v486, %v485
      %v588 = vpack.c.bf16 %v488, %v487
      %v589 = vpack.c.bf16 %v490, %v489
      %v590 = vpack.c.bf16 %v492, %v491
      %s591 = scalar_lea.vmem %s3, 2
      %v592 = vld [vmem:[%s591] sm:$0x3]
      %v594 = vsel %vm407, %v575, 0
      %v597 = vsel %vm407, %v576, 0
      %v600 = vsel %vm407, %v577, 0
      %v603 = vsel %vm407, %v578, 0
      %v606 = vsel %vm407, %v579, 0
      %v609 = vsel %vm407, %v580, 0
      %v612 = vsel %vm407, %v581, 0
      %v615 = vsel %vm407, %v582, 0
      %v618 = vsel %vm407, %v583, 0
      %v621 = vsel %vm407, %v584, 0
      %v624 = vsel %vm407, %v585, 0
      %v627 = vsel %vm407, %v586, 0
      %v630 = vsel %vm407, %v587, 0
      %v633 = vsel %vm407, %v588, 0
      %v636 = vsel %vm407, %v589, 0
      %v639 = vsel %vm407, %v590, 0
      %vm641 = vcmask 1041408
      %v643 = vsel %vm641, %v592, 0
      %645 = vmatpush.bf16.msra.mxu0 0
      %646 = vmatpush.bf16.msra.mxu0 0
      %647 = vmatpush.bf16.msra.mxu0 0
      %648 = vmatpush.bf16.msra.mxu0 0
      %649 = vmatpush.bf16.msra.mxu0 0
      %650 = vmatpush.bf16.msra.mxu0 0
      %651 = vmatpush.bf16.msra.mxu0 0
      %652 = vmatpush.bf16.msra.mxu0 %v643
      %653 = vmatmul.bf16.gmra.mxu0 %v594
      %v654 = vpop.f32.mrf.mxu0
      %v655 = vadd.f32 0.0, %v654
      %v656 = vpop.f32.mrf.mxu0
      %v657 = vadd.f32 0.0, %v656
      %658 = vmatmul.bf16.gmra.mxu0 %v597
      %v659 = vpop.f32.mrf.mxu0
      %v660 = vadd.f32 0.0, %v659
      %v661 = vpop.f32.mrf.mxu0
      %v662 = vadd.f32 0.0, %v661
      %663 = vmatmul.bf16.gmra.mxu0 %v600
      %v664 = vpop.f32.mrf.mxu0
      %v665 = vadd.f32 0.0, %v664
      %v666 = vpop.f32.mrf.mxu0
      %v667 = vadd.f32 0.0, %v666
      %668 = vmatmul.bf16.gmra.mxu0 %v603
      %v669 = vpop.f32.mrf.mxu0
      %v670 = vadd.f32 0.0, %v669
      %v671 = vpop.f32.mrf.mxu0
      %v672 = vadd.f32 0.0, %v671
      %673 = vmatmul.bf16.gmra.mxu0 %v606
      %v674 = vpop.f32.mrf.mxu0
      %v675 = vadd.f32 0.0, %v674
      %v676 = vpop.f32.mrf.mxu0
      %v677 = vadd.f32 0.0, %v676
      %678 = vmatmul.bf16.gmra.mxu0 %v609
      %v679 = vpop.f32.mrf.mxu0
      %v680 = vadd.f32 0.0, %v679
      %v681 = vpop.f32.mrf.mxu0
      %v682 = vadd.f32 0.0, %v681
      %683 = vmatmul.bf16.gmra.mxu0 %v612
      %v684 = vpop.f32.mrf.mxu0
      %v685 = vadd.f32 0.0, %v684
      %v686 = vpop.f32.mrf.mxu0
      %v687 = vadd.f32 0.0, %v686
      %688 = vmatmul.bf16.gmra.mxu0 %v615
      %v689 = vpop.f32.mrf.mxu0
      %v690 = vadd.f32 0.0, %v689
      %v691 = vpop.f32.mrf.mxu0
      %v692 = vadd.f32 0.0, %v691
      %693 = vmatmul.bf16.gmra.mxu0 %v618
      %v694 = vpop.f32.mrf.mxu0
      %v695 = vadd.f32 0.0, %v694
      %v696 = vpop.f32.mrf.mxu0
      %v697 = vadd.f32 0.0, %v696
      %698 = vmatmul.bf16.gmra.mxu0 %v621
      %v699 = vpop.f32.mrf.mxu0
      %v700 = vadd.f32 0.0, %v699
      %v701 = vpop.f32.mrf.mxu0
      %v702 = vadd.f32 0.0, %v701
      %703 = vmatmul.bf16.gmra.mxu0 %v624
      %v704 = vpop.f32.mrf.mxu0
      %v705 = vadd.f32 0.0, %v704
      %v706 = vpop.f32.mrf.mxu0
      %v707 = vadd.f32 0.0, %v706
      %708 = vmatmul.bf16.gmra.mxu0 %v627
      %v709 = vpop.f32.mrf.mxu0
      %v710 = vadd.f32 0.0, %v709
      %v711 = vpop.f32.mrf.mxu0
      %v712 = vadd.f32 0.0, %v711
      %713 = vmatmul.bf16.gmra.mxu0 %v630
      %v714 = vpop.f32.mrf.mxu0
      %v715 = vadd.f32 0.0, %v714
      %v716 = vpop.f32.mrf.mxu0
      %v717 = vadd.f32 0.0, %v716
      %718 = vmatmul.bf16.gmra.mxu0 %v633
      %v719 = vpop.f32.mrf.mxu0
      %v720 = vadd.f32 0.0, %v719
      %v721 = vpop.f32.mrf.mxu0
      %v722 = vadd.f32 0.0, %v721
      %723 = vmatmul.bf16.gmra.mxu0 %v636
      %v724 = vpop.f32.mrf.mxu0
      %v725 = vadd.f32 0.0, %v724
      %v726 = vpop.f32.mrf.mxu0
      %v727 = vadd.f32 0.0, %v726
      %728 = vmatmul.bf16.gmra.mxu0 %v639
      %v729 = vpop.f32.mrf.mxu0
      %v730 = vadd.f32 0.0, %v729
      %v731 = vpop.f32.mrf.mxu0
      %v732 = vadd.f32 0.0, %v731
      %733 = vdwg.mxu0
      %v735 = vsel %vm407, %v558, 0
      %v738 = vsel %vm407, %v559, 0
      %v741 = vsel %vm407, %v560, 0
      %v744 = vsel %vm407, %v561, 0
      %v747 = vsel %vm407, %v562, 0
      %v750 = vsel %vm407, %v563, 0
      %v753 = vsel %vm407, %v564, 0
      %v756 = vsel %vm407, %v565, 0
      %v759 = vsel %vm407, %v566, 0
      %v762 = vsel %vm407, %v567, 0
      %v765 = vsel %vm407, %v568, 0
      %v768 = vsel %vm407, %v569, 0
      %v771 = vsel %vm407, %v570, 0
      %v774 = vsel %vm407, %v571, 0
      %v777 = vsel %vm407, %v572, 0
      %v780 = vsel %vm407, %v573, 0
      %v783 = vsel %vm641, %v574, 0
      %785 = vmatpush.bf16.msra.mxu0 0
      %786 = vmatpush.bf16.msra.mxu0 0
      %787 = vmatpush.bf16.msra.mxu0 0
      %788 = vmatpush.bf16.msra.mxu0 0
      %789 = vmatpush.bf16.msra.mxu0 0
      %790 = vmatpush.bf16.msra.mxu0 0
      %791 = vmatpush.bf16.msra.mxu0 0
      %792 = vmatpush.bf16.msra.mxu0 %v783
      %793 = vmatmul.bf16.gmra.mxu0 %v735
      %v794 = vpop.f32.mrf.mxu0
      %v795 = vadd.f32 %v655, %v794
      %v796 = vpop.f32.mrf.mxu0
      %v797 = vadd.f32 %v657, %v796
      %798 = vmatmul.bf16.gmra.mxu0 %v738
      %v799 = vpop.f32.mrf.mxu0
      %v800 = vadd.f32 %v660, %v799
      %v801 = vpop.f32.mrf.mxu0
      %v802 = vadd.f32 %v662, %v801
      %803 = vmatmul.bf16.gmra.mxu0 %v741
      %v804 = vpop.f32.mrf.mxu0
      %v805 = vadd.f32 %v665, %v804
      %v806 = vpop.f32.mrf.mxu0
      %v807 = vadd.f32 %v667, %v806
      %808 = vmatmul.bf16.gmra.mxu0 %v744
      %v809 = vpop.f32.mrf.mxu0
      %v810 = vadd.f32 %v670, %v809
      %v811 = vpop.f32.mrf.mxu0
      %v812 = vadd.f32 %v672, %v811
      %813 = vmatmul.bf16.gmra.mxu0 %v747
      %v814 = vpop.f32.mrf.mxu0
      %v815 = vadd.f32 %v675, %v814
      %v816 = vpop.f32.mrf.mxu0
      %v817 = vadd.f32 %v677, %v816
      %818 = vmatmul.bf16.gmra.mxu0 %v750
      %v819 = vpop.f32.mrf.mxu0
      %v820 = vadd.f32 %v680, %v819
      %v821 = vpop.f32.mrf.mxu0
      %v822 = vadd.f32 %v682, %v821
      %823 = vmatmul.bf16.gmra.mxu0 %v753
      %v824 = vpop.f32.mrf.mxu0
      %v825 = vadd.f32 %v685, %v824
      %v826 = vpop.f32.mrf.mxu0
      %v827 = vadd.f32 %v687, %v826
      %828 = vmatmul.bf16.gmra.mxu0 %v756
      %v829 = vpop.f32.mrf.mxu0
      %v830 = vadd.f32 %v690, %v829
      %v831 = vpop.f32.mrf.mxu0
      %v832 = vadd.f32 %v692, %v831
      %833 = vmatmul.bf16.gmra.mxu0 %v759
      %v834 = vpop.f32.mrf.mxu0
      %v835 = vadd.f32 %v695, %v834
      %v836 = vpop.f32.mrf.mxu0
      %v837 = vadd.f32 %v697, %v836
      %838 = vmatmul.bf16.gmra.mxu0 %v762
      %v839 = vpop.f32.mrf.mxu0
      %v840 = vadd.f32 %v700, %v839
      %v841 = vpop.f32.mrf.mxu0
      %v842 = vadd.f32 %v702, %v841
      %843 = vmatmul.bf16.gmra.mxu0 %v765
      %v844 = vpop.f32.mrf.mxu0
      %v845 = vadd.f32 %v705, %v844
      %v846 = vpop.f32.mrf.mxu0
      %v847 = vadd.f32 %v707, %v846
      %848 = vmatmul.bf16.gmra.mxu0 %v768
      %v849 = vpop.f32.mrf.mxu0
      %v850 = vadd.f32 %v710, %v849
      %v851 = vpop.f32.mrf.mxu0
      %v852 = vadd.f32 %v712, %v851
      %853 = vmatmul.bf16.gmra.mxu0 %v771
      %v854 = vpop.f32.mrf.mxu0
      %v855 = vadd.f32 %v715, %v854
      %v856 = vpop.f32.mrf.mxu0
      %v857 = vadd.f32 %v717, %v856
      %858 = vmatmul.bf16.gmra.mxu0 %v774
      %v859 = vpop.f32.mrf.mxu0
      %v860 = vadd.f32 %v720, %v859
      %v861 = vpop.f32.mrf.mxu0
      %v862 = vadd.f32 %v722, %v861
      %863 = vmatmul.bf16.gmra.mxu0 %v777
      %v864 = vpop.f32.mrf.mxu0
      %v865 = vadd.f32 %v725, %v864
      %v866 = vpop.f32.mrf.mxu0
      %v867 = vadd.f32 %v727, %v866
      %868 = vmatmul.bf16.gmra.mxu0 %v780
      %v869 = vpop.f32.mrf.mxu0
      %v870 = vadd.f32 %v730, %v869
      %v871 = vpop.f32.mrf.mxu0
      %v872 = vadd.f32 %v732, %v871
      %873 = vdwg.mxu0
      %v874 = vpack.c.bf16 %v495, %v494
      %v875 = vpack.c.bf16 %v497, %v496
      %v876 = vpack.c.bf16 %v499, %v498
      %v877 = vpack.c.bf16 %v501, %v500
      %v878 = vpack.c.bf16 %v503, %v502
      %v879 = vpack.c.bf16 %v505, %v504
      %v880 = vpack.c.bf16 %v507, %v506
      %v881 = vpack.c.bf16 %v509, %v508
      %v882 = vpack.c.bf16 %v511, %v510
      %v883 = vpack.c.bf16 %v513, %v512
      %v884 = vpack.c.bf16 %v515, %v514
      %v885 = vpack.c.bf16 %v517, %v516
      %v886 = vpack.c.bf16 %v519, %v518
      %v887 = vpack.c.bf16 %v521, %v520
      %v888 = vpack.c.bf16 %v523, %v522
      %v889 = vpack.c.bf16 %v525, %v524
      %s890 = scalar_lea.vmem %s3, 4
      %v891 = vld [vmem:[%s890] sm:$0x3]
      %v893 = vsel %vm407, %v874, 0
      %v896 = vsel %vm407, %v875, 0
      %v899 = vsel %vm407, %v876, 0
      %v902 = vsel %vm407, %v877, 0
      %v905 = vsel %vm407, %v878, 0
      %v908 = vsel %vm407, %v879, 0
      %v911 = vsel %vm407, %v880, 0
      %v914 = vsel %vm407, %v881, 0
      %v917 = vsel %vm407, %v882, 0
      %v920 = vsel %vm407, %v883, 0
      %v923 = vsel %vm407, %v884, 0
      %v926 = vsel %vm407, %v885, 0
      %v929 = vsel %vm407, %v886, 0
      %v932 = vsel %vm407, %v887, 0
      %v935 = vsel %vm407, %v888, 0
      %v938 = vsel %vm407, %v889, 0
      %v941 = vsel %vm641, %v891, 0
      %943 = vmatpush.bf16.msra.mxu0 0
      %944 = vmatpush.bf16.msra.mxu0 0
      %945 = vmatpush.bf16.msra.mxu0 0
      %946 = vmatpush.bf16.msra.mxu0 0
      %947 = vmatpush.bf16.msra.mxu0 0
      %948 = vmatpush.bf16.msra.mxu0 0
      %949 = vmatpush.bf16.msra.mxu0 0
      %950 = vmatpush.bf16.msra.mxu0 %v941
      %951 = vmatmul.bf16.gmra.mxu0 %v893
      %v952 = vpop.f32.mrf.mxu0
      %v953 = vadd.f32 0.0, %v952
      %v954 = vpop.f32.mrf.mxu0
      %v955 = vadd.f32 0.0, %v954
      %956 = vmatmul.bf16.gmra.mxu0 %v896
      %v957 = vpop.f32.mrf.mxu0
      %v958 = vadd.f32 0.0, %v957
      %v959 = vpop.f32.mrf.mxu0
      %v960 = vadd.f32 0.0, %v959
      %961 = vmatmul.bf16.gmra.mxu0 %v899
      %v962 = vpop.f32.mrf.mxu0
      %v963 = vadd.f32 0.0, %v962
      %v964 = vpop.f32.mrf.mxu0
      %v965 = vadd.f32 0.0, %v964
      %966 = vmatmul.bf16.gmra.mxu0 %v902
      %v967 = vpop.f32.mrf.mxu0
      %v968 = vadd.f32 0.0, %v967
      %v969 = vpop.f32.mrf.mxu0
      %v970 = vadd.f32 0.0, %v969
      %971 = vmatmul.bf16.gmra.mxu0 %v905
      %v972 = vpop.f32.mrf.mxu0
      %v973 = vadd.f32 0.0, %v972
      %v974 = vpop.f32.mrf.mxu0
      %v975 = vadd.f32 0.0, %v974
      %976 = vmatmul.bf16.gmra.mxu0 %v908
      %v977 = vpop.f32.mrf.mxu0
      %v978 = vadd.f32 0.0, %v977
      %v979 = vpop.f32.mrf.mxu0
      %v980 = vadd.f32 0.0, %v979
      %981 = vmatmul.bf16.gmra.mxu0 %v911
      %v982 = vpop.f32.mrf.mxu0
      %v983 = vadd.f32 0.0, %v982
      %v984 = vpop.f32.mrf.mxu0
      %v985 = vadd.f32 0.0, %v984
      %986 = vmatmul.bf16.gmra.mxu0 %v914
      %v987 = vpop.f32.mrf.mxu0
      %v988 = vadd.f32 0.0, %v987
      %v989 = vpop.f32.mrf.mxu0
      %v990 = vadd.f32 0.0, %v989
      %991 = vmatmul.bf16.gmra.mxu0 %v917
      %v992 = vpop.f32.mrf.mxu0
      %v993 = vadd.f32 0.0, %v992
      %v994 = vpop.f32.mrf.mxu0
      %v995 = vadd.f32 0.0, %v994
      %996 = vmatmul.bf16.gmra.mxu0 %v920
      %v997 = vpop.f32.mrf.mxu0
      %v998 = vadd.f32 0.0, %v997
      %v999 = vpop.f32.mrf.mxu0
      %v1000 = vadd.f32 0.0, %v999
      %1001 = vmatmul.bf16.gmra.mxu0 %v923
      %v1002 = vpop.f32.mrf.mxu0
      %v1003 = vadd.f32 0.0, %v1002
      %v1004 = vpop.f32.mrf.mxu0
      %v1005 = vadd.f32 0.0, %v1004
      %1006 = vmatmul.bf16.gmra.mxu0 %v926
      %v1007 = vpop.f32.mrf.mxu0
      %v1008 = vadd.f32 0.0, %v1007
      %v1009 = vpop.f32.mrf.mxu0
      %v1010 = vadd.f32 0.0, %v1009
      %1011 = vmatmul.bf16.gmra.mxu0 %v929
      %v1012 = vpop.f32.mrf.mxu0
      %v1013 = vadd.f32 0.0, %v1012
      %v1014 = vpop.f32.mrf.mxu0
      %v1015 = vadd.f32 0.0, %v1014
      %1016 = vmatmul.bf16.gmra.mxu0 %v932
      %v1017 = vpop.f32.mrf.mxu0
      %v1018 = vadd.f32 0.0, %v1017
      %v1019 = vpop.f32.mrf.mxu0
      %v1020 = vadd.f32 0.0, %v1019
      %1021 = vmatmul.bf16.gmra.mxu0 %v935
      %v1022 = vpop.f32.mrf.mxu0
      %v1023 = vadd.f32 0.0, %v1022
      %v1024 = vpop.f32.mrf.mxu0
      %v1025 = vadd.f32 0.0, %v1024
      %1026 = vmatmul.bf16.gmra.mxu0 %v938
      %v1027 = vpop.f32.mrf.mxu0
      %v1028 = vadd.f32 0.0, %v1027
      %v1029 = vpop.f32.mrf.mxu0
      %v1030 = vadd.f32 0.0, %v1029
      %1031 = vdwg.mxu0
      %v1032 = vadd.f32 %v795, %v953
      %v1033 = vadd.f32 %v797, %v955
      %v1034 = vadd.f32 %v800, %v958
      %v1035 = vadd.f32 %v802, %v960
      %v1036 = vadd.f32 %v805, %v963
      %v1037 = vadd.f32 %v807, %v965
      %v1038 = vadd.f32 %v810, %v968
      %v1039 = vadd.f32 %v812, %v970
      %v1040 = vadd.f32 %v815, %v973
      %v1041 = vadd.f32 %v817, %v975
      %v1042 = vadd.f32 %v820, %v978
      %v1043 = vadd.f32 %v822, %v980
      %v1044 = vadd.f32 %v825, %v983
      %v1045 = vadd.f32 %v827, %v985
      %v1046 = vadd.f32 %v830, %v988
      %v1047 = vadd.f32 %v832, %v990
      %v1048 = vadd.f32 %v835, %v993
      %v1049 = vadd.f32 %v837, %v995
      %v1050 = vadd.f32 %v840, %v998
      %v1051 = vadd.f32 %v842, %v1000
      %v1052 = vadd.f32 %v845, %v1003
      %v1053 = vadd.f32 %v847, %v1005
      %v1054 = vadd.f32 %v850, %v1008
      %v1055 = vadd.f32 %v852, %v1010
      %v1056 = vadd.f32 %v855, %v1013
      %v1057 = vadd.f32 %v857, %v1015
      %v1058 = vadd.f32 %v860, %v1018
      %v1059 = vadd.f32 %v862, %v1020
      %v1060 = vadd.f32 %v865, %v1023
      %v1061 = vadd.f32 %v867, %v1025
      %v1062 = vadd.f32 %v870, %v1028
      %v1063 = vadd.f32 %v872, %v1030
      %v1064 = vpack.c.bf16 %v527, %v526
      %v1065 = vpack.c.bf16 %v529, %v528
      %v1066 = vpack.c.bf16 %v531, %v530
      %v1067 = vpack.c.bf16 %v533, %v532
      %v1068 = vpack.c.bf16 %v535, %v534
      %v1069 = vpack.c.bf16 %v537, %v536
      %v1070 = vpack.c.bf16 %v539, %v538
      %v1071 = vpack.c.bf16 %v541, %v540
      %v1072 = vpack.c.bf16 %v543, %v542
      %v1073 = vpack.c.bf16 %v545, %v544
      %v1074 = vpack.c.bf16 %v547, %v546
      %v1075 = vpack.c.bf16 %v549, %v548
      %v1076 = vpack.c.bf16 %v551, %v550
      %v1077 = vpack.c.bf16 %v553, %v552
      %v1078 = vpack.c.bf16 %v555, %v554
      %v1079 = vpack.c.bf16 %v557, %v556
      %s1080 = scalar_lea.vmem %s3, 6
      %v1081 = vld [vmem:[%s1080] sm:$0x3]
      %v1083 = vsel %vm407, %v1064, 0
      %v1086 = vsel %vm407, %v1065, 0
      %v1089 = vsel %vm407, %v1066, 0
      %v1092 = vsel %vm407, %v1067, 0
      %v1095 = vsel %vm407, %v1068, 0
      %v1098 = vsel %vm407, %v1069, 0
      %v1101 = vsel %vm407, %v1070, 0
      %v1104 = vsel %vm407, %v1071, 0
      %v1107 = vsel %vm407, %v1072, 0
      %v1110 = vsel %vm407, %v1073, 0
      %v1113 = vsel %vm407, %v1074, 0
      %v1116 = vsel %vm407, %v1075, 0
      %v1119 = vsel %vm407, %v1076, 0
      %v1122 = vsel %vm407, %v1077, 0
      %v1125 = vsel %vm407, %v1078, 0
      %v1128 = vsel %vm407, %v1079, 0
      %v1131 = vsel %vm641, %v1081, 0
      %1133 = vmatpush.bf16.msra.mxu0 0
      %1134 = vmatpush.bf16.msra.mxu0 0
      %1135 = vmatpush.bf16.msra.mxu0 0
      %1136 = vmatpush.bf16.msra.mxu0 0
      %1137 = vmatpush.bf16.msra.mxu0 0
      %1138 = vmatpush.bf16.msra.mxu0 0
      %1139 = vmatpush.bf16.msra.mxu0 0
      %1140 = vmatpush.bf16.msra.mxu0 %v1131
      %1141 = vmatmul.bf16.gmra.mxu0 %v1083
      %v1142 = vpop.f32.mrf.mxu0
      %v1143 = vadd.f32 0.0, %v1142
      %v1144 = vpop.f32.mrf.mxu0
      %v1145 = vadd.f32 0.0, %v1144
      %1146 = vmatmul.bf16.gmra.mxu0 %v1086
      %v1147 = vpop.f32.mrf.mxu0
      %v1148 = vadd.f32 0.0, %v1147
      %v1149 = vpop.f32.mrf.mxu0
      %v1150 = vadd.f32 0.0, %v1149
      %1151 = vmatmul.bf16.gmra.mxu0 %v1089
      %v1152 = vpop.f32.mrf.mxu0
      %v1153 = vadd.f32 0.0, %v1152
      %v1154 = vpop.f32.mrf.mxu0
      %v1155 = vadd.f32 0.0, %v1154
      %1156 = vmatmul.bf16.gmra.mxu0 %v1092
      %v1157 = vpop.f32.mrf.mxu0
      %v1158 = vadd.f32 0.0, %v1157
      %v1159 = vpop.f32.mrf.mxu0
      %v1160 = vadd.f32 0.0, %v1159
      %1161 = vmatmul.bf16.gmra.mxu0 %v1095
      %v1162 = vpop.f32.mrf.mxu0
      %v1163 = vadd.f32 0.0, %v1162
      %v1164 = vpop.f32.mrf.mxu0
      %v1165 = vadd.f32 0.0, %v1164
      %1166 = vmatmul.bf16.gmra.mxu0 %v1098
      %v1167 = vpop.f32.mrf.mxu0
      %v1168 = vadd.f32 0.0, %v1167
      %v1169 = vpop.f32.mrf.mxu0
      %v1170 = vadd.f32 0.0, %v1169
      %1171 = vmatmul.bf16.gmra.mxu0 %v1101
      %v1172 = vpop.f32.mrf.mxu0
      %v1173 = vadd.f32 0.0, %v1172
      %v1174 = vpop.f32.mrf.mxu0
      %v1175 = vadd.f32 0.0, %v1174
      %1176 = vmatmul.bf16.gmra.mxu0 %v1104
      %v1177 = vpop.f32.mrf.mxu0
      %v1178 = vadd.f32 0.0, %v1177
      %v1179 = vpop.f32.mrf.mxu0
      %v1180 = vadd.f32 0.0, %v1179
      %1181 = vmatmul.bf16.gmra.mxu0 %v1107
      %v1182 = vpop.f32.mrf.mxu0
      %v1183 = vadd.f32 0.0, %v1182
      %v1184 = vpop.f32.mrf.mxu0
      %v1185 = vadd.f32 0.0, %v1184
      %1186 = vmatmul.bf16.gmra.mxu0 %v1110
      %v1187 = vpop.f32.mrf.mxu0
      %v1188 = vadd.f32 0.0, %v1187
      %v1189 = vpop.f32.mrf.mxu0
      %v1190 = vadd.f32 0.0, %v1189
      %1191 = vmatmul.bf16.gmra.mxu0 %v1113
      %v1192 = vpop.f32.mrf.mxu0
      %v1193 = vadd.f32 0.0, %v1192
      %v1194 = vpop.f32.mrf.mxu0
      %v1195 = vadd.f32 0.0, %v1194
      %1196 = vmatmul.bf16.gmra.mxu0 %v1116
      %v1197 = vpop.f32.mrf.mxu0
      %v1198 = vadd.f32 0.0, %v1197
      %v1199 = vpop.f32.mrf.mxu0
      %v1200 = vadd.f32 0.0, %v1199
      %1201 = vmatmul.bf16.gmra.mxu0 %v1119
      %v1202 = vpop.f32.mrf.mxu0
      %v1203 = vadd.f32 0.0, %v1202
      %v1204 = vpop.f32.mrf.mxu0
      %v1205 = vadd.f32 0.0, %v1204
      %1206 = vmatmul.bf16.gmra.mxu0 %v1122
      %v1207 = vpop.f32.mrf.mxu0
      %v1208 = vadd.f32 0.0, %v1207
      %v1209 = vpop.f32.mrf.mxu0
      %v1210 = vadd.f32 0.0, %v1209
      %1211 = vmatmul.bf16.gmra.mxu0 %v1125
      %v1212 = vpop.f32.mrf.mxu0
      %v1213 = vadd.f32 0.0, %v1212
      %v1214 = vpop.f32.mrf.mxu0
      %v1215 = vadd.f32 0.0, %v1214
      %1216 = vmatmul.bf16.gmra.mxu0 %v1128
      %v1217 = vpop.f32.mrf.mxu0
      %v1218 = vadd.f32 0.0, %v1217
      %v1219 = vpop.f32.mrf.mxu0
      %v1220 = vadd.f32 0.0, %v1219
      %1221 = vdwg.mxu0
      %v1222 = vadd.f32 %v1032, %v1143
      %v1223 = vadd.f32 %v1033, %v1145
      %v1224 = vadd.f32 %v1034, %v1148
      %v1225 = vadd.f32 %v1035, %v1150
      %v1226 = vadd.f32 %v1036, %v1153
      %v1227 = vadd.f32 %v1037, %v1155
      %v1228 = vadd.f32 %v1038, %v1158
      %v1229 = vadd.f32 %v1039, %v1160
      %v1230 = vadd.f32 %v1040, %v1163
      %v1231 = vadd.f32 %v1041, %v1165
      %v1232 = vadd.f32 %v1042, %v1168
      %v1233 = vadd.f32 %v1043, %v1170
      %v1234 = vadd.f32 %v1044, %v1173
      %v1235 = vadd.f32 %v1045, %v1175
      %v1236 = vadd.f32 %v1046, %v1178
      %v1237 = vadd.f32 %v1047, %v1180
      %v1238 = vadd.f32 %v1048, %v1183
      %v1239 = vadd.f32 %v1049, %v1185
      %v1240 = vadd.f32 %v1050, %v1188
      %v1241 = vadd.f32 %v1051, %v1190
      %v1242 = vadd.f32 %v1052, %v1193
      %v1243 = vadd.f32 %v1053, %v1195
      %v1244 = vadd.f32 %v1054, %v1198
      %v1245 = vadd.f32 %v1055, %v1200
      %v1246 = vadd.f32 %v1056, %v1203
      %v1247 = vadd.f32 %v1057, %v1205
      %v1248 = vadd.f32 %v1058, %v1208
      %v1249 = vadd.f32 %v1059, %v1210
      %v1250 = vadd.f32 %v1060, %v1213
      %v1251 = vadd.f32 %v1061, %v1215
      %v1252 = vadd.f32 %v1062, %v1218
      %v1253 = vadd.f32 %v1063, %v1220
      %v1254 = vpack.c.bf16 %v1222, %v1222
      %v1255 = vpack.c.bf16 %v1223, %v1223
      %v1256 = vpack.c.bf16 %v1224, %v1224
      %v1257 = vpack.c.bf16 %v1225, %v1225
      %v1258 = vpack.c.bf16 %v1226, %v1226
      %v1259 = vpack.c.bf16 %v1227, %v1227
      %v1260 = vpack.c.bf16 %v1228, %v1228
      %v1261 = vpack.c.bf16 %v1229, %v1229
      %v1262 = vpack.c.bf16 %v1230, %v1230
      %v1263 = vpack.c.bf16 %v1231, %v1231
      %v1264 = vpack.c.bf16 %v1232, %v1232
      %v1265 = vpack.c.bf16 %v1233, %v1233
      %v1266 = vpack.c.bf16 %v1234, %v1234
      %v1267 = vpack.c.bf16 %v1235, %v1235
      %v1268 = vpack.c.bf16 %v1236, %v1236
      %v1269 = vpack.c.bf16 %v1237, %v1237
      %v1270 = vpack.c.bf16 %v1238, %v1238
      %v1271 = vpack.c.bf16 %v1239, %v1239
      %v1272 = vpack.c.bf16 %v1240, %v1240
      %v1273 = vpack.c.bf16 %v1241, %v1241
      %v1274 = vpack.c.bf16 %v1242, %v1242
      %v1275 = vpack.c.bf16 %v1243, %v1243
      %v1276 = vpack.c.bf16 %v1244, %v1244
      %v1277 = vpack.c.bf16 %v1245, %v1245
      %v1278 = vpack.c.bf16 %v1246, %v1246
      %v1279 = vpack.c.bf16 %v1247, %v1247
      %v1280 = vpack.c.bf16 %v1248, %v1248
      %v1281 = vpack.c.bf16 %v1249, %v1249
      %v1282 = vpack.c.bf16 %v1250, %v1250
      %v1283 = vpack.c.bf16 %v1251, %v1251
      %v1284 = vpack.c.bf16 %v1252, %v1252
      %v1285 = vpack.c.bf16 %v1253, %v1253
      %vm1286 = vcmask 257024
      %1287 = vst.msk [vmem:[%s262] sm:$0xf] %vm1286, %v1254
      %1288 = vst.msk [vmem:[%s262 + $0x4] sm:$0xf] %vm1286, %v1255
      %1289 = vst.msk [vmem:[%s262 + $0x8] sm:$0xf] %vm1286, %v1256
      %1290 = vst.msk [vmem:[%s262 + $0xc] sm:$0xf] %vm1286, %v1257
      %1291 = vst.msk [vmem:[%s262 + $0x10] sm:$0xf] %vm1286, %v1258
      %1292 = vst.msk [vmem:[%s262 + $0x14] sm:$0xf] %vm1286, %v1259
      %1293 = vst.msk [vmem:[%s262 + $0x18] sm:$0xf] %vm1286, %v1260
      %1294 = vst.msk [vmem:[%s262 + $0x1c] sm:$0xf] %vm1286, %v1261
      %1295 = vst.msk [vmem:[%s262 + $0x20] sm:$0xf] %vm1286, %v1262
      %1296 = vst.msk [vmem:[%s262 + $0x24] sm:$0xf] %vm1286, %v1263
      %1297 = vst.msk [vmem:[%s262 + $0x28] sm:$0xf] %vm1286, %v1264
      %1298 = vst.msk [vmem:[%s262 + $0x2c] sm:$0xf] %vm1286, %v1265
      %1299 = vst.msk [vmem:[%s262 + $0x30] sm:$0xf] %vm1286, %v1266
      %1300 = vst.msk [vmem:[%s262 + $0x34] sm:$0xf] %vm1286, %v1267
      %1301 = vst.msk [vmem:[%s262 + $0x38] sm:$0xf] %vm1286, %v1268
      %1302 = vst.msk [vmem:[%s262 + $0x3c] sm:$0xf] %vm1286, %v1269
      %1303 = vst.msk [vmem:[%s262 + $0x40] sm:$0xf] %vm1286, %v1270
      %1304 = vst.msk [vmem:[%s262 + $0x44] sm:$0xf] %vm1286, %v1271
      %1305 = vst.msk [vmem:[%s262 + $0x48] sm:$0xf] %vm1286, %v1272
      %1306 = vst.msk [vmem:[%s262 + $0x4c] sm:$0xf] %vm1286, %v1273
      %1307 = vst.msk [vmem:[%s262 + $0x50] sm:$0xf] %vm1286, %v1274
      %1308 = vst.msk [vmem:[%s262 + $0x54] sm:$0xf] %vm1286, %v1275
      %1309 = vst.msk [vmem:[%s262 + $0x58] sm:$0xf] %vm1286, %v1276
      %1310 = vst.msk [vmem:[%s262 + $0x5c] sm:$0xf] %vm1286, %v1277
      %1311 = vst.msk [vmem:[%s262 + $0x60] sm:$0xf] %vm1286, %v1278
      %1312 = vst.msk [vmem:[%s262 + $0x64] sm:$0xf] %vm1286, %v1279
      %1313 = vst.msk [vmem:[%s262 + $0x68] sm:$0xf] %vm1286, %v1280
      %1314 = vst.msk [vmem:[%s262 + $0x6c] sm:$0xf] %vm1286, %v1281
      %1315 = vst.msk [vmem:[%s262 + $0x70] sm:$0xf] %vm1286, %v1282
      %1316 = vst.msk [vmem:[%s262 + $0x74] sm:$0xf] %vm1286, %v1283
      %1317 = vst.msk [vmem:[%s262 + $0x78] sm:$0xf] %vm1286, %v1284
      %1318 = vst.msk [vmem:[%s262 + $0x7c] sm:$0xf] %vm1286, %v1285
      %vm1319 = vcmask 261120
      %v1320 = vsel %vm1319, %v1222, 0.0
      %v1321 = vsel %vm1319, %v1223, 0.0
      %v1322 = vadd.f32 %v1320, %v1321
      %v1323 = vsel %vm1319, %v1224, 0.0
      %v1324 = vadd.f32 %v1322, %v1323
      %v1325 = vsel %vm1319, %v1225, 0.0
      %v1326 = vadd.f32 %v1324, %v1325
      %v1327 = vsel %vm1319, %v1226, 0.0
      %v1328 = vadd.f32 %v1326, %v1327
      %v1329 = vsel %vm1319, %v1227, 0.0
      %v1330 = vadd.f32 %v1328, %v1329
      %v1331 = vsel %vm1319, %v1228, 0.0
      %v1332 = vadd.f32 %v1330, %v1331
      %v1333 = vsel %vm1319, %v1229, 0.0
      %v1334 = vadd.f32 %v1332, %v1333
      %v1335 = vsel %vm1319, %v1230, 0.0
      %v1336 = vadd.f32 %v1334, %v1335
      %v1337 = vsel %vm1319, %v1231, 0.0
      %v1338 = vadd.f32 %v1336, %v1337
      %v1339 = vsel %vm1319, %v1232, 0.0
      %v1340 = vadd.f32 %v1338, %v1339
      %v1341 = vsel %vm1319, %v1233, 0.0
      %v1342 = vadd.f32 %v1340, %v1341
      %v1343 = vsel %vm1319, %v1234, 0.0
      %v1344 = vadd.f32 %v1342, %v1343
      %v1345 = vsel %vm1319, %v1235, 0.0
      %v1346 = vadd.f32 %v1344, %v1345
      %v1347 = vsel %vm1319, %v1236, 0.0
      %v1348 = vadd.f32 %v1346, %v1347
      %v1349 = vsel %vm1319, %v1237, 0.0
      %v1350 = vadd.f32 %v1348, %v1349
      %v1351 = vsel %vm1319, %v1238, 0.0
      %v1352 = vadd.f32 %v1350, %v1351
      %v1353 = vsel %vm1319, %v1239, 0.0
      %v1354 = vadd.f32 %v1352, %v1353
      %v1355 = vsel %vm1319, %v1240, 0.0
      %v1356 = vadd.f32 %v1354, %v1355
      %v1357 = vsel %vm1319, %v1241, 0.0
      %v1358 = vadd.f32 %v1356, %v1357
      %v1359 = vsel %vm1319, %v1242, 0.0
      %v1360 = vadd.f32 %v1358, %v1359
      %v1361 = vsel %vm1319, %v1243, 0.0
      %v1362 = vadd.f32 %v1360, %v1361
      %v1363 = vsel %vm1319, %v1244, 0.0
      %v1364 = vadd.f32 %v1362, %v1363
      %v1365 = vsel %vm1319, %v1245, 0.0
      %v1366 = vadd.f32 %v1364, %v1365
      %v1367 = vsel %vm1319, %v1246, 0.0
      %v1368 = vadd.f32 %v1366, %v1367
      %v1369 = vsel %vm1319, %v1247, 0.0
      %v1370 = vadd.f32 %v1368, %v1369
      %v1371 = vsel %vm1319, %v1248, 0.0
      %v1372 = vadd.f32 %v1370, %v1371
      %v1373 = vsel %vm1319, %v1249, 0.0
      %v1374 = vadd.f32 %v1372, %v1373
      %v1375 = vsel %vm1319, %v1250, 0.0
      %v1376 = vadd.f32 %v1374, %v1375
      %v1377 = vsel %vm1319, %v1251, 0.0
      %v1378 = vadd.f32 %v1376, %v1377
      %v1379 = vsel %vm1319, %v1252, 0.0
      %v1380 = vadd.f32 %v1378, %v1379
      %v1381 = vsel %vm1319, %v1253, 0.0
      %v1382 = vadd.f32 %v1380, %v1381
      %v1383 = vrot.slane %v1382, 4
      %v1384 = vadd.f32 %v1382, %v1383
      %v1385 = vrot.slane %v1384, 2
      %v1386 = vadd.f32 %v1384, %v1385
      %v1387 = vrot.slane %v1386, 1
      %v1388 = vadd.f32 %v1386, %v1387
      %vm1389 = vcmask 253952
      %1390 = vst.msk [vmem:[%s265] sm:$0x1] %vm1389, %v1388
      %v1391 = vmul.f32 %v1222, %v1222
      %v1392 = vmul.f32 %v1223, %v1223
      %v1393 = vmul.f32 %v1224, %v1224
      %v1394 = vmul.f32 %v1225, %v1225
      %v1395 = vmul.f32 %v1226, %v1226
      %v1396 = vmul.f32 %v1227, %v1227
      %v1397 = vmul.f32 %v1228, %v1228
      %v1398 = vmul.f32 %v1229, %v1229
      %v1399 = vmul.f32 %v1230, %v1230
      %v1400 = vmul.f32 %v1231, %v1231
      %v1401 = vmul.f32 %v1232, %v1232
      %v1402 = vmul.f32 %v1233, %v1233
      %v1403 = vmul.f32 %v1234, %v1234
      %v1404 = vmul.f32 %v1235, %v1235
      %v1405 = vmul.f32 %v1236, %v1236
      %v1406 = vmul.f32 %v1237, %v1237
      %v1407 = vmul.f32 %v1238, %v1238
      %v1408 = vmul.f32 %v1239, %v1239
      %v1409 = vmul.f32 %v1240, %v1240
      %v1410 = vmul.f32 %v1241, %v1241
      %v1411 = vmul.f32 %v1242, %v1242
      %v1412 = vmul.f32 %v1243, %v1243
      %v1413 = vmul.f32 %v1244, %v1244
      %v1414 = vmul.f32 %v1245, %v1245
      %v1415 = vmul.f32 %v1246, %v1246
      %v1416 = vmul.f32 %v1247, %v1247
      %v1417 = vmul.f32 %v1248, %v1248
      %v1418 = vmul.f32 %v1249, %v1249
      %v1419 = vmul.f32 %v1250, %v1250
      %v1420 = vmul.f32 %v1251, %v1251
      %v1421 = vmul.f32 %v1252, %v1252
      %v1422 = vmul.f32 %v1253, %v1253
      %v1423 = vsel %vm1319, %v1391, 0.0
      %v1424 = vsel %vm1319, %v1392, 0.0
      %v1425 = vadd.f32 %v1423, %v1424
      %v1426 = vsel %vm1319, %v1393, 0.0
      %v1427 = vadd.f32 %v1425, %v1426
      %v1428 = vsel %vm1319, %v1394, 0.0
      %v1429 = vadd.f32 %v1427, %v1428
      %v1430 = vsel %vm1319, %v1395, 0.0
      %v1431 = vadd.f32 %v1429, %v1430
      %v1432 = vsel %vm1319, %v1396, 0.0
      %v1433 = vadd.f32 %v1431, %v1432
      %v1434 = vsel %vm1319, %v1397, 0.0
      %v1435 = vadd.f32 %v1433, %v1434
      %v1436 = vsel %vm1319, %v1398, 0.0
      %v1437 = vadd.f32 %v1435, %v1436
      %v1438 = vsel %vm1319, %v1399, 0.0
      %v1439 = vadd.f32 %v1437, %v1438
      %v1440 = vsel %vm1319, %v1400, 0.0
      %v1441 = vadd.f32 %v1439, %v1440
      %v1442 = vsel %vm1319, %v1401, 0.0
      %v1443 = vadd.f32 %v1441, %v1442
      %v1444 = vsel %vm1319, %v1402, 0.0
      %v1445 = vadd.f32 %v1443, %v1444
      %v1446 = vsel %vm1319, %v1403, 0.0
      %v1447 = vadd.f32 %v1445, %v1446
      %v1448 = vsel %vm1319, %v1404, 0.0
      %v1449 = vadd.f32 %v1447, %v1448
      %v1450 = vsel %vm1319, %v1405, 0.0
      %v1451 = vadd.f32 %v1449, %v1450
      %v1452 = vsel %vm1319, %v1406, 0.0
      %v1453 = vadd.f32 %v1451, %v1452
      %v1454 = vsel %vm1319, %v1407, 0.0
      %v1455 = vadd.f32 %v1453, %v1454
      %v1456 = vsel %vm1319, %v1408, 0.0
      %v1457 = vadd.f32 %v1455, %v1456
      %v1458 = vsel %vm1319, %v1409, 0.0
      %v1459 = vadd.f32 %v1457, %v1458
      %v1460 = vsel %vm1319, %v1410, 0.0
      %v1461 = vadd.f32 %v1459, %v1460
      %v1462 = vsel %vm1319, %v1411, 0.0
      %v1463 = vadd.f32 %v1461, %v1462
      %v1464 = vsel %vm1319, %v1412, 0.0
      %v1465 = vadd.f32 %v1463, %v1464
      %v1466 = vsel %vm1319, %v1413, 0.0
      %v1467 = vadd.f32 %v1465, %v1466
      %v1468 = vsel %vm1319, %v1414, 0.0
      %v1469 = vadd.f32 %v1467, %v1468
      %v1470 = vsel %vm1319, %v1415, 0.0
      %v1471 = vadd.f32 %v1469, %v1470
      %v1472 = vsel %vm1319, %v1416, 0.0
      %v1473 = vadd.f32 %v1471, %v1472
      %v1474 = vsel %vm1319, %v1417, 0.0
      %v1475 = vadd.f32 %v1473, %v1474
      %v1476 = vsel %vm1319, %v1418, 0.0
      %v1477 = vadd.f32 %v1475, %v1476
      %v1478 = vsel %vm1319, %v1419, 0.0
      %v1479 = vadd.f32 %v1477, %v1478
      %v1480 = vsel %vm1319, %v1420, 0.0
      %v1481 = vadd.f32 %v1479, %v1480
      %v1482 = vsel %vm1319, %v1421, 0.0
      %v1483 = vadd.f32 %v1481, %v1482
      %v1484 = vsel %vm1319, %v1422, 0.0
      %v1485 = vadd.f32 %v1483, %v1484
      %v1486 = vrot.slane %v1485, 4
      %v1487 = vadd.f32 %v1485, %v1486
      %v1488 = vrot.slane %v1487, 2
      %v1489 = vadd.f32 %v1487, %v1488
      %v1490 = vrot.slane %v1489, 1
      %v1491 = vadd.f32 %v1489, %v1490
      %1492 = vst.msk [vmem:[%s268] sm:$0x1] %vm1389, %v1491
      %p1493 = scmp.lt.s32.totalorder %s18, 1
      %s1494 = scalar_select %p1493, %s18, 1
      %s1495 = smul.addr %s1494, 32
      %s1496 = smul.addr %s1495, 4
      %s1497 = scalar_lea.vmem %s4, %s1496
      %p1498 = scmp.lt.s32.totalorder %s18, 1
      %s1499 = scalar_select %p1498, %s18, 1
      %s1500 = scalar_lea.vmem %s5, %s1499
      %p1501 = scmp.lt.s32.totalorder %s18, 1
      %s1502 = scalar_select %p1501, %s18, 1
      %s1503 = scalar_lea.vmem %s6, %s1502
      // Predicated region
      $region37: #{upsampling_sequence_forward.2} parent=35 // pred_check
        %p1504 = pneg %p125
      $region38: #{upsampling_sequence_forward.2} parent=35 // pred_check_branch
        %1506 = sbr.rel (%p1504) target = $region40
      $region39: #{upsampling_sequence_forward.2} parent=35 // pred_region
        _
      $region40: #{upsampling_sequence_forward.2} parent=35 // pred_fallthru
        _
      // Predicated region
      $region41: #{upsampling_sequence_forward.2} parent=35 // pred_check
        %p1507 = pneg %p151
      $region42: #{upsampling_sequence_forward.2} parent=35 // pred_check_branch
        %1509 = sbr.rel (%p1507) target = $region44
      $region43: #{upsampling_sequence_forward.2} parent=35 // pred_region
        _
      $region44: #{upsampling_sequence_forward.2} parent=35 // pred_fallthru
        _
      // Predicated region
      $region45: #{upsampling_sequence_forward.2} parent=35 // pred_check
        %p1510 = pneg %p177
      $region46: #{upsampling_sequence_forward.2} parent=35 // pred_check_branch
        %1512 = sbr.rel (%p1510) target = $region48
      $region47: #{upsampling_sequence_forward.2} parent=35 // pred_region
        _
      $region48: #{upsampling_sequence_forward.2} parent=35 // pred_fallthru
        _
    $region36: #{upsampling_sequence_forward.2} parent=5 // pred_fallthru
      _
    %p1513 = scmp.le.s32.totalorder 2, %s13
    // Predicated region
    $region49: #{upsampling_sequence_forward.2} parent=5 // pred_check
      %p1514 = pneg %p1513
    $region50: #{upsampling_sequence_forward.2} parent=5 // pred_check_branch
      %1516 = sbr.rel (%p1514) target = $region52
    $region51: #{upsampling_sequence_forward.2} parent=5 // pred_region
      %s1517 = ssub.s32 %s13, 2
      // Predicated region
      $region53: #{upsampling_sequence_forward.2} parent=51 // pred_check
        %p1518 = pneg %p131
      $region54: #{upsampling_sequence_forward.2} parent=51 // pred_check_branch
        %1520 = sbr.rel (%p1518) target = $region56
      $region55: #{upsampling_sequence_forward.2} parent=51 // pred_region
        %p1521 = scmp.lt.s32.totalorder %s19, 1
        %s1522 = scalar_select %p1521, %s19, 1
        %s1523 = smul.addr %s1522, 32
        %s1524 = smul.addr %s1523, 4
        %s1525 = scalar_lea.vmem %s4, %s1524
      $region56: #{upsampling_sequence_forward.2} parent=51 // pred_fallthru
        _
      // Predicated region
      $region57: #{upsampling_sequence_forward.2} parent=51 // pred_check
        %p1526 = pneg %p157
      $region58: #{upsampling_sequence_forward.2} parent=51 // pred_check_branch
        %1528 = sbr.rel (%p1526) target = $region60
      $region59: #{upsampling_sequence_forward.2} parent=51 // pred_region
        %p1529 = scmp.lt.s32.totalorder %s19, 1
        %s1530 = scalar_select %p1529, %s19, 1
        %s1531 = scalar_lea.vmem %s5, %s1530
      $region60: #{upsampling_sequence_forward.2} parent=51 // pred_fallthru
        _
      // Predicated region
      $region61: #{upsampling_sequence_forward.2} parent=51 // pred_check
        %p1532 = pneg %p183
      $region62: #{upsampling_sequence_forward.2} parent=51 // pred_check_branch
        %1534 = sbr.rel (%p1532) target = $region64
      $region63: #{upsampling_sequence_forward.2} parent=51 // pred_region
        %p1535 = scmp.lt.s32.totalorder %s19, 1
        %s1536 = scalar_select %p1535, %s19, 1
        %s1537 = scalar_lea.vmem %s6, %s1536
      $region64: #{upsampling_sequence_forward.2} parent=51 // pred_fallthru
        _
    $region52: #{upsampling_sequence_forward.2} parent=5 // pred_fallthru
      _
  $region6: #{upsampling_sequence_forward.2} parent=0 // loop_footer
    %s17 = sadd.s32 1, %s13
  $region7: #{upsampling_sequence_forward.2} parent=0 // loop_footer_branch
    %12 = sbr.rel target = $region3
  $region8: #{upsampling_sequence_forward.2} parent=0 // loop_exit
    _

// kernel: upsampling_sequence_forward.3
$region0: #{upsampling_sequence_forward.3}
  #allocation0 [shape = 'u32[]', space=smem, size = 0x4, offset = 0x4, fixed_abs, tag = 'smem constant byte address 0x4 - core index']
  #allocation1 [shape = 'u32[72,128]{1,0:T(1,128)}', space=vmem, size = 0x9000, scoped, tag = 'internal scratch']
  #allocation2 [shape = 'f32[18,18,32]{2,1,0:T(8,128)}', space=vmem, size = 0x36000, scoped, tag = 'scratch operand']
  %s0 = inlined_call_operand.vmem [shape: bf16[2,16,16,32], index: 0, kind: input, shape index: {}]
  %s1 = inlined_call_operand.vmem [shape: f32[1,1,32], index: 1, kind: input, shape index: {}]
  %s2 = inlined_call_operand.vmem [shape: f32[1,1,32], index: 2, kind: input, shape index: {}]
  %s3 = inlined_call_operand.vmem [shape: bf16[9,32,32], index: 3, kind: input, shape index: {}]
  %s4 = inlined_call_operand.vmem [shape: f32[2,16,16,32], index: 4, kind: output, shape index: {}]
  %s5 = sld [smem:[#allocation0]]
  $region49: #{upsampling_sequence_forward.3} parent=0
    _
  %s7 = ssub.s32 1, %s5
  %s8 = scalar_select 0, %s7, %s5
  loop: start=0, step=1, limit=4
  $region2: #{upsampling_sequence_forward.3} parent=0 // loop_pre_header
    _
  $region3: #{upsampling_sequence_forward.3} parent=0 // loop_header
    %s10 = sphi 0, %s14
    %p11 = scmp.ge.s32.totalorder %s10, 4
    %s20 = sphi 0, %s22
    %s23 = sphi 0, %s20
    %s24 = sphi 0, %s23
    %s40 = sphi 0, %s24
    %s44 = sphi 0, %s44
    %s46 = sphi 0, %s44
    %s47 = sphi 0, %s46
    %s61 = sphi 0, %s47
    %s65 = sphi 0, %s65
    %s67 = sphi 0, %s65
    %s68 = sphi 0, %s67
    %s82 = sphi 0, %s68
    %s86 = sphi 0, %s86
    %s88 = sphi 0, %s86
    %s89 = sphi 0, %s88
    %s103 = sphi 0, %s89
    %s109 = sphi 0, %s111
    %s112 = sphi 0, %s109
    %s113 = sphi 0, %s112
    %s129 = sphi 0, %s113
  $region4: #{upsampling_sequence_forward.3} parent=0 // loop_header_branch
    %13 = sbr.rel (%p11) target = $region8
  $region5: #{upsampling_sequence_forward.3} parent=0 // loop_body
    %s15 = ssub.s32 %s10, 1
    %s16 = ssub.s32 %s10, 2
    %s17 = sadd.s32 %s10, 1
    %s18 = ssub.s32 %s10, %s17
    %p19 = scmp.eq.s32.totalorder %s18, 0
    %s21 = sadd.s32 %s20, 1
    %s22 = scalar_select %p19, %s20, %s21
    %p25 = pneg %p19
    %p26 = scmp.eq.s32.totalorder %s10, 1
    %p27 = por %p25, %p26
    %p28 = scmp.ne.s32.totalorder %s20, %s23
    %p29 = scmp.eq.s32.totalorder %s10, 0
    %p30 = por %p28, %p29
    %p31 = scmp.ne.s32.totalorder %s20, %s23
    %p32 = scmp.eq.s32.totalorder %s15, 1
    %p33 = por %p31, %p32
    %p34 = scmp.ne.s32.totalorder %s23, %s24
    %p35 = scmp.eq.s32.totalorder %s15, 0
    %p36 = por %p34, %p35
    %p37 = scmp.ne.s32.totalorder %s23, %s24
    %p38 = scmp.eq.s32.totalorder %s16, 1
    %p39 = por %p37, %p38
    %p41 = scmp.ne.s32.totalorder %s24, %s40
    %p42 = scmp.eq.s32.totalorder %s16, 0
    %p43 = por %p41, %p42
    %s45 = sadd.s32 %s44, 1
    %p48 = scmp.eq.s32.totalorder %s10, 1
    %p49 = scmp.ne.s32.totalorder %s44, %s46
    %p50 = scmp.eq.s32.totalorder %s10, 0
    %p51 = por %p49, %p50
    %p52 = scmp.ne.s32.totalorder %s44, %s46
    %p53 = scmp.eq.s32.totalorder %s15, 1
    %p54 = por %p52, %p53
    %p55 = scmp.ne.s32.totalorder %s46, %s47
    %p56 = scmp.eq.s32.totalorder %s15, 0
    %p57 = por %p55, %p56
    %p58 = scmp.ne.s32.totalorder %s46, %s47
    %p59 = scmp.eq.s32.totalorder %s16, 1
    %p60 = por %p58, %p59
    %p62 = scmp.ne.s32.totalorder %s47, %s61
    %p63 = scmp.eq.s32.totalorder %s16, 0
    %p64 = por %p62, %p63
    %s66 = sadd.s32 %s65, 1
    %p69 = scmp.eq.s32.totalorder %s10, 1
    %p70 = scmp.ne.s32.totalorder %s65, %s67
    %p71 = scmp.eq.s32.totalorder %s10, 0
    %p72 = por %p70, %p71
    %p73 = scmp.ne.s32.totalorder %s65, %s67
    %p74 = scmp.eq.s32.totalorder %s15, 1
    %p75 = por %p73, %p74
    %p76 = scmp.ne.s32.totalorder %s67, %s68
    %p77 = scmp.eq.s32.totalorder %s15, 0
    %p78 = por %p76, %p77
    %p79 = scmp.ne.s32.totalorder %s67, %s68
    %p80 = scmp.eq.s32.totalorder %s16, 1
    %p81 = por %p79, %p80
    %p83 = scmp.ne.s32.totalorder %s68, %s82
    %p84 = scmp.eq.s32.totalorder %s16, 0
    %p85 = por %p83, %p84
    %s87 = sadd.s32 %s86, 1
    %p90 = scmp.eq.s32.totalorder %s10, 1
    %p91 = scmp.ne.s32.totalorder %s86, %s88
    %p92 = scmp.eq.s32.totalorder %s10, 0
    %p93 = por %p91, %p92
    %p94 = scmp.ne.s32.totalorder %s86, %s88
    %p95 = scmp.eq.s32.totalorder %s15, 1
    %p96 = por %p94, %p95
    %p97 = scmp.ne.s32.totalorder %s88, %s89
    %p98 = scmp.eq.s32.totalorder %s15, 0
    %p99 = por %p97, %p98
    %p100 = scmp.ne.s32.totalorder %s88, %s89
    %p101 = scmp.eq.s32.totalorder %s16, 1
    %p102 = por %p100, %p101
    %p104 = scmp.ne.s32.totalorder %s89, %s103
    %p105 = scmp.eq.s32.totalorder %s16, 0
    %p106 = por %p104, %p105
    %s107 = ssub.s32 %s10, %s17
    %p108 = scmp.eq.s32.totalorder %s107, 0
    %s110 = sadd.s32 %s109, 1
    %s111 = scalar_select %p108, %s109, %s110
    %p114 = pneg %p108
    %p115 = scmp.eq.s32.totalorder %s10, 1
    %p116 = por %p114, %p115
    %p117 = scmp.ne.s32.totalorder %s109, %s112
    %p118 = scmp.eq.s32.totalorder %s10, 0
    %p119 = por %p117, %p118
    %p120 = scmp.ne.s32.totalorder %s109, %s112
    %p121 = scmp.eq.s32.totalorder %s15, 1
    %p122 = por %p120, %p121
    %p123 = scmp.ne.s32.totalorder %s112, %s113
    %p124 = scmp.eq.s32.totalorder %s15, 0
    %p125 = por %p123, %p124
    %p126 = scmp.ne.s32.totalorder %s112, %s113
    %p127 = scmp.eq.s32.totalorder %s16, 1
    %p128 = por %p126, %p127
    %p130 = scmp.ne.s32.totalorder %s113, %s129
    %p131 = scmp.eq.s32.totalorder %s16, 0
    %p132 = por %p130, %p131
    %p133 = scmp.le.s32.totalorder 1, %s10
    %p134 = scmp.lt.s32.totalorder %s10, 3
    %p135 = pnand %p133, %p134
    %p136 = pneg %p135
    // Predicated region
    $region9: #{upsampling_sequence_forward.3} parent=5 // pred_check
      _
    $region10: #{upsampling_sequence_forward.3} parent=5 // pred_check_branch
      %138 = sbr.rel (%p135) target = $region12
    $region11: #{upsampling_sequence_forward.3} parent=5 // pred_region
      %s139 = ssub.s32 %s10, 1
      // Predicated region
      $region13: #{upsampling_sequence_forward.3} parent=11 // pred_check
        %p140 = pneg %p57
      $region14: #{upsampling_sequence_forward.3} parent=11 // pred_check_branch
        %142 = sbr.rel (%p140) target = $region16
      $region15: #{upsampling_sequence_forward.3} parent=11 // pred_region
        _
      $region16: #{upsampling_sequence_forward.3} parent=11 // pred_fallthru
        _
      // Predicated region
      $region17: #{upsampling_sequence_forward.3} parent=11 // pred_check
        %p143 = pneg %p78
      $region18: #{upsampling_sequence_forward.3} parent=11 // pred_check_branch
        %145 = sbr.rel (%p143) target = $region20
      $region19: #{upsampling_sequence_forward.3} parent=11 // pred_region
        _
      $region20: #{upsampling_sequence_forward.3} parent=11 // pred_fallthru
        _
      // Predicated region
      $region21: #{upsampling_sequence_forward.3} parent=11 // pred_check
        %p146 = pneg %p99
      $region22: #{upsampling_sequence_forward.3} parent=11 // pred_check_branch
        %148 = sbr.rel (%p146) target = $region24
      $region23: #{upsampling_sequence_forward.3} parent=11 // pred_region
        _
      $region24: #{upsampling_sequence_forward.3} parent=11 // pred_fallthru
        _
    $region12: #{upsampling_sequence_forward.3} parent=5 // pred_fallthru
      _
    %p149 = scmp.lt.s32.totalorder %s10, 2
    // Predicated region
    $region25: #{upsampling_sequence_forward.3} parent=5 // pred_check
      %p150 = pneg %p149
    $region26: #{upsampling_sequence_forward.3} parent=5 // pred_check_branch
      %152 = sbr.rel (%p150) target = $region28
    $region27: #{upsampling_sequence_forward.3} parent=5 // pred_region
      // Predicated region
      $region29: #{upsampling_sequence_forward.3} parent=27 // pred_check
        %p153 = pneg %p30
      $region30: #{upsampling_sequence_forward.3} parent=27 // pred_check_branch
        %155 = sbr.rel (%p153) target = $region32
      $region31: #{upsampling_sequence_forward.3} parent=27 // pred_region
        %p156 = scmp.lt.s32.totalorder %s10, 1
        %s157 = scalar_select %p156, %s10, 1
        %s158 = smul.addr %s157, 32
        %s159 = smul.addr %s158, 4
        %s160 = scalar_lea.vmem %s0, %s159
      $region32: #{upsampling_sequence_forward.3} parent=27 // pred_fallthru
        _
    $region28: #{upsampling_sequence_forward.3} parent=5 // pred_fallthru
      _
    %p161 = scmp.le.s32.totalorder 1, %s10
    %p162 = scmp.lt.s32.totalorder %s10, 3
    %p163 = pnand %p161, %p162
    %p164 = pneg %p163
    // Predicated region
    $region33: #{upsampling_sequence_forward.3} parent=5 // pred_check
      _
    $region34: #{upsampling_sequence_forward.3} parent=5 // pred_check_branch
      %166 = sbr.rel (%p163) target = $region36
    $region35: #{upsampling_sequence_forward.3} parent=5 // pred_region
      %s167 = ssub.s32 %s10, 1
      %p168 = scmp.lt.s32.totalorder %s15, 1
      %s169 = scalar_select %p168, %s15, 1
      %s170 = smul.addr %s169, 32
      %s171 = smul.addr %s170, 4
      %s172 = scalar_lea.vmem %s0, %s171
      %p173 = pneg %p36
      %p174 = pneg %p33
      %p175 = pneg %p57
      %p176 = pneg %p54
      %p177 = pneg %p78
      %p178 = pneg %p75
      %p179 = pneg %p99
      %p180 = pneg %p96
      %p181 = pneg %p125
      %p182 = pneg %p122
      %p183 = scmp.lt.s32.totalorder %s15, 1
      %s184 = scalar_select %p183, %s15, 1
      %s185 = smul.addr %s184, 32
      %s186 = smul.addr %s185, 8
      %s187 = scalar_lea.vmem %s4, %s186
      %p188 = scmp.lt.s32.totalorder %s15, 1
      %s189 = scalar_select %p188, %s15, 1
      %s190 = smul.addr %s189, 32
      %s191 = smul.addr %s190, 4
      %s192 = scalar_lea.vmem %s0, %s191
      %p193 = scmp.lt.s32.totalorder %s15, 1
      %s194 = scalar_select %p193, %s15, 1
      %s195 = smul.addr %s194, 32
      %s196 = smul.addr %s195, 8
      %s197 = scalar_lea.vmem %s4, %s196
      %v199 = vld [vmem:[%s192] sm:$0xf]
      %v200 = vld [vmem:[%s192 + $0x4] sm:$0xf]
      %v201 = vld [vmem:[%s192 + $0x8] sm:$0xf]
      %v202 = vld [vmem:[%s192 + $0xc] sm:$0xf]
      %v203 = vld [vmem:[%s192 + $0x10] sm:$0xf]
      %v204 = vld [vmem:[%s192 + $0x14] sm:$0xf]
      %v205 = vld [vmem:[%s192 + $0x18] sm:$0xf]
      %v206 = vld [vmem:[%s192 + $0x1c] sm:$0xf]
      %v207 = vld [vmem:[%s192 + $0x20] sm:$0xf]
      %v208 = vld [vmem:[%s192 + $0x24] sm:$0xf]
      %v209 = vld [vmem:[%s192 + $0x28] sm:$0xf]
      %v210 = vld [vmem:[%s192 + $0x2c] sm:$0xf]
      %v211 = vld [vmem:[%s192 + $0x30] sm:$0xf]
      %v212 = vld [vmem:[%s192 + $0x34] sm:$0xf]
      %v213 = vld [vmem:[%s192 + $0x38] sm:$0xf]
      %v214 = vld [vmem:[%s192 + $0x3c] sm:$0xf]
      %v215 = vld [vmem:[%s192 + $0x40] sm:$0xf]
      %v216 = vld [vmem:[%s192 + $0x44] sm:$0xf]
      %v217 = vld [vmem:[%s192 + $0x48] sm:$0xf]
      %v218 = vld [vmem:[%s192 + $0x4c] sm:$0xf]
      %v219 = vld [vmem:[%s192 + $0x50] sm:$0xf]
      %v220 = vld [vmem:[%s192 + $0x54] sm:$0xf]
      %v221 = vld [vmem:[%s192 + $0x58] sm:$0xf]
      %v222 = vld [vmem:[%s192 + $0x5c] sm:$0xf]
      %v223 = vld [vmem:[%s192 + $0x60] sm:$0xf]
      %v224 = vld [vmem:[%s192 + $0x64] sm:$0xf]
      %v225 = vld [vmem:[%s192 + $0x68] sm:$0xf]
      %v226 = vld [vmem:[%s192 + $0x6c] sm:$0xf]
      %v227 = vld [vmem:[%s192 + $0x70] sm:$0xf]
      %v228 = vld [vmem:[%s192 + $0x74] sm:$0xf]
      %v229 = vld [vmem:[%s192 + $0x78] sm:$0xf]
      %v230 = vld [vmem:[%s192 + $0x7c] sm:$0xf]
      %v231 = vunpack.c.l.bf16 %v199
      %v232 = vunpack.c.l.bf16 %v200
      %v233 = vunpack.c.l.bf16 %v201
      %v234 = vunpack.c.l.bf16 %v202
      %v235 = vunpack.c.l.bf16 %v203
      %v236 = vunpack.c.l.bf16 %v204
      %v237 = vunpack.c.l.bf16 %v205
      %v238 = vunpack.c.l.bf16 %v206
      %v239 = vunpack.c.l.bf16 %v207
      %v240 = vunpack.c.l.bf16 %v208
      %v241 = vunpack.c.l.bf16 %v209
      %v242 = vunpack.c.l.bf16 %v210
      %v243 = vunpack.c.l.bf16 %v211
      %v244 = vunpack.c.l.bf16 %v212
      %v245 = vunpack.c.l.bf16 %v213
      %v246 = vunpack.c.l.bf16 %v214
      %v247 = vunpack.c.l.bf16 %v215
      %v248 = vunpack.c.l.bf16 %v216
      %v249 = vunpack.c.l.bf16 %v217
      %v250 = vunpack.c.l.bf16 %v218
      %v251 = vunpack.c.l.bf16 %v219
      %v252 = vunpack.c.l.bf16 %v220
      %v253 = vunpack.c.l.bf16 %v221
      %v254 = vunpack.c.l.bf16 %v222
      %v255 = vunpack.c.l.bf16 %v223
      %v256 = vunpack.c.l.bf16 %v224
      %v257 = vunpack.c.l.bf16 %v225
      %v258 = vunpack.c.l.bf16 %v226
      %v259 = vunpack.c.l.bf16 %v227
      %v260 = vunpack.c.l.bf16 %v228
      %v261 = vunpack.c.l.bf16 %v229
      %v262 = vunpack.c.l.bf16 %v230
      %v263 = vld [vmem:[%s1] sm:$0x1]
      %v265 = vperm.slane %v263, 0
      %v267 = vmul.f32 %v231, %v265
      %v268 = vmul.f32 %v232, %v265
      %v269 = vmul.f32 %v233, %v265
      %v270 = vmul.f32 %v234, %v265
      %v271 = vmul.f32 %v235, %v265
      %v272 = vmul.f32 %v236, %v265
      %v273 = vmul.f32 %v237, %v265
      %v274 = vmul.f32 %v238, %v265
      %v275 = vmul.f32 %v239, %v265
      %v276 = vmul.f32 %v240, %v265
      %v277 = vmul.f32 %v241, %v265
      %v278 = vmul.f32 %v242, %v265
      %v279 = vmul.f32 %v243, %v265
      %v280 = vmul.f32 %v244, %v265
      %v281 = vmul.f32 %v245, %v265
      %v282 = vmul.f32 %v246, %v265
      %v283 = vmul.f32 %v247, %v265
      %v284 = vmul.f32 %v248, %v265
      %v285 = vmul.f32 %v249, %v265
      %v286 = vmul.f32 %v250, %v265
      %v287 = vmul.f32 %v251, %v265
      %v288 = vmul.f32 %v252, %v265
      %v289 = vmul.f32 %v253, %v265
      %v290 = vmul.f32 %v254, %v265
      %v291 = vmul.f32 %v255, %v265
      %v292 = vmul.f32 %v256, %v265
      %v293 = vmul.f32 %v257, %v265
      %v294 = vmul.f32 %v258, %v265
      %v295 = vmul.f32 %v259, %v265
      %v296 = vmul.f32 %v260, %v265
      %v297 = vmul.f32 %v261, %v265
      %v298 = vmul.f32 %v262, %v265
      %v299 = vld [vmem:[%s2] sm:$0x1]
      %v301 = vperm.slane %v299, 0
      %v303 = vadd.f32 %v267, %v301
      %v304 = vadd.f32 %v268, %v301
      %v305 = vadd.f32 %v269, %v301
      %v306 = vadd.f32 %v270, %v301
      %v307 = vadd.f32 %v271, %v301
      %v308 = vadd.f32 %v272, %v301
      %v309 = vadd.f32 %v273, %v301
      %v310 = vadd.f32 %v274, %v301
      %v311 = vadd.f32 %v275, %v301
      %v312 = vadd.f32 %v276, %v301
      %v313 = vadd.f32 %v277, %v301
      %v314 = vadd.f32 %v278, %v301
      %v315 = vadd.f32 %v279, %v301
      %v316 = vadd.f32 %v280, %v301
      %v317 = vadd.f32 %v281, %v301
      %v318 = vadd.f32 %v282, %v301
      %v319 = vadd.f32 %v283, %v301
      %v320 = vadd.f32 %v284, %v301
      %v321 = vadd.f32 %v285, %v301
      %v322 = vadd.f32 %v286, %v301
      %v323 = vadd.f32 %v287, %v301
      %v324 = vadd.f32 %v288, %v301
      %v325 = vadd.f32 %v289, %v301
      %v326 = vadd.f32 %v290, %v301
      %v327 = vadd.f32 %v291, %v301
      %v328 = vadd.f32 %v292, %v301
      %v329 = vadd.f32 %v293, %v301
      %v330 = vadd.f32 %v294, %v301
      %v331 = vadd.f32 %v295, %v301
      %v332 = vadd.f32 %v296, %v301
      %v333 = vadd.f32 %v297, %v301
      %v334 = vadd.f32 %v298, %v301
      %v335 = vmax.f32 %v303, 0.0
      %v336 = vmax.f32 %v304, 0.0
      %v337 = vmax.f32 %v305, 0.0
      %v338 = vmax.f32 %v306, 0.0
      %v339 = vmax.f32 %v307, 0.0
      %v340 = vmax.f32 %v308, 0.0
      %v341 = vmax.f32 %v309, 0.0
      %v342 = vmax.f32 %v310, 0.0
      %v343 = vmax.f32 %v311, 0.0
      %v344 = vmax.f32 %v312, 0.0
      %v345 = vmax.f32 %v313, 0.0
      %v346 = vmax.f32 %v314, 0.0
      %v347 = vmax.f32 %v315, 0.0
      %v348 = vmax.f32 %v316, 0.0
      %v349 = vmax.f32 %v317, 0.0
      %v350 = vmax.f32 %v318, 0.0
      %v351 = vmax.f32 %v319, 0.0
      %v352 = vmax.f32 %v320, 0.0
      %v353 = vmax.f32 %v321, 0.0
      %v354 = vmax.f32 %v322, 0.0
      %v355 = vmax.f32 %v323, 0.0
      %v356 = vmax.f32 %v324, 0.0
      %v357 = vmax.f32 %v325, 0.0
      %v358 = vmax.f32 %v326, 0.0
      %v359 = vmax.f32 %v327, 0.0
      %v360 = vmax.f32 %v328, 0.0
      %v361 = vmax.f32 %v329, 0.0
      %v362 = vmax.f32 %v330, 0.0
      %v363 = vmax.f32 %v331, 0.0
      %v364 = vmax.f32 %v332, 0.0
      %v365 = vmax.f32 %v333, 0.0
      %v366 = vmax.f32 %v334, 0.0
      %vm367 = vcmask 261120
      %368 = vst.msk [vmem:[#allocation2] sm:$0xff] %vm367, 0.0
      %369 = vst.msk [vmem:[#allocation2 + $0x8] sm:$0xff] %vm367, 0.0
      %vm370 = vcmask 254976
      %371 = vst.msk [vmem:[#allocation2 + $0x10] sm:$0x3] %vm370, 0.0
      %s372 = scalar_lea.vmem [#allocation2], 408
      %373 = vst.msk [vmem:[%s372] sm:$0xff] %vm367, 0.0
      %374 = vst.msk [vmem:[%s372 + $0x8] sm:$0xff] %vm367, 0.0
      %375 = vst.msk [vmem:[%s372 + $0x10] sm:$0x3] %vm370, 0.0
      %vm376 = vcmask 253952
      %377 = vst.msk [vmem:[#allocation2] sm:$0x1] %vm376, 0.0
      %378 = vst.msk [vmem:[#allocation2 + $0x18] sm:$0x1] %vm376, 0.0
      %379 = vst.msk [vmem:[#allocation2 + $0x30] sm:$0x1] %vm376, 0.0
      %380 = vst.msk [vmem:[#allocation2 + $0x48] sm:$0x1] %vm376, 0.0
      %381 = vst.msk [vmem:[#allocation2 + $0x60] sm:$0x1] %vm376, 0.0
      %382 = vst.msk [vmem:[#allocation2 + $0x78] sm:$0x1] %vm376, 0.0
      %383 = vst.msk [vmem:[#allocation2 + $0x90] sm:$0x1] %vm376, 0.0
      %384 = vst.msk [vmem:[#allocation2 + $0xa8] sm:$0x1] %vm376, 0.0
      %385 = vst.msk [vmem:[#allocation2 + $0xc0] sm:$0x1] %vm376, 0.0
      %386 = vst.msk [vmem:[#allocation2 + $0xd8] sm:$0x1] %vm376, 0.0
      %387 = vst.msk [vmem:[#allocation2 + $0xf0] sm:$0x1] %vm376, 0.0
      %388 = vst.msk [vmem:[#allocation2 + $0x108] sm:$0x1] %vm376, 0.0
      %389 = vst.msk [vmem:[#allocation2 + $0x120] sm:$0x1] %vm376, 0.0
      %390 = vst.msk [vmem:[#allocation2 + $0x138] sm:$0x1] %vm376, 0.0
      %391 = vst.msk [vmem:[#allocation2 + $0x150] sm:$0x1] %vm376, 0.0
      %392 = vst.msk [vmem:[#allocation2 + $0x168] sm:$0x1] %vm376, 0.0
      %393 = vst.msk [vmem:[#allocation2 + $0x180] sm:$0x1] %vm376, 0.0
      %394 = vst.msk [vmem:[#allocation2 + $0x198] sm:$0x1] %vm376, 0.0
      %395 = vst.msk [vmem:[#allocation2 + $0x11] sm:$0x1] %vm376, 0.0
      %396 = vst.msk [vmem:[#allocation2 + $0x29] sm:$0x1] %vm376, 0.0
      %397 = vst.msk [vmem:[#allocation2 + $0x41] sm:$0x1] %vm376, 0.0
      %398 = vst.msk [vmem:[#allocation2 + $0x59] sm:$0x1] %vm376, 0.0
      %399 = vst.msk [vmem:[#allocation2 + $0x71] sm:$0x1] %vm376, 0.0
      %400 = vst.msk [vmem:[#allocation2 + $0x89] sm:$0x1] %vm376, 0.0
      %401 = vst.msk [vmem:[#allocation2 + $0xa1] sm:$0x1] %vm376, 0.0
      %402 = vst.msk [vmem:[#allocation2 + $0xb9] sm:$0x1] %vm376, 0.0
      %403 = vst.msk [vmem:[#allocation2 + $0xd1] sm:$0x1] %vm376, 0.0
      %404 = vst.msk [vmem:[#allocation2 + $0xe9] sm:$0x1] %vm376, 0.0
      %405 = vst.msk [vmem:[#allocation2 + $0x101] sm:$0x1] %vm376, 0.0
      %406 = vst.msk [vmem:[#allocation2 + $0x119] sm:$0x1] %vm376, 0.0
      %407 = vst.msk [vmem:[#allocation2 + $0x131] sm:$0x1] %vm376, 0.0
      %408 = vst.msk [vmem:[#allocation2 + $0x149] sm:$0x1] %vm376, 0.0
      %409 = vst.msk [vmem:[#allocation2 + $0x161] sm:$0x1] %vm376, 0.0
      %410 = vst.msk [vmem:[#allocation2 + $0x179] sm:$0x1] %vm376, 0.0
      %411 = vst.msk [vmem:[#allocation2 + $0x191] sm:$0x1] %vm376, 0.0
      %412 = vst.msk [vmem:[#allocation2 + $0x1a9] sm:$0x1] %vm376, 0.0
      %s413 = scalar_lea.vmem [#allocation2], 24
      %414 = vst.msk [vmem:[%s413 + $0x1] sm:$0xff] %vm367, %v335
      %415 = vst.msk [vmem:[%s413 + $0x9] sm:$0xff] %vm367, %v336
      %416 = vst.msk [vmem:[%s413 + $0x19] sm:$0xff] %vm367, %v337
      %417 = vst.msk [vmem:[%s413 + $0x21] sm:$0xff] %vm367, %v338
      %418 = vst.msk [vmem:[%s413 + $0x31] sm:$0xff] %vm367, %v339
      %419 = vst.msk [vmem:[%s413 + $0x39] sm:$0xff] %vm367, %v340
      %420 = vst.msk [vmem:[%s413 + $0x49] sm:$0xff] %vm367, %v341
      %421 = vst.msk [vmem:[%s413 + $0x51] sm:$0xff] %vm367, %v342
      %422 = vst.msk [vmem:[%s413 + $0x61] sm:$0xff] %vm367, %v343
      %423 = vst.msk [vmem:[%s413 + $0x69] sm:$0xff] %vm367, %v344
      %424 = vst.msk [vmem:[%s413 + $0x79] sm:$0xff] %vm367, %v345
      %425 = vst.msk [vmem:[%s413 + $0x81] sm:$0xff] %vm367, %v346
      %426 = vst.msk [vmem:[%s413 + $0x91] sm:$0xff] %vm367, %v347
      %427 = vst.msk [vmem:[%s413 + $0x99] sm:$0xff] %vm367, %v348
      %428 = vst.msk [vmem:[%s413 + $0xa9] sm:$0xff] %vm367, %v349
      %429 = vst.msk [vmem:[%s413 + $0xb1] sm:$0xff] %vm367, %v350
      %430 = vst.msk [vmem:[%s413 + $0xc1] sm:$0xff] %vm367, %v351
      %431 = vst.msk [vmem:[%s413 + $0xc9] sm:$0xff] %vm367, %v352
      %432 = vst.msk [vmem:[%s413 + $0xd9] sm:$0xff] %vm367, %v353
      %433 = vst.msk [vmem:[%s413 + $0xe1] sm:$0xff] %vm367, %v354
      %434 = vst.msk [vmem:[%s413 + $0xf1] sm:$0xff] %vm367, %v355
      %435 = vst.msk [vmem:[%s413 + $0xf9] sm:$0xff] %vm367, %v356
      %436 = vst.msk [vmem:[%s413 + $0x109] sm:$0xff] %vm367, %v357
      %437 = vst.msk [vmem:[%s413 + $0x111] sm:$0xff] %vm367, %v358
      %438 = vst.msk [vmem:[%s413 + $0x121] sm:$0xff] %vm367, %v359
      %439 = vst.msk [vmem:[%s413 + $0x129] sm:$0xff] %vm367, %v360
      %440 = vst.msk [vmem:[%s413 + $0x139] sm:$0xff] %vm367, %v361
      %441 = vst.msk [vmem:[%s413 + $0x141] sm:$0xff] %vm367, %v362
      %442 = vst.msk [vmem:[%s413 + $0x151] sm:$0xff] %vm367, %v363
      %443 = vst.msk [vmem:[%s413 + $0x159] sm:$0xff] %vm367, %v364
      %444 = vst.msk [vmem:[%s413 + $0x169] sm:$0xff] %vm367, %v365
      %445 = vst.msk [vmem:[%s413 + $0x171] sm:$0xff] %vm367, %v366
      %v446 = vld [vmem:[#allocation2] sm:$0xff]
      %v447 = vld [vmem:[#allocation2 + $0x8] sm:$0xff]
      %v448 = vld [vmem:[#allocation2 + $0x18] sm:$0xff]
      %v449 = vld [vmem:[#allocation2 + $0x20] sm:$0xff]
      %v450 = vld [vmem:[#allocation2 + $0x30] sm:$0xff]
      %v451 = vld [vmem:[#allocation2 + $0x38] sm:$0xff]
      %v452 = vld [vmem:[#allocation2 + $0x48] sm:$0xff]
      %v453 = vld [vmem:[#allocation2 + $0x50] sm:$0xff]
      %v454 = vld [vmem:[#allocation2 + $0x60] sm:$0xff]
      %v455 = vld [vmem:[#allocation2 + $0x68] sm:$0xff]
      %v456 = vld [vmem:[#allocation2 + $0x78] sm:$0xff]
      %v457 = vld [vmem:[#allocation2 + $0x80] sm:$0xff]
      %v458 = vld [vmem:[#allocation2 + $0x90] sm:$0xff]
      %v459 = vld [vmem:[#allocation2 + $0x98] sm:$0xff]
      %v460 = vld [vmem:[#allocation2 + $0xa8] sm:$0xff]
      %v461 = vld [vmem:[#allocation2 + $0xb0] sm:$0xff]
      %v462 = vld [vmem:[#allocation2 + $0xc0] sm:$0xff]
      %v463 = vld [vmem:[#allocation2 + $0xc8] sm:$0xff]
      %v464 = vld [vmem:[#allocation2 + $0xd8] sm:$0xff]
      %v465 = vld [vmem:[#allocation2 + $0xe0] sm:$0xff]
      %v466 = vld [vmem:[#allocation2 + $0xf0] sm:$0xff]
      %v467 = vld [vmem:[#allocation2 + $0xf8] sm:$0xff]
      %v468 = vld [vmem:[#allocation2 + $0x108] sm:$0xff]
      %v469 = vld [vmem:[#allocation2 + $0x110] sm:$0xff]
      %v470 = vld [vmem:[#allocation2 + $0x120] sm:$0xff]
      %v471 = vld [vmem:[#allocation2 + $0x128] sm:$0xff]
      %v472 = vld [vmem:[#allocation2 + $0x138] sm:$0xff]
      %v473 = vld [vmem:[#allocation2 + $0x140] sm:$0xff]
      %v474 = vld [vmem:[#allocation2 + $0x150] sm:$0xff]
      %v475 = vld [vmem:[#allocation2 + $0x158] sm:$0xff]
      %v476 = vld [vmem:[#allocation2 + $0x168] sm:$0xff]
      %v477 = vld [vmem:[#allocation2 + $0x170] sm:$0xff]
      %v478 = vpack.c.bf16 %v447, %v446
      %v479 = vpack.c.bf16 %v449, %v448
      %v480 = vpack.c.bf16 %v451, %v450
      %v481 = vpack.c.bf16 %v453, %v452
      %v482 = vpack.c.bf16 %v455, %v454
      %v483 = vpack.c.bf16 %v457, %v456
      %v484 = vpack.c.bf16 %v459, %v458
      %v485 = vpack.c.bf16 %v461, %v460
      %v486 = vpack.c.bf16 %v463, %v462
      %v487 = vpack.c.bf16 %v465, %v464
      %v488 = vpack.c.bf16 %v467, %v466
      %v489 = vpack.c.bf16 %v469, %v468
      %v490 = vpack.c.bf16 %v471, %v470
      %v491 = vpack.c.bf16 %v473, %v472
      %v492 = vpack.c.bf16 %v475, %v474
      %v493 = vpack.c.bf16 %v477, %v476
      %v494 = vld [vmem:[%s3] sm:$0xf]
      %v495 = vld [vmem:[%s3 + $0x4] sm:$0xf]
      %v496 = vld [vmem:[%s3 + $0x8] sm:$0xf]
      %v497 = vld [vmem:[%s3 + $0xc] sm:$0xf]
      %v498 = vld [vmem:[#allocation2 + $0x1] sm:$0xff]
      %v499 = vld [vmem:[#allocation2 + $0x9] sm:$0xff]
      %v500 = vld [vmem:[#allocation2 + $0x19] sm:$0xff]
      %v501 = vld [vmem:[#allocation2 + $0x21] sm:$0xff]
      %v502 = vld [vmem:[#allocation2 + $0x31] sm:$0xff]
      %v503 = vld [vmem:[#allocation2 + $0x39] sm:$0xff]
      %v504 = vld [vmem:[#allocation2 + $0x49] sm:$0xff]
      %v505 = vld [vmem:[#allocation2 + $0x51] sm:$0xff]
      %v506 = vld [vmem:[#allocation2 + $0x61] sm:$0xff]
      %v507 = vld [vmem:[#allocation2 + $0x69] sm:$0xff]
      %v508 = vld [vmem:[#allocation2 + $0x79] sm:$0xff]
      %v509 = vld [vmem:[#allocation2 + $0x81] sm:$0xff]
      %v510 = vld [vmem:[#allocation2 + $0x91] sm:$0xff]
      %v511 = vld [vmem:[#allocation2 + $0x99] sm:$0xff]
      %v512 = vld [vmem:[#allocation2 + $0xa9] sm:$0xff]
      %v513 = vld [vmem:[#allocation2 + $0xb1] sm:$0xff]
      %v514 = vld [vmem:[#allocation2 + $0xc1] sm:$0xff]
      %v515 = vld [vmem:[#allocation2 + $0xc9] sm:$0xff]
      %v516 = vld [vmem:[#allocation2 + $0xd9] sm:$0xff]
      %v517 = vld [vmem:[#allocation2 + $0xe1] sm:$0xff]
      %v518 = vld [vmem:[#allocation2 + $0xf1] sm:$0xff]
      %v519 = vld [vmem:[#allocation2 + $0xf9] sm:$0xff]
      %v520 = vld [vmem:[#allocation2 + $0x109] sm:$0xff]
      %v521 = vld [vmem:[#allocation2 + $0x111] sm:$0xff]
      %v522 = vld [vmem:[#allocation2 + $0x121] sm:$0xff]
      %v523 = vld [vmem:[#allocation2 + $0x129] sm:$0xff]
      %v524 = vld [vmem:[#allocation2 + $0x139] sm:$0xff]
      %v525 = vld [vmem:[#allocation2 + $0x141] sm:$0xff]
      %v526 = vld [vmem:[#allocation2 + $0x151] sm:$0xff]
      %v527 = vld [vmem:[#allocation2 + $0x159] sm:$0xff]
      %v528 = vld [vmem:[#allocation2 + $0x169] sm:$0xff]
      %v529 = vld [vmem:[#allocation2 + $0x171] sm:$0xff]
      %v530 = vpack.c.bf16 %v499, %v498
      %v531 = vpack.c.bf16 %v501, %v500
      %v532 = vpack.c.bf16 %v503, %v502
      %v533 = vpack.c.bf16 %v505, %v504
      %v534 = vpack.c.bf16 %v507, %v506
      %v535 = vpack.c.bf16 %v509, %v508
      %v536 = vpack.c.bf16 %v511, %v510
      %v537 = vpack.c.bf16 %v513, %v512
      %v538 = vpack.c.bf16 %v515, %v514
      %v539 = vpack.c.bf16 %v517, %v516
      %v540 = vpack.c.bf16 %v519, %v518
      %v541 = vpack.c.bf16 %v521, %v520
      %v542 = vpack.c.bf16 %v523, %v522
      %v543 = vpack.c.bf16 %v525, %v524
      %v544 = vpack.c.bf16 %v527, %v526
      %v545 = vpack.c.bf16 %v529, %v528
      %s546 = scalar_lea.vmem %s3, 16
      %v547 = vld [vmem:[%s546] sm:$0xf]
      %v548 = vld [vmem:[%s546 + $0x4] sm:$0xf]
      %v549 = vld [vmem:[%s546 + $0x8] sm:$0xf]
      %v550 = vld [vmem:[%s546 + $0xc] sm:$0xf]
      %v555 = vunpack.c.l.b16 %v547
      %v556 = vunpack.c.l.b16 %v548
      %v557 = vunpack.c.l.b16 %v549
      %v558 = vunpack.c.l.b16 %v550
      %v559 = vpack.c.b16 %v556, %v555
      %v560 = vpack.c.b16 %v558, %v557
      %v564 = vsel %vm367, %v530, 0
      %v567 = vsel %vm367, %v531, 0
      %v570 = vsel %vm367, %v532, 0
      %v573 = vsel %vm367, %v533, 0
      %v576 = vsel %vm367, %v534, 0
      %v579 = vsel %vm367, %v535, 0
      %v582 = vsel %vm367, %v536, 0
      %v585 = vsel %vm367, %v537, 0
      %v588 = vsel %vm367, %v538, 0
      %v591 = vsel %vm367, %v539, 0
      %v594 = vsel %vm367, %v540, 0
      %v597 = vsel %vm367, %v541, 0
      %v600 = vsel %vm367, %v542, 0
      %v603 = vsel %vm367, %v543, 0
      %v606 = vsel %vm367, %v544, 0
      %v609 = vsel %vm367, %v545, 0
      %611 = vmatpush.bf16.msra.mxu0 0
      %612 = vmatpush.bf16.msra.mxu0 0
      %613 = vmatpush.bf16.msra.mxu0 0
      %614 = vmatpush.bf16.msra.mxu0 0
      %615 = vmatpush.bf16.msra.mxu0 0
      %616 = vmatpush.bf16.msra.mxu0 0
      %617 = vmatpush.bf16.msra.mxu0 %v560
      %618 = vmatpush.bf16.msra.mxu0 %v559
      %619 = vmatmul.bf16.gmra.mxu0 %v564
      %v620 = vpop.f32.mrf.mxu0
      %v621 = vadd.f32 0.0, %v620
      %v622 = vpop.f32.mrf.mxu0
      %v623 = vadd.f32 0.0, %v622
      %624 = vmatmul.bf16.gmra.mxu0 %v567
      %v625 = vpop.f32.mrf.mxu0
      %v626 = vadd.f32 0.0, %v625
      %v627 = vpop.f32.mrf.mxu0
      %v628 = vadd.f32 0.0, %v627
      %629 = vmatmul.bf16.gmra.mxu0 %v570
      %v630 = vpop.f32.mrf.mxu0
      %v631 = vadd.f32 0.0, %v630
      %v632 = vpop.f32.mrf.mxu0
      %v633 = vadd.f32 0.0, %v632
      %634 = vmatmul.bf16.gmra.mxu0 %v573
      %v635 = vpop.f32.mrf.mxu0
      %v636 = vadd.f32 0.0, %v635
      %v637 = vpop.f32.mrf.mxu0
      %v638 = vadd.f32 0.0, %v637
      %639 = vmatmul.bf16.gmra.mxu0 %v576
      %v640 = vpop.f32.mrf.mxu0
      %v641 = vadd.f32 0.0, %v640
      %v642 = vpop.f32.mrf.mxu0
      %v643 = vadd.f32 0.0, %v642
      %644 = vmatmul.bf16.gmra.mxu0 %v579
      %v645 = vpop.f32.mrf.mxu0
      %v646 = vadd.f32 0.0, %v645
      %v647 = vpop.f32.mrf.mxu0
      %v648 = vadd.f32 0.0, %v647
      %649 = vmatmul.bf16.gmra.mxu0 %v582
      %v650 = vpop.f32.mrf.mxu0
      %v651 = vadd.f32 0.0, %v650
      %v652 = vpop.f32.mrf.mxu0
      %v653 = vadd.f32 0.0, %v652
      %654 = vmatmul.bf16.gmra.mxu0 %v585
      %v655 = vpop.f32.mrf.mxu0
      %v656 = vadd.f32 0.0, %v655
      %v657 = vpop.f32.mrf.mxu0
      %v658 = vadd.f32 0.0, %v657
      %659 = vmatmul.bf16.gmra.mxu0 %v588
      %v660 = vpop.f32.mrf.mxu0
      %v661 = vadd.f32 0.0, %v660
      %v662 = vpop.f32.mrf.mxu0
      %v663 = vadd.f32 0.0, %v662
      %664 = vmatmul.bf16.gmra.mxu0 %v591
      %v665 = vpop.f32.mrf.mxu0
      %v666 = vadd.f32 0.0, %v665
      %v667 = vpop.f32.mrf.mxu0
      %v668 = vadd.f32 0.0, %v667
      %669 = vmatmul.bf16.gmra.mxu0 %v594
      %v670 = vpop.f32.mrf.mxu0
      %v671 = vadd.f32 0.0, %v670
      %v672 = vpop.f32.mrf.mxu0
      %v673 = vadd.f32 0.0, %v672
      %674 = vmatmul.bf16.gmra.mxu0 %v597
      %v675 = vpop.f32.mrf.mxu0
      %v676 = vadd.f32 0.0, %v675
      %v677 = vpop.f32.mrf.mxu0
      %v678 = vadd.f32 0.0, %v677
      %679 = vmatmul.bf16.gmra.mxu0 %v600
      %v680 = vpop.f32.mrf.mxu0
      %v681 = vadd.f32 0.0, %v680
      %v682 = vpop.f32.mrf.mxu0
      %v683 = vadd.f32 0.0, %v682
      %684 = vmatmul.bf16.gmra.mxu0 %v603
      %v685 = vpop.f32.mrf.mxu0
      %v686 = vadd.f32 0.0, %v685
      %v687 = vpop.f32.mrf.mxu0
      %v688 = vadd.f32 0.0, %v687
      %689 = vmatmul.bf16.gmra.mxu0 %v606
      %v690 = vpop.f32.mrf.mxu0
      %v691 = vadd.f32 0.0, %v690
      %v692 = vpop.f32.mrf.mxu0
      %v693 = vadd.f32 0.0, %v692
      %694 = vmatmul.bf16.gmra.mxu0 %v609
      %v695 = vpop.f32.mrf.mxu0
      %v696 = vadd.f32 0.0, %v695
      %v697 = vpop.f32.mrf.mxu0
      %v698 = vadd.f32 0.0, %v697
      %699 = vdwg.mxu0
      %v704 = vunpack.c.l.b16 %v494
      %v705 = vunpack.c.l.b16 %v495
      %v706 = vunpack.c.l.b16 %v496
      %v707 = vunpack.c.l.b16 %v497
      %v708 = vpack.c.b16 %v705, %v704
      %v709 = vpack.c.b16 %v707, %v706
      %v713 = vsel %vm367, %v478, 0
      %v716 = vsel %vm367, %v479, 0
      %v719 = vsel %vm367, %v480, 0
      %v722 = vsel %vm367, %v481, 0
      %v725 = vsel %vm367, %v482, 0
      %v728 = vsel %vm367, %v483, 0
      %v731 = vsel %vm367, %v484, 0
      %v734 = vsel %vm367, %v485, 0
      %v737 = vsel %vm367, %v486, 0
      %v740 = vsel %vm367, %v487, 0
      %v743 = vsel %vm367, %v488, 0
      %v746 = vsel %vm367, %v489, 0
      %v749 = vsel %vm367, %v490, 0
      %v752 = vsel %vm367, %v491, 0
      %v755 = vsel %vm367, %v492, 0
      %v758 = vsel %vm367, %v493, 0
      %760 = vmatpush.bf16.msra.mxu0 0
      %761 = vmatpush.bf16.msra.mxu0 0
      %762 = vmatpush.bf16.msra.mxu0 0
      %763 = vmatpush.bf16.msra.mxu0 0
      %764 = vmatpush.bf16.msra.mxu0 0
      %765 = vmatpush.bf16.msra.mxu0 0
      %766 = vmatpush.bf16.msra.mxu0 %v709
      %767 = vmatpush.bf16.msra.mxu0 %v708
      %768 = vmatmul.bf16.gmra.mxu0 %v713
      %v769 = vpop.f32.mrf.mxu0
      %v770 = vadd.f32 %v621, %v769
      %v771 = vpop.f32.mrf.mxu0
      %v772 = vadd.f32 %v623, %v771
      %773 = vmatmul.bf16.gmra.mxu0 %v716
      %v774 = vpop.f32.mrf.mxu0
      %v775 = vadd.f32 %v626, %v774
      %v776 = vpop.f32.mrf.mxu0
      %v777 = vadd.f32 %v628, %v776
      %778 = vmatmul.bf16.gmra.mxu0 %v719
      %v779 = vpop.f32.mrf.mxu0
      %v780 = vadd.f32 %v631, %v779
      %v781 = vpop.f32.mrf.mxu0
      %v782 = vadd.f32 %v633, %v781
      %783 = vmatmul.bf16.gmra.mxu0 %v722
      %v784 = vpop.f32.mrf.mxu0
      %v785 = vadd.f32 %v636, %v784
      %v786 = vpop.f32.mrf.mxu0
      %v787 = vadd.f32 %v638, %v786
      %788 = vmatmul.bf16.gmra.mxu0 %v725
      %v789 = vpop.f32.mrf.mxu0
      %v790 = vadd.f32 %v641, %v789
      %v791 = vpop.f32.mrf.mxu0
      %v792 = vadd.f32 %v643, %v791
      %793 = vmatmul.bf16.gmra.mxu0 %v728
      %v794 = vpop.f32.mrf.mxu0
      %v795 = vadd.f32 %v646, %v794
      %v796 = vpop.f32.mrf.mxu0
      %v797 = vadd.f32 %v648, %v796
      %798 = vmatmul.bf16.gmra.mxu0 %v731
      %v799 = vpop.f32.mrf.mxu0
      %v800 = vadd.f32 %v651, %v799
      %v801 = vpop.f32.mrf.mxu0
      %v802 = vadd.f32 %v653, %v801
      %803 = vmatmul.bf16.gmra.mxu0 %v734
      %v804 = vpop.f32.mrf.mxu0
      %v805 = vadd.f32 %v656, %v804
      %v806 = vpop.f32.mrf.mxu0
      %v807 = vadd.f32 %v658, %v806
      %808 = vmatmul.bf16.gmra.mxu0 %v737
      %v809 = vpop.f32.mrf.mxu0
      %v810 = vadd.f32 %v661, %v809
      %v811 = vpop.f32.mrf.mxu0
      %v812 = vadd.f32 %v663, %v811
      %813 = vmatmul.bf16.gmra.mxu0 %v740
      %v814 = vpop.f32.mrf.mxu0
      %v815 = vadd.f32 %v666, %v814
      %v816 = vpop.f32.mrf.mxu0
      %v817 = vadd.f32 %v668, %v816
      %818 = vmatmul.bf16.gmra.mxu0 %v743
      %v819 = vpop.f32.mrf.mxu0
      %v820 = vadd.f32 %v671, %v819
      %v821 = vpop.f32.mrf.mxu0
      %v822 = vadd.f32 %v673, %v821
      %823 = vmatmul.bf16.gmra.mxu0 %v746
      %v824 = vpop.f32.mrf.mxu0
      %v825 = vadd.f32 %v676, %v824
      %v826 = vpop.f32.mrf.mxu0
      %v827 = vadd.f32 %v678, %v826
      %828 = vmatmul.bf16.gmra.mxu0 %v749
      %v829 = vpop.f32.mrf.mxu0
      %v830 = vadd.f32 %v681, %v829
      %v831 = vpop.f32.mrf.mxu0
      %v832 = vadd.f32 %v683, %v831
      %833 = vmatmul.bf16.gmra.mxu0 %v752
      %v834 = vpop.f32.mrf.mxu0
      %v835 = vadd.f32 %v686, %v834
      %v836 = vpop.f32.mrf.mxu0
      %v837 = vadd.f32 %v688, %v836
      %838 = vmatmul.bf16.gmra.mxu0 %v755
      %v839 = vpop.f32.mrf.mxu0
      %v840 = vadd.f32 %v691, %v839
      %v841 = vpop.f32.mrf.mxu0
      %v842 = vadd.f32 %v693, %v841
      %843 = vmatmul.bf16.gmra.mxu0 %v758
      %v844 = vpop.f32.mrf.mxu0
      %v845 = vadd.f32 %v696, %v844
      %v846 = vpop.f32.mrf.mxu0
      %v847 = vadd.f32 %v698, %v846
      %848 = vdwg.mxu0
      %v849 = vld [vmem:[#allocation2 + $0x2] sm:$0xff]
      %v850 = vld [vmem:[#allocation2 + $0xa] sm:$0xff]
      %v851 = vld [vmem:[#allocation2 + $0x1a] sm:$0xff]
      %v852 = vld [vmem:[#allocation2 + $0x22] sm:$0xff]
      %v853 = vld [vmem:[#allocation2 + $0x32] sm:$0xff]
      %v854 = vld [vmem:[#allocation2 + $0x3a] sm:$0xff]
      %v855 = vld [vmem:[#allocation2 + $0x4a] sm:$0xff]
      %v856 = vld [vmem:[#allocation2 + $0x52] sm:$0xff]
      %v857 = vld [vmem:[#allocation2 + $0x62] sm:$0xff]
      %v858 = vld [vmem:[#allocation2 + $0x6a] sm:$0xff]
      %v859 = vld [vmem:[#allocation2 + $0x7a] sm:$0xff]
      %v860 = vld [vmem:[#allocation2 + $0x82] sm:$0xff]
      %v861 = vld [vmem:[#allocation2 + $0x92] sm:$0xff]
      %v862 = vld [vmem:[#allocation2 + $0x9a] sm:$0xff]
      %v863 = vld [vmem:[#allocation2 + $0xaa] sm:$0xff]
      %v864 = vld [vmem:[#allocation2 + $0xb2] sm:$0xff]
      %v865 = vld [vmem:[#allocation2 + $0xc2] sm:$0xff]
      %v866 = vld [vmem:[#allocation2 + $0xca] sm:$0xff]
      %v867 = vld [vmem:[#allocation2 + $0xda] sm:$0xff]
      %v868 = vld [vmem:[#allocation2 + $0xe2] sm:$0xff]
      %v869 = vld [vmem:[#allocation2 + $0xf2] sm:$0xff]
      %v870 = vld [vmem:[#allocation2 + $0xfa] sm:$0xff]
      %v871 = vld [vmem:[#allocation2 + $0x10a] sm:$0xff]
      %v872 = vld [vmem:[#allocation2 + $0x112] sm:$0xff]
      %v873 = vld [vmem:[#allocation2 + $0x122] sm:$0xff]
      %v874 = vld [vmem:[#allocation2 + $0x12a] sm:$0xff]
      %v875 = vld [vmem:[#allocation2 + $0x13a] sm:$0xff]
      %v876 = vld [vmem:[#allocation2 + $0x142] sm:$0xff]
      %v877 = vld [vmem:[#allocation2 + $0x152] sm:$0xff]
      %v878 = vld [vmem:[#allocation2 + $0x15a] sm:$0xff]
      %v879 = vld [vmem:[#allocation2 + $0x16a] sm:$0xff]
      %v880 = vld [vmem:[#allocation2 + $0x172] sm:$0xff]
      %v881 = vpack.c.bf16 %v850, %v849
      %v882 = vpack.c.bf16 %v852, %v851
      %v883 = vpack.c.bf16 %v854, %v853
      %v884 = vpack.c.bf16 %v856, %v855
      %v885 = vpack.c.bf16 %v858, %v857
      %v886 = vpack.c.bf16 %v860, %v859
      %v887 = vpack.c.bf16 %v862, %v861
      %v888 = vpack.c.bf16 %v864, %v863
      %v889 = vpack.c.bf16 %v866, %v865
      %v890 = vpack.c.bf16 %v868, %v867
      %v891 = vpack.c.bf16 %v870, %v869
      %v892 = vpack.c.bf16 %v872, %v871
      %v893 = vpack.c.bf16 %v874, %v873
      %v894 = vpack.c.bf16 %v876, %v875
      %v895 = vpack.c.bf16 %v878, %v877
      %v896 = vpack.c.bf16 %v880, %v879
      %s897 = scalar_lea.vmem %s3, 32
      %v898 = vld [vmem:[%s897] sm:$0xf]
      %v899 = vld [vmem:[%s897 + $0x4] sm:$0xf]
      %v900 = vld [vmem:[%s897 + $0x8] sm:$0xf]
      %v901 = vld [vmem:[%s897 + $0xc] sm:$0xf]
      %v906 = vunpack.c.l.b16 %v898
      %v907 = vunpack.c.l.b16 %v899
      %v908 = vunpack.c.l.b16 %v900
      %v909 = vunpack.c.l.b16 %v901
      %v910 = vpack.c.b16 %v907, %v906
      %v911 = vpack.c.b16 %v909, %v908
      %v915 = vsel %vm367, %v881, 0
      %v918 = vsel %vm367, %v882, 0
      %v921 = vsel %vm367, %v883, 0
      %v924 = vsel %vm367, %v884, 0
      %v927 = vsel %vm367, %v885, 0
      %v930 = vsel %vm367, %v886, 0
      %v933 = vsel %vm367, %v887, 0
      %v936 = vsel %vm367, %v888, 0
      %v939 = vsel %vm367, %v889, 0
      %v942 = vsel %vm367, %v890, 0
      %v945 = vsel %vm367, %v891, 0
      %v948 = vsel %vm367, %v892, 0
      %v951 = vsel %vm367, %v893, 0
      %v954 = vsel %vm367, %v894, 0
      %v957 = vsel %vm367, %v895, 0
      %v960 = vsel %vm367, %v896, 0
      %962 = vmatpush.bf16.msra.mxu0 0
      %963 = vmatpush.bf16.msra.mxu0 0
      %964 = vmatpush.bf16.msra.mxu0 0
      %965 = vmatpush.bf16.msra.mxu0 0
      %966 = vmatpush.bf16.msra.mxu0 0
      %967 = vmatpush.bf16.msra.mxu0 0
      %968 = vmatpush.bf16.msra.mxu0 %v911
      %969 = vmatpush.bf16.msra.mxu0 %v910
      %970 = vmatmul.bf16.gmra.mxu0 %v915
      %v971 = vpop.f32.mrf.mxu0
      %v972 = vadd.f32 0.0, %v971
      %v973 = vpop.f32.mrf.mxu0
      %v974 = vadd.f32 0.0, %v973
      %975 = vmatmul.bf16.gmra.mxu0 %v918
      %v976 = vpop.f32.mrf.mxu0
      %v977 = vadd.f32 0.0, %v976
      %v978 = vpop.f32.mrf.mxu0
      %v979 = vadd.f32 0.0, %v978
      %980 = vmatmul.bf16.gmra.mxu0 %v921
      %v981 = vpop.f32.mrf.mxu0
      %v982 = vadd.f32 0.0, %v981
      %v983 = vpop.f32.mrf.mxu0
      %v984 = vadd.f32 0.0, %v983
      %985 = vmatmul.bf16.gmra.mxu0 %v924
      %v986 = vpop.f32.mrf.mxu0
      %v987 = vadd.f32 0.0, %v986
      %v988 = vpop.f32.mrf.mxu0
      %v989 = vadd.f32 0.0, %v988
      %990 = vmatmul.bf16.gmra.mxu0 %v927
      %v991 = vpop.f32.mrf.mxu0
      %v992 = vadd.f32 0.0, %v991
      %v993 = vpop.f32.mrf.mxu0
      %v994 = vadd.f32 0.0, %v993
      %995 = vmatmul.bf16.gmra.mxu0 %v930
      %v996 = vpop.f32.mrf.mxu0
      %v997 = vadd.f32 0.0, %v996
      %v998 = vpop.f32.mrf.mxu0
      %v999 = vadd.f32 0.0, %v998
      %1000 = vmatmul.bf16.gmra.mxu0 %v933
      %v1001 = vpop.f32.mrf.mxu0
      %v1002 = vadd.f32 0.0, %v1001
      %v1003 = vpop.f32.mrf.mxu0
      %v1004 = vadd.f32 0.0, %v1003
      %1005 = vmatmul.bf16.gmra.mxu0 %v936
      %v1006 = vpop.f32.mrf.mxu0
      %v1007 = vadd.f32 0.0, %v1006
      %v1008 = vpop.f32.mrf.mxu0
      %v1009 = vadd.f32 0.0, %v1008
      %1010 = vmatmul.bf16.gmra.mxu0 %v939
      %v1011 = vpop.f32.mrf.mxu0
      %v1012 = vadd.f32 0.0, %v1011
      %v1013 = vpop.f32.mrf.mxu0
      %v1014 = vadd.f32 0.0, %v1013
      %1015 = vmatmul.bf16.gmra.mxu0 %v942
      %v1016 = vpop.f32.mrf.mxu0
      %v1017 = vadd.f32 0.0, %v1016
      %v1018 = vpop.f32.mrf.mxu0
      %v1019 = vadd.f32 0.0, %v1018
      %1020 = vmatmul.bf16.gmra.mxu0 %v945
      %v1021 = vpop.f32.mrf.mxu0
      %v1022 = vadd.f32 0.0, %v1021
      %v1023 = vpop.f32.mrf.mxu0
      %v1024 = vadd.f32 0.0, %v1023
      %1025 = vmatmul.bf16.gmra.mxu0 %v948
      %v1026 = vpop.f32.mrf.mxu0
      %v1027 = vadd.f32 0.0, %v1026
      %v1028 = vpop.f32.mrf.mxu0
      %v1029 = vadd.f32 0.0, %v1028
      %1030 = vmatmul.bf16.gmra.mxu0 %v951
      %v1031 = vpop.f32.mrf.mxu0
      %v1032 = vadd.f32 0.0, %v1031
      %v1033 = vpop.f32.mrf.mxu0
      %v1034 = vadd.f32 0.0, %v1033
      %1035 = vmatmul.bf16.gmra.mxu0 %v954
      %v1036 = vpop.f32.mrf.mxu0
      %v1037 = vadd.f32 0.0, %v1036
      %v1038 = vpop.f32.mrf.mxu0
      %v1039 = vadd.f32 0.0, %v1038
      %1040 = vmatmul.bf16.gmra.mxu0 %v957
      %v1041 = vpop.f32.mrf.mxu0
      %v1042 = vadd.f32 0.0, %v1041
      %v1043 = vpop.f32.mrf.mxu0
      %v1044 = vadd.f32 0.0, %v1043
      %1045 = vmatmul.bf16.gmra.mxu0 %v960
      %v1046 = vpop.f32.mrf.mxu0
      %v1047 = vadd.f32 0.0, %v1046
      %v1048 = vpop.f32.mrf.mxu0
      %v1049 = vadd.f32 0.0, %v1048
      %1050 = vdwg.mxu0
      %v1051 = vadd.f32 %v770, %v972
      %v1052 = vadd.f32 %v772, %v974
      %v1053 = vadd.f32 %v775, %v977
      %v1054 = vadd.f32 %v777, %v979
      %v1055 = vadd.f32 %v780, %v982
      %v1056 = vadd.f32 %v782, %v984
      %v1057 = vadd.f32 %v785, %v987
      %v1058 = vadd.f32 %v787, %v989
      %v1059 = vadd.f32 %v790, %v992
      %v1060 = vadd.f32 %v792, %v994
      %v1061 = vadd.f32 %v795, %v997
      %v1062 = vadd.f32 %v797, %v999
      %v1063 = vadd.f32 %v800, %v1002
      %v1064 = vadd.f32 %v802, %v1004
      %v1065 = vadd.f32 %v805, %v1007
      %v1066 = vadd.f32 %v807, %v1009
      %v1067 = vadd.f32 %v810, %v1012
      %v1068 = vadd.f32 %v812, %v1014
      %v1069 = vadd.f32 %v815, %v1017
      %v1070 = vadd.f32 %v817, %v1019
      %v1071 = vadd.f32 %v820, %v1022
      %v1072 = vadd.f32 %v822, %v1024
      %v1073 = vadd.f32 %v825, %v1027
      %v1074 = vadd.f32 %v827, %v1029
      %v1075 = vadd.f32 %v830, %v1032
      %v1076 = vadd.f32 %v832, %v1034
      %v1077 = vadd.f32 %v835, %v1037
      %v1078 = vadd.f32 %v837, %v1039
      %v1079 = vadd.f32 %v840, %v1042
      %v1080 = vadd.f32 %v842, %v1044
      %v1081 = vadd.f32 %v845, %v1047
      %v1082 = vadd.f32 %v847, %v1049
      %v1083 = vld [vmem:[%s413] sm:$0xff]
      %v1084 = vld [vmem:[%s413 + $0x8] sm:$0xff]
      %v1085 = vld [vmem:[%s413 + $0x18] sm:$0xff]
      %v1086 = vld [vmem:[%s413 + $0x20] sm:$0xff]
      %v1087 = vld [vmem:[%s413 + $0x30] sm:$0xff]
      %v1088 = vld [vmem:[%s413 + $0x38] sm:$0xff]
      %v1089 = vld [vmem:[%s413 + $0x48] sm:$0xff]
      %v1090 = vld [vmem:[%s413 + $0x50] sm:$0xff]
      %v1091 = vld [vmem:[%s413 + $0x60] sm:$0xff]
      %v1092 = vld [vmem:[%s413 + $0x68] sm:$0xff]
      %v1093 = vld [vmem:[%s413 + $0x78] sm:$0xff]
      %v1094 = vld [vmem:[%s413 + $0x80] sm:$0xff]
      %v1095 = vld [vmem:[%s413 + $0x90] sm:$0xff]
      %v1096 = vld [vmem:[%s413 + $0x98] sm:$0xff]
      %v1097 = vld [vmem:[%s413 + $0xa8] sm:$0xff]
      %v1098 = vld [vmem:[%s413 + $0xb0] sm:$0xff]
      %v1099 = vld [vmem:[%s413 + $0xc0] sm:$0xff]
      %v1100 = vld [vmem:[%s413 + $0xc8] sm:$0xff]
      %v1101 = vld [vmem:[%s413 + $0xd8] sm:$0xff]
      %v1102 = vld [vmem:[%s413 + $0xe0] sm:$0xff]
      %v1103 = vld [vmem:[%s413 + $0xf0] sm:$0xff]
      %v1104 = vld [vmem:[%s413 + $0xf8] sm:$0xff]
      %v1105 = vld [vmem:[%s413 + $0x108] sm:$0xff]
      %v1106 = vld [vmem:[%s413 + $0x110] sm:$0xff]
      %v1107 = vld [vmem:[%s413 + $0x120] sm:$0xff]
      %v1108 = vld [vmem:[%s413 + $0x128] sm:$0xff]
      %v1109 = vld [vmem:[%s413 + $0x138] sm:$0xff]
      %v1110 = vld [vmem:[%s413 + $0x140] sm:$0xff]
      %v1111 = vld [vmem:[%s413 + $0x150] sm:$0xff]
      %v1112 = vld [vmem:[%s413 + $0x158] sm:$0xff]
      %v1113 = vld [vmem:[%s413 + $0x168] sm:$0xff]
      %v1114 = vld [vmem:[%s413 + $0x170] sm:$0xff]
      %v1115 = vpack.c.bf16 %v1084, %v1083
      %v1116 = vpack.c.bf16 %v1086, %v1085
      %v1117 = vpack.c.bf16 %v1088, %v1087
      %v1118 = vpack.c.bf16 %v1090, %v1089
      %v1119 = vpack.c.bf16 %v1092, %v1091
      %v1120 = vpack.c.bf16 %v1094, %v1093
      %v1121 = vpack.c.bf16 %v1096, %v1095
      %v1122 = vpack.c.bf16 %v1098, %v1097
      %v1123 = vpack.c.bf16 %v1100, %v1099
      %v1124 = vpack.c.bf16 %v1102, %v1101
      %v1125 = vpack.c.bf16 %v1104, %v1103
      %v1126 = vpack.c.bf16 %v1106, %v1105
      %v1127 = vpack.c.bf16 %v1108, %v1107
      %v1128 = vpack.c.bf16 %v1110, %v1109
      %v1129 = vpack.c.bf16 %v1112, %v1111
      %v1130 = vpack.c.bf16 %v1114, %v1113
      %s1131 = scalar_lea.vmem %s3, 48
      %v1132 = vld [vmem:[%s1131] sm:$0xf]
      %v1133 = vld [vmem:[%s1131 + $0x4] sm:$0xf]
      %v1134 = vld [vmem:[%s1131 + $0x8] sm:$0xf]
      %v1135 = vld [vmem:[%s1131 + $0xc] sm:$0xf]
      %v1140 = vunpack.c.l.b16 %v1132
      %v1141 = vunpack.c.l.b16 %v1133
      %v1142 = vunpack.c.l.b16 %v1134
      %v1143 = vunpack.c.l.b16 %v1135
      %v1144 = vpack.c.b16 %v1141, %v1140
      %v1145 = vpack.c.b16 %v1143, %v1142
      %v1149 = vsel %vm367, %v1115, 0
      %v1152 = vsel %vm367, %v1116, 0
      %v1155 = vsel %vm367, %v1117, 0
      %v1158 = vsel %vm367, %v1118, 0
      %v1161 = vsel %vm367, %v1119, 0
      %v1164 = vsel %vm367, %v1120, 0
      %v1167 = vsel %vm367, %v1121, 0
      %v1170 = vsel %vm367, %v1122, 0
      %v1173 = vsel %vm367, %v1123, 0
      %v1176 = vsel %vm367, %v1124, 0
      %v1179 = vsel %vm367, %v1125, 0
      %v1182 = vsel %vm367, %v1126, 0
      %v1185 = vsel %vm367, %v1127, 0
      %v1188 = vsel %vm367, %v1128, 0
      %v1191 = vsel %vm367, %v1129, 0
      %v1194 = vsel %vm367, %v1130, 0
      %1196 = vmatpush.bf16.msra.mxu0 0
      %1197 = vmatpush.bf16.msra.mxu0 0
      %1198 = vmatpush.bf16.msra.mxu0 0
      %1199 = vmatpush.bf16.msra.mxu0 0
      %1200 = vmatpush.bf16.msra.mxu0 0
      %1201 = vmatpush.bf16.msra.mxu0 0
      %1202 = vmatpush.bf16.msra.mxu0 %v1145
      %1203 = vmatpush.bf16.msra.mxu0 %v1144
      %1204 = vmatmul.bf16.gmra.mxu0 %v1149
      %v1205 = vpop.f32.mrf.mxu0
      %v1206 = vadd.f32 0.0, %v1205
      %v1207 = vpop.f32.mrf.mxu0
      %v1208 = vadd.f32 0.0, %v1207
      %1209 = vmatmul.bf16.gmra.mxu0 %v1152
      %v1210 = vpop.f32.mrf.mxu0
      %v1211 = vadd.f32 0.0, %v1210
      %v1212 = vpop.f32.mrf.mxu0
      %v1213 = vadd.f32 0.0, %v1212
      %1214 = vmatmul.bf16.gmra.mxu0 %v1155
      %v1215 = vpop.f32.mrf.mxu0
      %v1216 = vadd.f32 0.0, %v1215
      %v1217 = vpop.f32.mrf.mxu0
      %v1218 = vadd.f32 0.0, %v1217
      %1219 = vmatmul.bf16.gmra.mxu0 %v1158
      %v1220 = vpop.f32.mrf.mxu0
      %v1221 = vadd.f32 0.0, %v1220
      %v1222 = vpop.f32.mrf.mxu0
      %v1223 = vadd.f32 0.0, %v1222
      %1224 = vmatmul.bf16.gmra.mxu0 %v1161
      %v1225 = vpop.f32.mrf.mxu0
      %v1226 = vadd.f32 0.0, %v1225
      %v1227 = vpop.f32.mrf.mxu0
      %v1228 = vadd.f32 0.0, %v1227
      %1229 = vmatmul.bf16.gmra.mxu0 %v1164
      %v1230 = vpop.f32.mrf.mxu0
      %v1231 = vadd.f32 0.0, %v1230
      %v1232 = vpop.f32.mrf.mxu0
      %v1233 = vadd.f32 0.0, %v1232
      %1234 = vmatmul.bf16.gmra.mxu0 %v1167
      %v1235 = vpop.f32.mrf.mxu0
      %v1236 = vadd.f32 0.0, %v1235
      %v1237 = vpop.f32.mrf.mxu0
      %v1238 = vadd.f32 0.0, %v1237
      %1239 = vmatmul.bf16.gmra.mxu0 %v1170
      %v1240 = vpop.f32.mrf.mxu0
      %v1241 = vadd.f32 0.0, %v1240
      %v1242 = vpop.f32.mrf.mxu0
      %v1243 = vadd.f32 0.0, %v1242
      %1244 = vmatmul.bf16.gmra.mxu0 %v1173
      %v1245 = vpop.f32.mrf.mxu0
      %v1246 = vadd.f32 0.0, %v1245
      %v1247 = vpop.f32.mrf.mxu0
      %v1248 = vadd.f32 0.0, %v1247
      %1249 = vmatmul.bf16.gmra.mxu0 %v1176
      %v1250 = vpop.f32.mrf.mxu0
      %v1251 = vadd.f32 0.0, %v1250
      %v1252 = vpop.f32.mrf.mxu0
      %v1253 = vadd.f32 0.0, %v1252
      %1254 = vmatmul.bf16.gmra.mxu0 %v1179
      %v1255 = vpop.f32.mrf.mxu0
      %v1256 = vadd.f32 0.0, %v1255
      %v1257 = vpop.f32.mrf.mxu0
      %v1258 = vadd.f32 0.0, %v1257
      %1259 = vmatmul.bf16.gmra.mxu0 %v1182
      %v1260 = vpop.f32.mrf.mxu0
      %v1261 = vadd.f32 0.0, %v1260
      %v1262 = vpop.f32.mrf.mxu0
      %v1263 = vadd.f32 0.0, %v1262
      %1264 = vmatmul.bf16.gmra.mxu0 %v1185
      %v1265 = vpop.f32.mrf.mxu0
      %v1266 = vadd.f32 0.0, %v1265
      %v1267 = vpop.f32.mrf.mxu0
      %v1268 = vadd.f32 0.0, %v1267
      %1269 = vmatmul.bf16.gmra.mxu0 %v1188
      %v1270 = vpop.f32.mrf.mxu0
      %v1271 = vadd.f32 0.0, %v1270
      %v1272 = vpop.f32.mrf.mxu0
      %v1273 = vadd.f32 0.0, %v1272
      %1274 = vmatmul.bf16.gmra.mxu0 %v1191
      %v1275 = vpop.f32.mrf.mxu0
      %v1276 = vadd.f32 0.0, %v1275
      %v1277 = vpop.f32.mrf.mxu0
      %v1278 = vadd.f32 0.0, %v1277
      %1279 = vmatmul.bf16.gmra.mxu0 %v1194
      %v1280 = vpop.f32.mrf.mxu0
      %v1281 = vadd.f32 0.0, %v1280
      %v1282 = vpop.f32.mrf.mxu0
      %v1283 = vadd.f32 0.0, %v1282
      %1284 = vdwg.mxu0
      %v1285 = vadd.f32 %v1051, %v1206
      %v1286 = vadd.f32 %v1052, %v1208
      %v1287 = vadd.f32 %v1053, %v1211
      %v1288 = vadd.f32 %v1054, %v1213
      %v1289 = vadd.f32 %v1055, %v1216
      %v1290 = vadd.f32 %v1056, %v1218
      %v1291 = vadd.f32 %v1057, %v1221
      %v1292 = vadd.f32 %v1058, %v1223
      %v1293 = vadd.f32 %v1059, %v1226
      %v1294 = vadd.f32 %v1060, %v1228
      %v1295 = vadd.f32 %v1061, %v1231
      %v1296 = vadd.f32 %v1062, %v1233
      %v1297 = vadd.f32 %v1063, %v1236
      %v1298 = vadd.f32 %v1064, %v1238
      %v1299 = vadd.f32 %v1065, %v1241
      %v1300 = vadd.f32 %v1066, %v1243
      %v1301 = vadd.f32 %v1067, %v1246
      %v1302 = vadd.f32 %v1068, %v1248
      %v1303 = vadd.f32 %v1069, %v1251
      %v1304 = vadd.f32 %v1070, %v1253
      %v1305 = vadd.f32 %v1071, %v1256
      %v1306 = vadd.f32 %v1072, %v1258
      %v1307 = vadd.f32 %v1073, %v1261
      %v1308 = vadd.f32 %v1074, %v1263
      %v1309 = vadd.f32 %v1075, %v1266
      %v1310 = vadd.f32 %v1076, %v1268
      %v1311 = vadd.f32 %v1077, %v1271
      %v1312 = vadd.f32 %v1078, %v1273
      %v1313 = vadd.f32 %v1079, %v1276
      %v1314 = vadd.f32 %v1080, %v1278
      %v1315 = vadd.f32 %v1081, %v1281
      %v1316 = vadd.f32 %v1082, %v1283
      %v1317 = vld [vmem:[%s413 + $0x1] sm:$0xff]
      %v1318 = vld [vmem:[%s413 + $0x9] sm:$0xff]
      %v1319 = vld [vmem:[%s413 + $0x19] sm:$0xff]
      %v1320 = vld [vmem:[%s413 + $0x21] sm:$0xff]
      %v1321 = vld [vmem:[%s413 + $0x31] sm:$0xff]
      %v1322 = vld [vmem:[%s413 + $0x39] sm:$0xff]
      %v1323 = vld [vmem:[%s413 + $0x49] sm:$0xff]
      %v1324 = vld [vmem:[%s413 + $0x51] sm:$0xff]
      %v1325 = vld [vmem:[%s413 + $0x61] sm:$0xff]
      %v1326 = vld [vmem:[%s413 + $0x69] sm:$0xff]
      %v1327 = vld [vmem:[%s413 + $0x79] sm:$0xff]
      %v1328 = vld [vmem:[%s413 + $0x81] sm:$0xff]
      %v1329 = vld [vmem:[%s413 + $0x91] sm:$0xff]
      %v1330 = vld [vmem:[%s413 + $0x99] sm:$0xff]
      %v1331 = vld [vmem:[%s413 + $0xa9] sm:$0xff]
      %v1332 = vld [vmem:[%s413 + $0xb1] sm:$0xff]
      %v1333 = vld [vmem:[%s413 + $0xc1] sm:$0xff]
      %v1334 = vld [vmem:[%s413 + $0xc9] sm:$0xff]
      %v1335 = vld [vmem:[%s413 + $0xd9] sm:$0xff]
      %v1336 = vld [vmem:[%s413 + $0xe1] sm:$0xff]
      %v1337 = vld [vmem:[%s413 + $0xf1] sm:$0xff]
      %v1338 = vld [vmem:[%s413 + $0xf9] sm:$0xff]
      %v1339 = vld [vmem:[%s413 + $0x109] sm:$0xff]
      %v1340 = vld [vmem:[%s413 + $0x111] sm:$0xff]
      %v1341 = vld [vmem:[%s413 + $0x121] sm:$0xff]
      %v1342 = vld [vmem:[%s413 + $0x129] sm:$0xff]
      %v1343 = vld [vmem:[%s413 + $0x139] sm:$0xff]
      %v1344 = vld [vmem:[%s413 + $0x141] sm:$0xff]
      %v1345 = vld [vmem:[%s413 + $0x151] sm:$0xff]
      %v1346 = vld [vmem:[%s413 + $0x159] sm:$0xff]
      %v1347 = vld [vmem:[%s413 + $0x169] sm:$0xff]
      %v1348 = vld [vmem:[%s413 + $0x171] sm:$0xff]
      %v1349 = vpack.c.bf16 %v1318, %v1317
      %v1350 = vpack.c.bf16 %v1320, %v1319
      %v1351 = vpack.c.bf16 %v1322, %v1321
      %v1352 = vpack.c.bf16 %v1324, %v1323
      %v1353 = vpack.c.bf16 %v1326, %v1325
      %v1354 = vpack.c.bf16 %v1328, %v1327
      %v1355 = vpack.c.bf16 %v1330, %v1329
      %v1356 = vpack.c.bf16 %v1332, %v1331
      %v1357 = vpack.c.bf16 %v1334, %v1333
      %v1358 = vpack.c.bf16 %v1336, %v1335
      %v1359 = vpack.c.bf16 %v1338, %v1337
      %v1360 = vpack.c.bf16 %v1340, %v1339
      %v1361 = vpack.c.bf16 %v1342, %v1341
      %v1362 = vpack.c.bf16 %v1344, %v1343
      %v1363 = vpack.c.bf16 %v1346, %v1345
      %v1364 = vpack.c.bf16 %v1348, %v1347
      %s1365 = scalar_lea.vmem %s3, 64
      %v1366 = vld [vmem:[%s1365] sm:$0xf]
      %v1367 = vld [vmem:[%s1365 + $0x4] sm:$0xf]
      %v1368 = vld [vmem:[%s1365 + $0x8] sm:$0xf]
      %v1369 = vld [vmem:[%s1365 + $0xc] sm:$0xf]
      %v1374 = vunpack.c.l.b16 %v1366
      %v1375 = vunpack.c.l.b16 %v1367
      %v1376 = vunpack.c.l.b16 %v1368
      %v1377 = vunpack.c.l.b16 %v1369
      %v1378 = vpack.c.b16 %v1375, %v1374
      %v1379 = vpack.c.b16 %v1377, %v1376
      %v1383 = vsel %vm367, %v1349, 0
      %v1386 = vsel %vm367, %v1350, 0
      %v1389 = vsel %vm367, %v1351, 0
      %v1392 = vsel %vm367, %v1352, 0
      %v1395 = vsel %vm367, %v1353, 0
      %v1398 = vsel %vm367, %v1354, 0
      %v1401 = vsel %vm367, %v1355, 0
      %v1404 = vsel %vm367, %v1356, 0
      %v1407 = vsel %vm367, %v1357, 0
      %v1410 = vsel %vm367, %v1358, 0
      %v1413 = vsel %vm367, %v1359, 0
      %v1416 = vsel %vm367, %v1360, 0
      %v1419 = vsel %vm367, %v1361, 0
      %v1422 = vsel %vm367, %v1362, 0
      %v1425 = vsel %vm367, %v1363, 0
      %v1428 = vsel %vm367, %v1364, 0
      %1430 = vmatpush.bf16.msra.mxu0 0
      %1431 = vmatpush.bf16.msra.mxu0 0
      %1432 = vmatpush.bf16.msra.mxu0 0
      %1433 = vmatpush.bf16.msra.mxu0 0
      %1434 = vmatpush.bf16.msra.mxu0 0
      %1435 = vmatpush.bf16.msra.mxu0 0
      %1436 = vmatpush.bf16.msra.mxu0 %v1379
      %1437 = vmatpush.bf16.msra.mxu0 %v1378
      %1438 = vmatmul.bf16.gmra.mxu0 %v1383
      %v1439 = vpop.f32.mrf.mxu0
      %v1440 = vadd.f32 0.0, %v1439
      %v1441 = vpop.f32.mrf.mxu0
      %v1442 = vadd.f32 0.0, %v1441
      %1443 = vmatmul.bf16.gmra.mxu0 %v1386
      %v1444 = vpop.f32.mrf.mxu0
      %v1445 = vadd.f32 0.0, %v1444
      %v1446 = vpop.f32.mrf.mxu0
      %v1447 = vadd.f32 0.0, %v1446
      %1448 = vmatmul.bf16.gmra.mxu0 %v1389
      %v1449 = vpop.f32.mrf.mxu0
      %v1450 = vadd.f32 0.0, %v1449
      %v1451 = vpop.f32.mrf.mxu0
      %v1452 = vadd.f32 0.0, %v1451
      %1453 = vmatmul.bf16.gmra.mxu0 %v1392
      %v1454 = vpop.f32.mrf.mxu0
      %v1455 = vadd.f32 0.0, %v1454
      %v1456 = vpop.f32.mrf.mxu0
      %v1457 = vadd.f32 0.0, %v1456
      %1458 = vmatmul.bf16.gmra.mxu0 %v1395
      %v1459 = vpop.f32.mrf.mxu0
      %v1460 = vadd.f32 0.0, %v1459
      %v1461 = vpop.f32.mrf.mxu0
      %v1462 = vadd.f32 0.0, %v1461
      %1463 = vmatmul.bf16.gmra.mxu0 %v1398
      %v1464 = vpop.f32.mrf.mxu0
      %v1465 = vadd.f32 0.0, %v1464
      %v1466 = vpop.f32.mrf.mxu0
      %v1467 = vadd.f32 0.0, %v1466
      %1468 = vmatmul.bf16.gmra.mxu0 %v1401
      %v1469 = vpop.f32.mrf.mxu0
      %v1470 = vadd.f32 0.0, %v1469
      %v1471 = vpop.f32.mrf.mxu0
      %v1472 = vadd.f32 0.0, %v1471
      %1473 = vmatmul.bf16.gmra.mxu0 %v1404
      %v1474 = vpop.f32.mrf.mxu0
      %v1475 = vadd.f32 0.0, %v1474
      %v1476 = vpop.f32.mrf.mxu0
      %v1477 = vadd.f32 0.0, %v1476
      %1478 = vmatmul.bf16.gmra.mxu0 %v1407
      %v1479 = vpop.f32.mrf.mxu0
      %v1480 = vadd.f32 0.0, %v1479
      %v1481 = vpop.f32.mrf.mxu0
      %v1482 = vadd.f32 0.0, %v1481
      %1483 = vmatmul.bf16.gmra.mxu0 %v1410
      %v1484 = vpop.f32.mrf.mxu0
      %v1485 = vadd.f32 0.0, %v1484
      %v1486 = vpop.f32.mrf.mxu0
      %v1487 = vadd.f32 0.0, %v1486
      %1488 = vmatmul.bf16.gmra.mxu0 %v1413
      %v1489 = vpop.f32.mrf.mxu0
      %v1490 = vadd.f32 0.0, %v1489
      %v1491 = vpop.f32.mrf.mxu0
      %v1492 = vadd.f32 0.0, %v1491
      %1493 = vmatmul.bf16.gmra.mxu0 %v1416
      %v1494 = vpop.f32.mrf.mxu0
      %v1495 = vadd.f32 0.0, %v1494
      %v1496 = vpop.f32.mrf.mxu0
      %v1497 = vadd.f32 0.0, %v1496
      %1498 = vmatmul.bf16.gmra.mxu0 %v1419
      %v1499 = vpop.f32.mrf.mxu0
      %v1500 = vadd.f32 0.0, %v1499
      %v1501 = vpop.f32.mrf.mxu0
      %v1502 = vadd.f32 0.0, %v1501
      %1503 = vmatmul.bf16.gmra.mxu0 %v1422
      %v1504 = vpop.f32.mrf.mxu0
      %v1505 = vadd.f32 0.0, %v1504
      %v1506 = vpop.f32.mrf.mxu0
      %v1507 = vadd.f32 0.0, %v1506
      %1508 = vmatmul.bf16.gmra.mxu0 %v1425
      %v1509 = vpop.f32.mrf.mxu0
      %v1510 = vadd.f32 0.0, %v1509
      %v1511 = vpop.f32.mrf.mxu0
      %v1512 = vadd.f32 0.0, %v1511
      %1513 = vmatmul.bf16.gmra.mxu0 %v1428
      %v1514 = vpop.f32.mrf.mxu0
      %v1515 = vadd.f32 0.0, %v1514
      %v1516 = vpop.f32.mrf.mxu0
      %v1517 = vadd.f32 0.0, %v1516
      %1518 = vdwg.mxu0
      %v1519 = vadd.f32 %v1285, %v1440
      %v1520 = vadd.f32 %v1286, %v1442
      %v1521 = vadd.f32 %v1287, %v1445
      %v1522 = vadd.f32 %v1288, %v1447
      %v1523 = vadd.f32 %v1289, %v1450
      %v1524 = vadd.f32 %v1290, %v1452
      %v1525 = vadd.f32 %v1291, %v1455
      %v1526 = vadd.f32 %v1292, %v1457
      %v1527 = vadd.f32 %v1293, %v1460
      %v1528 = vadd.f32 %v1294, %v1462
      %v1529 = vadd.f32 %v1295, %v1465
      %v1530 = vadd.f32 %v1296, %v1467
      %v1531 = vadd.f32 %v1297, %v1470
      %v1532 = vadd.f32 %v1298, %v1472
      %v1533 = vadd.f32 %v1299, %v1475
      %v1534 = vadd.f32 %v1300, %v1477
      %v1535 = vadd.f32 %v1301, %v1480
      %v1536 = vadd.f32 %v1302, %v1482
      %v1537 = vadd.f32 %v1303, %v1485
      %v1538 = vadd.f32 %v1304, %v1487
      %v1539 = vadd.f32 %v1305, %v1490
      %v1540 = vadd.f32 %v1306, %v1492
      %v1541 = vadd.f32 %v1307, %v1495
      %v1542 = vadd.f32 %v1308, %v1497
      %v1543 = vadd.f32 %v1309, %v1500
      %v1544 = vadd.f32 %v1310, %v1502
      %v1545 = vadd.f32 %v1311, %v1505
      %v1546 = vadd.f32 %v1312, %v1507
      %v1547 = vadd.f32 %v1313, %v1510
      %v1548 = vadd.f32 %v1314, %v1512
      %v1549 = vadd.f32 %v1315, %v1515
      %v1550 = vadd.f32 %v1316, %v1517
      %v1551 = vld [vmem:[%s413 + $0x2] sm:$0xff]
      %v1552 = vld [vmem:[%s413 + $0xa] sm:$0xff]
      %v1553 = vld [vmem:[%s413 + $0x1a] sm:$0xff]
      %v1554 = vld [vmem:[%s413 + $0x22] sm:$0xff]
      %v1555 = vld [vmem:[%s413 + $0x32] sm:$0xff]
      %v1556 = vld [vmem:[%s413 + $0x3a] sm:$0xff]
      %v1557 = vld [vmem:[%s413 + $0x4a] sm:$0xff]
      %v1558 = vld [vmem:[%s413 + $0x52] sm:$0xff]
      %v1559 = vld [vmem:[%s413 + $0x62] sm:$0xff]
      %v1560 = vld [vmem:[%s413 + $0x6a] sm:$0xff]
      %v1561 = vld [vmem:[%s413 + $0x7a] sm:$0xff]
      %v1562 = vld [vmem:[%s413 + $0x82] sm:$0xff]
      %v1563 = vld [vmem:[%s413 + $0x92] sm:$0xff]
      %v1564 = vld [vmem:[%s413 + $0x9a] sm:$0xff]
      %v1565 = vld [vmem:[%s413 + $0xaa] sm:$0xff]
      %v1566 = vld [vmem:[%s413 + $0xb2] sm:$0xff]
      %v1567 = vld [vmem:[%s413 + $0xc2] sm:$0xff]
      %v1568 = vld [vmem:[%s413 + $0xca] sm:$0xff]
      %v1569 = vld [vmem:[%s413 + $0xda] sm:$0xff]
      %v1570 = vld [vmem:[%s413 + $0xe2] sm:$0xff]
      %v1571 = vld [vmem:[%s413 + $0xf2] sm:$0xff]
      %v1572 = vld [vmem:[%s413 + $0xfa] sm:$0xff]
      %v1573 = vld [vmem:[%s413 + $0x10a] sm:$0xff]
      %v1574 = vld [vmem:[%s413 + $0x112] sm:$0xff]
      %v1575 = vld [vmem:[%s413 + $0x122] sm:$0xff]
      %v1576 = vld [vmem:[%s413 + $0x12a] sm:$0xff]
      %v1577 = vld [vmem:[%s413 + $0x13a] sm:$0xff]
      %v1578 = vld [vmem:[%s413 + $0x142] sm:$0xff]
      %v1579 = vld [vmem:[%s413 + $0x152] sm:$0xff]
      %v1580 = vld [vmem:[%s413 + $0x15a] sm:$0xff]
      %v1581 = vld [vmem:[%s413 + $0x16a] sm:$0xff]
      %v1582 = vld [vmem:[%s413 + $0x172] sm:$0xff]
      %v1583 = vpack.c.bf16 %v1552, %v1551
      %v1584 = vpack.c.bf16 %v1554, %v1553
      %v1585 = vpack.c.bf16 %v1556, %v1555
      %v1586 = vpack.c.bf16 %v1558, %v1557
      %v1587 = vpack.c.bf16 %v1560, %v1559
      %v1588 = vpack.c.bf16 %v1562, %v1561
      %v1589 = vpack.c.bf16 %v1564, %v1563
      %v1590 = vpack.c.bf16 %v1566, %v1565
      %v1591 = vpack.c.bf16 %v1568, %v1567
      %v1592 = vpack.c.bf16 %v1570, %v1569
      %v1593 = vpack.c.bf16 %v1572, %v1571
      %v1594 = vpack.c.bf16 %v1574, %v1573
      %v1595 = vpack.c.bf16 %v1576, %v1575
      %v1596 = vpack.c.bf16 %v1578, %v1577
      %v1597 = vpack.c.bf16 %v1580, %v1579
      %v1598 = vpack.c.bf16 %v1582, %v1581
      %s1599 = scalar_lea.vmem %s3, 80
      %v1600 = vld [vmem:[%s1599] sm:$0xf]
      %v1601 = vld [vmem:[%s1599 + $0x4] sm:$0xf]
      %v1602 = vld [vmem:[%s1599 + $0x8] sm:$0xf]
      %v1603 = vld [vmem:[%s1599 + $0xc] sm:$0xf]
      %v1608 = vunpack.c.l.b16 %v1600
      %v1609 = vunpack.c.l.b16 %v1601
      %v1610 = vunpack.c.l.b16 %v1602
      %v1611 = vunpack.c.l.b16 %v1603
      %v1612 = vpack.c.b16 %v1609, %v1608
      %v1613 = vpack.c.b16 %v1611, %v1610
      %v1617 = vsel %vm367, %v1583, 0
      %v1620 = vsel %vm367, %v1584, 0
      %v1623 = vsel %vm367, %v1585, 0
      %v1626 = vsel %vm367, %v1586, 0
      %v1629 = vsel %vm367, %v1587, 0
      %v1632 = vsel %vm367, %v1588, 0
      %v1635 = vsel %vm367, %v1589, 0
      %v1638 = vsel %vm367, %v1590, 0
      %v1641 = vsel %vm367, %v1591, 0
      %v1644 = vsel %vm367, %v1592, 0
      %v1647 = vsel %vm367, %v1593, 0
      %v1650 = vsel %vm367, %v1594, 0
      %v1653 = vsel %vm367, %v1595, 0
      %v1656 = vsel %vm367, %v1596, 0
      %v1659 = vsel %vm367, %v1597, 0
      %v1662 = vsel %vm367, %v1598, 0
      %1664 = vmatpush.bf16.msra.mxu0 0
      %1665 = vmatpush.bf16.msra.mxu0 0
      %1666 = vmatpush.bf16.msra.mxu0 0
      %1667 = vmatpush.bf16.msra.mxu0 0
      %1668 = vmatpush.bf16.msra.mxu0 0
      %1669 = vmatpush.bf16.msra.mxu0 0
      %1670 = vmatpush.bf16.msra.mxu0 %v1613
      %1671 = vmatpush.bf16.msra.mxu0 %v1612
      %1672 = vmatmul.bf16.gmra.mxu0 %v1617
      %v1673 = vpop.f32.mrf.mxu0
      %v1674 = vadd.f32 0.0, %v1673
      %v1675 = vpop.f32.mrf.mxu0
      %v1676 = vadd.f32 0.0, %v1675
      %1677 = vmatmul.bf16.gmra.mxu0 %v1620
      %v1678 = vpop.f32.mrf.mxu0
      %v1679 = vadd.f32 0.0, %v1678
      %v1680 = vpop.f32.mrf.mxu0
      %v1681 = vadd.f32 0.0, %v1680
      %1682 = vmatmul.bf16.gmra.mxu0 %v1623
      %v1683 = vpop.f32.mrf.mxu0
      %v1684 = vadd.f32 0.0, %v1683
      %v1685 = vpop.f32.mrf.mxu0
      %v1686 = vadd.f32 0.0, %v1685
      %1687 = vmatmul.bf16.gmra.mxu0 %v1626
      %v1688 = vpop.f32.mrf.mxu0
      %v1689 = vadd.f32 0.0, %v1688
      %v1690 = vpop.f32.mrf.mxu0
      %v1691 = vadd.f32 0.0, %v1690
      %1692 = vmatmul.bf16.gmra.mxu0 %v1629
      %v1693 = vpop.f32.mrf.mxu0
      %v1694 = vadd.f32 0.0, %v1693
      %v1695 = vpop.f32.mrf.mxu0
      %v1696 = vadd.f32 0.0, %v1695
      %1697 = vmatmul.bf16.gmra.mxu0 %v1632
      %v1698 = vpop.f32.mrf.mxu0
      %v1699 = vadd.f32 0.0, %v1698
      %v1700 = vpop.f32.mrf.mxu0
      %v1701 = vadd.f32 0.0, %v1700
      %1702 = vmatmul.bf16.gmra.mxu0 %v1635
      %v1703 = vpop.f32.mrf.mxu0
      %v1704 = vadd.f32 0.0, %v1703
      %v1705 = vpop.f32.mrf.mxu0
      %v1706 = vadd.f32 0.0, %v1705
      %1707 = vmatmul.bf16.gmra.mxu0 %v1638
      %v1708 = vpop.f32.mrf.mxu0
      %v1709 = vadd.f32 0.0, %v1708
      %v1710 = vpop.f32.mrf.mxu0
      %v1711 = vadd.f32 0.0, %v1710
      %1712 = vmatmul.bf16.gmra.mxu0 %v1641
      %v1713 = vpop.f32.mrf.mxu0
      %v1714 = vadd.f32 0.0, %v1713
      %v1715 = vpop.f32.mrf.mxu0
      %v1716 = vadd.f32 0.0, %v1715
      %1717 = vmatmul.bf16.gmra.mxu0 %v1644
      %v1718 = vpop.f32.mrf.mxu0
      %v1719 = vadd.f32 0.0, %v1718
      %v1720 = vpop.f32.mrf.mxu0
      %v1721 = vadd.f32 0.0, %v1720
      %1722 = vmatmul.bf16.gmra.mxu0 %v1647
      %v1723 = vpop.f32.mrf.mxu0
      %v1724 = vadd.f32 0.0, %v1723
      %v1725 = vpop.f32.mrf.mxu0
      %v1726 = vadd.f32 0.0, %v1725
      %1727 = vmatmul.bf16.gmra.mxu0 %v1650
      %v1728 = vpop.f32.mrf.mxu0
      %v1729 = vadd.f32 0.0, %v1728
      %v1730 = vpop.f32.mrf.mxu0
      %v1731 = vadd.f32 0.0, %v1730
      %1732 = vmatmul.bf16.gmra.mxu0 %v1653
      %v1733 = vpop.f32.mrf.mxu0
      %v1734 = vadd.f32 0.0, %v1733
      %v1735 = vpop.f32.mrf.mxu0
      %v1736 = vadd.f32 0.0, %v1735
      %1737 = vmatmul.bf16.gmra.mxu0 %v1656
      %v1738 = vpop.f32.mrf.mxu0
      %v1739 = vadd.f32 0.0, %v1738
      %v1740 = vpop.f32.mrf.mxu0
      %v1741 = vadd.f32 0.0, %v1740
      %1742 = vmatmul.bf16.gmra.mxu0 %v1659
      %v1743 = vpop.f32.mrf.mxu0
      %v1744 = vadd.f32 0.0, %v1743
      %v1745 = vpop.f32.mrf.mxu0
      %v1746 = vadd.f32 0.0, %v1745
      %1747 = vmatmul.bf16.gmra.mxu0 %v1662
      %v1748 = vpop.f32.mrf.mxu0
      %v1749 = vadd.f32 0.0, %v1748
      %v1750 = vpop.f32.mrf.mxu0
      %v1751 = vadd.f32 0.0, %v1750
      %1752 = vdwg.mxu0
      %v1753 = vadd.f32 %v1519, %v1674
      %v1754 = vadd.f32 %v1520, %v1676
      %v1755 = vadd.f32 %v1521, %v1679
      %v1756 = vadd.f32 %v1522, %v1681
      %v1757 = vadd.f32 %v1523, %v1684
      %v1758 = vadd.f32 %v1524, %v1686
      %v1759 = vadd.f32 %v1525, %v1689
      %v1760 = vadd.f32 %v1526, %v1691
      %v1761 = vadd.f32 %v1527, %v1694
      %v1762 = vadd.f32 %v1528, %v1696
      %v1763 = vadd.f32 %v1529, %v1699
      %v1764 = vadd.f32 %v1530, %v1701
      %v1765 = vadd.f32 %v1531, %v1704
      %v1766 = vadd.f32 %v1532, %v1706
      %v1767 = vadd.f32 %v1533, %v1709
      %v1768 = vadd.f32 %v1534, %v1711
      %v1769 = vadd.f32 %v1535, %v1714
      %v1770 = vadd.f32 %v1536, %v1716
      %v1771 = vadd.f32 %v1537, %v1719
      %v1772 = vadd.f32 %v1538, %v1721
      %v1773 = vadd.f32 %v1539, %v1724
      %v1774 = vadd.f32 %v1540, %v1726
      %v1775 = vadd.f32 %v1541, %v1729
      %v1776 = vadd.f32 %v1542, %v1731
      %v1777 = vadd.f32 %v1543, %v1734
      %v1778 = vadd.f32 %v1544, %v1736
      %v1779 = vadd.f32 %v1545, %v1739
      %v1780 = vadd.f32 %v1546, %v1741
      %v1781 = vadd.f32 %v1547, %v1744
      %v1782 = vadd.f32 %v1548, %v1746
      %v1783 = vadd.f32 %v1549, %v1749
      %v1784 = vadd.f32 %v1550, %v1751
      %s1785 = scalar_lea.vmem [#allocation2], 48
      %v1786 = vld [vmem:[%s1785] sm:$0xff]
      %v1787 = vld [vmem:[%s1785 + $0x8] sm:$0xff]
      %v1788 = vld [vmem:[%s1785 + $0x18] sm:$0xff]
      %v1789 = vld [vmem:[%s1785 + $0x20] sm:$0xff]
      %v1790 = vld [vmem:[%s1785 + $0x30] sm:$0xff]
      %v1791 = vld [vmem:[%s1785 + $0x38] sm:$0xff]
      %v1792 = vld [vmem:[%s1785 + $0x48] sm:$0xff]
      %v1793 = vld [vmem:[%s1785 + $0x50] sm:$0xff]
      %v1794 = vld [vmem:[%s1785 + $0x60] sm:$0xff]
      %v1795 = vld [vmem:[%s1785 + $0x68] sm:$0xff]
      %v1796 = vld [vmem:[%s1785 + $0x78] sm:$0xff]
      %v1797 = vld [vmem:[%s1785 + $0x80] sm:$0xff]
      %v1798 = vld [vmem:[%s1785 + $0x90] sm:$0xff]
      %v1799 = vld [vmem:[%s1785 + $0x98] sm:$0xff]
      %v1800 = vld [vmem:[%s1785 + $0xa8] sm:$0xff]
      %v1801 = vld [vmem:[%s1785 + $0xb0] sm:$0xff]
      %v1802 = vld [vmem:[%s1785 + $0xc0] sm:$0xff]
      %v1803 = vld [vmem:[%s1785 + $0xc8] sm:$0xff]
      %v1804 = vld [vmem:[%s1785 + $0xd8] sm:$0xff]
      %v1805 = vld [vmem:[%s1785 + $0xe0] sm:$0xff]
      %v1806 = vld [vmem:[%s1785 + $0xf0] sm:$0xff]
      %v1807 = vld [vmem:[%s1785 + $0xf8] sm:$0xff]
      %v1808 = vld [vmem:[%s1785 + $0x108] sm:$0xff]
      %v1809 = vld [vmem:[%s1785 + $0x110] sm:$0xff]
      %v1810 = vld [vmem:[%s1785 + $0x120] sm:$0xff]
      %v1811 = vld [vmem:[%s1785 + $0x128] sm:$0xff]
      %v1812 = vld [vmem:[%s1785 + $0x138] sm:$0xff]
      %v1813 = vld [vmem:[%s1785 + $0x140] sm:$0xff]
      %v1814 = vld [vmem:[%s1785 + $0x150] sm:$0xff]
      %v1815 = vld [vmem:[%s1785 + $0x158] sm:$0xff]
      %v1816 = vld [vmem:[%s1785 + $0x168] sm:$0xff]
      %v1817 = vld [vmem:[%s1785 + $0x170] sm:$0xff]
      %v1818 = vpack.c.bf16 %v1787, %v1786
      %v1819 = vpack.c.bf16 %v1789, %v1788
      %v1820 = vpack.c.bf16 %v1791, %v1790
      %v1821 = vpack.c.bf16 %v1793, %v1792
      %v1822 = vpack.c.bf16 %v1795, %v1794
      %v1823 = vpack.c.bf16 %v1797, %v1796
      %v1824 = vpack.c.bf16 %v1799, %v1798
      %v1825 = vpack.c.bf16 %v1801, %v1800
      %v1826 = vpack.c.bf16 %v1803, %v1802
      %v1827 = vpack.c.bf16 %v1805, %v1804
      %v1828 = vpack.c.bf16 %v1807, %v1806
      %v1829 = vpack.c.bf16 %v1809, %v1808
      %v1830 = vpack.c.bf16 %v1811, %v1810
      %v1831 = vpack.c.bf16 %v1813, %v1812
      %v1832 = vpack.c.bf16 %v1815, %v1814
      %v1833 = vpack.c.bf16 %v1817, %v1816
      %s1834 = scalar_lea.vmem %s3, 96
      %v1835 = vld [vmem:[%s1834] sm:$0xf]
      %v1836 = vld [vmem:[%s1834 + $0x4] sm:$0xf]
      %v1837 = vld [vmem:[%s1834 + $0x8] sm:$0xf]
      %v1838 = vld [vmem:[%s1834 + $0xc] sm:$0xf]
      %v1843 = vunpack.c.l.b16 %v1835
      %v1844 = vunpack.c.l.b16 %v1836
      %v1845 = vunpack.c.l.b16 %v1837
      %v1846 = vunpack.c.l.b16 %v1838
      %v1847 = vpack.c.b16 %v1844, %v1843
      %v1848 = vpack.c.b16 %v1846, %v1845
      %v1852 = vsel %vm367, %v1818, 0
      %v1855 = vsel %vm367, %v1819, 0
      %v1858 = vsel %vm367, %v1820, 0
      %v1861 = vsel %vm367, %v1821, 0
      %v1864 = vsel %vm367, %v1822, 0
      %v1867 = vsel %vm367, %v1823, 0
      %v1870 = vsel %vm367, %v1824, 0
      %v1873 = vsel %vm367, %v1825, 0
      %v1876 = vsel %vm367, %v1826, 0
      %v1879 = vsel %vm367, %v1827, 0
      %v1882 = vsel %vm367, %v1828, 0
      %v1885 = vsel %vm367, %v1829, 0
      %v1888 = vsel %vm367, %v1830, 0
      %v1891 = vsel %vm367, %v1831, 0
      %v1894 = vsel %vm367, %v1832, 0
      %v1897 = vsel %vm367, %v1833, 0
      %1899 = vmatpush.bf16.msra.mxu0 0
      %1900 = vmatpush.bf16.msra.mxu0 0
      %1901 = vmatpush.bf16.msra.mxu0 0
      %1902 = vmatpush.bf16.msra.mxu0 0
      %1903 = vmatpush.bf16.msra.mxu0 0
      %1904 = vmatpush.bf16.msra.mxu0 0
      %1905 = vmatpush.bf16.msra.mxu0 %v1848
      %1906 = vmatpush.bf16.msra.mxu0 %v1847
      %1907 = vmatmul.bf16.gmra.mxu0 %v1852
      %v1908 = vpop.f32.mrf.mxu0
      %v1909 = vadd.f32 0.0, %v1908
      %v1910 = vpop.f32.mrf.mxu0
      %v1911 = vadd.f32 0.0, %v1910
      %1912 = vmatmul.bf16.gmra.mxu0 %v1855
      %v1913 = vpop.f32.mrf.mxu0
      %v1914 = vadd.f32 0.0, %v1913
      %v1915 = vpop.f32.mrf.mxu0
      %v1916 = vadd.f32 0.0, %v1915
      %1917 = vmatmul.bf16.gmra.mxu0 %v1858
      %v1918 = vpop.f32.mrf.mxu0
      %v1919 = vadd.f32 0.0, %v1918
      %v1920 = vpop.f32.mrf.mxu0
      %v1921 = vadd.f32 0.0, %v1920
      %1922 = vmatmul.bf16.gmra.mxu0 %v1861
      %v1923 = vpop.f32.mrf.mxu0
      %v1924 = vadd.f32 0.0, %v1923
      %v1925 = vpop.f32.mrf.mxu0
      %v1926 = vadd.f32 0.0, %v1925
      %1927 = vmatmul.bf16.gmra.mxu0 %v1864
      %v1928 = vpop.f32.mrf.mxu0
      %v1929 = vadd.f32 0.0, %v1928
      %v1930 = vpop.f32.mrf.mxu0
      %v1931 = vadd.f32 0.0, %v1930
      %1932 = vmatmul.bf16.gmra.mxu0 %v1867
      %v1933 = vpop.f32.mrf.mxu0
      %v1934 = vadd.f32 0.0, %v1933
      %v1935 = vpop.f32.mrf.mxu0
      %v1936 = vadd.f32 0.0, %v1935
      %1937 = vmatmul.bf16.gmra.mxu0 %v1870
      %v1938 = vpop.f32.mrf.mxu0
      %v1939 = vadd.f32 0.0, %v1938
      %v1940 = vpop.f32.mrf.mxu0
      %v1941 = vadd.f32 0.0, %v1940
      %1942 = vmatmul.bf16.gmra.mxu0 %v1873
      %v1943 = vpop.f32.mrf.mxu0
      %v1944 = vadd.f32 0.0, %v1943
      %v1945 = vpop.f32.mrf.mxu0
      %v1946 = vadd.f32 0.0, %v1945
      %1947 = vmatmul.bf16.gmra.mxu0 %v1876
      %v1948 = vpop.f32.mrf.mxu0
      %v1949 = vadd.f32 0.0, %v1948
      %v1950 = vpop.f32.mrf.mxu0
      %v1951 = vadd.f32 0.0, %v1950
      %1952 = vmatmul.bf16.gmra.mxu0 %v1879
      %v1953 = vpop.f32.mrf.mxu0
      %v1954 = vadd.f32 0.0, %v1953
      %v1955 = vpop.f32.mrf.mxu0
      %v1956 = vadd.f32 0.0, %v1955
      %1957 = vmatmul.bf16.gmra.mxu0 %v1882
      %v1958 = vpop.f32.mrf.mxu0
      %v1959 = vadd.f32 0.0, %v1958
      %v1960 = vpop.f32.mrf.mxu0
      %v1961 = vadd.f32 0.0, %v1960
      %1962 = vmatmul.bf16.gmra.mxu0 %v1885
      %v1963 = vpop.f32.mrf.mxu0
      %v1964 = vadd.f32 0.0, %v1963
      %v1965 = vpop.f32.mrf.mxu0
      %v1966 = vadd.f32 0.0, %v1965
      %1967 = vmatmul.bf16.gmra.mxu0 %v1888
      %v1968 = vpop.f32.mrf.mxu0
      %v1969 = vadd.f32 0.0, %v1968
      %v1970 = vpop.f32.mrf.mxu0
      %v1971 = vadd.f32 0.0, %v1970
      %1972 = vmatmul.bf16.gmra.mxu0 %v1891
      %v1973 = vpop.f32.mrf.mxu0
      %v1974 = vadd.f32 0.0, %v1973
      %v1975 = vpop.f32.mrf.mxu0
      %v1976 = vadd.f32 0.0, %v1975
      %1977 = vmatmul.bf16.gmra.mxu0 %v1894
      %v1978 = vpop.f32.mrf.mxu0
      %v1979 = vadd.f32 0.0, %v1978
      %v1980 = vpop.f32.mrf.mxu0
      %v1981 = vadd.f32 0.0, %v1980
      %1982 = vmatmul.bf16.gmra.mxu0 %v1897
      %v1983 = vpop.f32.mrf.mxu0
      %v1984 = vadd.f32 0.0, %v1983
      %v1985 = vpop.f32.mrf.mxu0
      %v1986 = vadd.f32 0.0, %v1985
      %1987 = vdwg.mxu0
      %v1988 = vadd.f32 %v1753, %v1909
      %v1989 = vadd.f32 %v1754, %v1911
      %v1990 = vadd.f32 %v1755, %v1914
      %v1991 = vadd.f32 %v1756, %v1916
      %v1992 = vadd.f32 %v1757, %v1919
      %v1993 = vadd.f32 %v1758, %v1921
      %v1994 = vadd.f32 %v1759, %v1924
      %v1995 = vadd.f32 %v1760, %v1926
      %v1996 = vadd.f32 %v1761, %v1929
      %v1997 = vadd.f32 %v1762, %v1931
      %v1998 = vadd.f32 %v1763, %v1934
      %v1999 = vadd.f32 %v1764, %v1936
      %v2000 = vadd.f32 %v1765, %v1939
      %v2001 = vadd.f32 %v1766, %v1941
      %v2002 = vadd.f32 %v1767, %v1944
      %v2003 = vadd.f32 %v1768, %v1946
      %v2004 = vadd.f32 %v1769, %v1949
      %v2005 = vadd.f32 %v1770, %v1951
      %v2006 = vadd.f32 %v1771, %v1954
      %v2007 = vadd.f32 %v1772, %v1956
      %v2008 = vadd.f32 %v1773, %v1959
      %v2009 = vadd.f32 %v1774, %v1961
      %v2010 = vadd.f32 %v1775, %v1964
      %v2011 = vadd.f32 %v1776, %v1966
      %v2012 = vadd.f32 %v1777, %v1969
      %v2013 = vadd.f32 %v1778, %v1971
      %v2014 = vadd.f32 %v1779, %v1974
      %v2015 = vadd.f32 %v1780, %v1976
      %v2016 = vadd.f32 %v1781, %v1979
      %v2017 = vadd.f32 %v1782, %v1981
      %v2018 = vadd.f32 %v1783, %v1984
      %v2019 = vadd.f32 %v1784, %v1986
      %v2020 = vld [vmem:[%s1785 + $0x1] sm:$0xff]
      %v2021 = vld [vmem:[%s1785 + $0x9] sm:$0xff]
      %v2022 = vld [vmem:[%s1785 + $0x19] sm:$0xff]
      %v2023 = vld [vmem:[%s1785 + $0x21] sm:$0xff]
      %v2024 = vld [vmem:[%s1785 + $0x31] sm:$0xff]
      %v2025 = vld [vmem:[%s1785 + $0x39] sm:$0xff]
      %v2026 = vld [vmem:[%s1785 + $0x49] sm:$0xff]
      %v2027 = vld [vmem:[%s1785 + $0x51] sm:$0xff]
      %v2028 = vld [vmem:[%s1785 + $0x61] sm:$0xff]
      %v2029 = vld [vmem:[%s1785 + $0x69] sm:$0xff]
      %v2030 = vld [vmem:[%s1785 + $0x79] sm:$0xff]
      %v2031 = vld [vmem:[%s1785 + $0x81] sm:$0xff]
      %v2032 = vld [vmem:[%s1785 + $0x91] sm:$0xff]
      %v2033 = vld [vmem:[%s1785 + $0x99] sm:$0xff]
      %v2034 = vld [vmem:[%s1785 + $0xa9] sm:$0xff]
      %v2035 = vld [vmem:[%s1785 + $0xb1] sm:$0xff]
      %v2036 = vld [vmem:[%s1785 + $0xc1] sm:$0xff]
      %v2037 = vld [vmem:[%s1785 + $0xc9] sm:$0xff]
      %v2038 = vld [vmem:[%s1785 + $0xd9] sm:$0xff]
      %v2039 = vld [vmem:[%s1785 + $0xe1] sm:$0xff]
      %v2040 = vld [vmem:[%s1785 + $0xf1] sm:$0xff]
      %v2041 = vld [vmem:[%s1785 + $0xf9] sm:$0xff]
      %v2042 = vld [vmem:[%s1785 + $0x109] sm:$0xff]
      %v2043 = vld [vmem:[%s1785 + $0x111] sm:$0xff]
      %v2044 = vld [vmem:[%s1785 + $0x121] sm:$0xff]
      %v2045 = vld [vmem:[%s1785 + $0x129] sm:$0xff]
      %v2046 = vld [vmem:[%s1785 + $0x139] sm:$0xff]
      %v2047 = vld [vmem:[%s1785 + $0x141] sm:$0xff]
      %v2048 = vld [vmem:[%s1785 + $0x151] sm:$0xff]
      %v2049 = vld [vmem:[%s1785 + $0x159] sm:$0xff]
      %v2050 = vld [vmem:[%s1785 + $0x169] sm:$0xff]
      %v2051 = vld [vmem:[%s1785 + $0x171] sm:$0xff]
      %v2052 = vpack.c.bf16 %v2021, %v2020
      %v2053 = vpack.c.bf16 %v2023, %v2022
      %v2054 = vpack.c.bf16 %v2025, %v2024
      %v2055 = vpack.c.bf16 %v2027, %v2026
      %v2056 = vpack.c.bf16 %v2029, %v2028
      %v2057 = vpack.c.bf16 %v2031, %v2030
      %v2058 = vpack.c.bf16 %v2033, %v2032
      %v2059 = vpack.c.bf16 %v2035, %v2034
      %v2060 = vpack.c.bf16 %v2037, %v2036
      %v2061 = vpack.c.bf16 %v2039, %v2038
      %v2062 = vpack.c.bf16 %v2041, %v2040
      %v2063 = vpack.c.bf16 %v2043, %v2042
      %v2064 = vpack.c.bf16 %v2045, %v2044
      %v2065 = vpack.c.bf16 %v2047, %v2046
      %v2066 = vpack.c.bf16 %v2049, %v2048
      %v2067 = vpack.c.bf16 %v2051, %v2050
      %s2068 = scalar_lea.vmem %s3, 112
      %v2069 = vld [vmem:[%s2068] sm:$0xf]
      %v2070 = vld [vmem:[%s2068 + $0x4] sm:$0xf]
      %v2071 = vld [vmem:[%s2068 + $0x8] sm:$0xf]
      %v2072 = vld [vmem:[%s2068 + $0xc] sm:$0xf]
      %v2077 = vunpack.c.l.b16 %v2069
      %v2078 = vunpack.c.l.b16 %v2070
      %v2079 = vunpack.c.l.b16 %v2071
      %v2080 = vunpack.c.l.b16 %v2072
      %v2081 = vpack.c.b16 %v2078, %v2077
      %v2082 = vpack.c.b16 %v2080, %v2079
      %v2086 = vsel %vm367, %v2052, 0
      %v2089 = vsel %vm367, %v2053, 0
      %v2092 = vsel %vm367, %v2054, 0
      %v2095 = vsel %vm367, %v2055, 0
      %v2098 = vsel %vm367, %v2056, 0
      %v2101 = vsel %vm367, %v2057, 0
      %v2104 = vsel %vm367, %v2058, 0
      %v2107 = vsel %vm367, %v2059, 0
      %v2110 = vsel %vm367, %v2060, 0
      %v2113 = vsel %vm367, %v2061, 0
      %v2116 = vsel %vm367, %v2062, 0
      %v2119 = vsel %vm367, %v2063, 0
      %v2122 = vsel %vm367, %v2064, 0
      %v2125 = vsel %vm367, %v2065, 0
      %v2128 = vsel %vm367, %v2066, 0
      %v2131 = vsel %vm367, %v2067, 0
      %2133 = vmatpush.bf16.msra.mxu0 0
      %2134 = vmatpush.bf16.msra.mxu0 0
      %2135 = vmatpush.bf16.msra.mxu0 0
      %2136 = vmatpush.bf16.msra.mxu0 0
      %2137 = vmatpush.bf16.msra.mxu0 0
      %2138 = vmatpush.bf16.msra.mxu0 0
      %2139 = vmatpush.bf16.msra.mxu0 %v2082
      %2140 = vmatpush.bf16.msra.mxu0 %v2081
      %2141 = vmatmul.bf16.gmra.mxu0 %v2086
      %v2142 = vpop.f32.mrf.mxu0
      %v2143 = vadd.f32 0.0, %v2142
      %v2144 = vpop.f32.mrf.mxu0
      %v2145 = vadd.f32 0.0, %v2144
      %2146 = vmatmul.bf16.gmra.mxu0 %v2089
      %v2147 = vpop.f32.mrf.mxu0
      %v2148 = vadd.f32 0.0, %v2147
      %v2149 = vpop.f32.mrf.mxu0
      %v2150 = vadd.f32 0.0, %v2149
      %2151 = vmatmul.bf16.gmra.mxu0 %v2092
      %v2152 = vpop.f32.mrf.mxu0
      %v2153 = vadd.f32 0.0, %v2152
      %v2154 = vpop.f32.mrf.mxu0
      %v2155 = vadd.f32 0.0, %v2154
      %2156 = vmatmul.bf16.gmra.mxu0 %v2095
      %v2157 = vpop.f32.mrf.mxu0
      %v2158 = vadd.f32 0.0, %v2157
      %v2159 = vpop.f32.mrf.mxu0
      %v2160 = vadd.f32 0.0, %v2159
      %2161 = vmatmul.bf16.gmra.mxu0 %v2098
      %v2162 = vpop.f32.mrf.mxu0
      %v2163 = vadd.f32 0.0, %v2162
      %v2164 = vpop.f32.mrf.mxu0
      %v2165 = vadd.f32 0.0, %v2164
      %2166 = vmatmul.bf16.gmra.mxu0 %v2101
      %v2167 = vpop.f32.mrf.mxu0
      %v2168 = vadd.f32 0.0, %v2167
      %v2169 = vpop.f32.mrf.mxu0
      %v2170 = vadd.f32 0.0, %v2169
      %2171 = vmatmul.bf16.gmra.mxu0 %v2104
      %v2172 = vpop.f32.mrf.mxu0
      %v2173 = vadd.f32 0.0, %v2172
      %v2174 = vpop.f32.mrf.mxu0
      %v2175 = vadd.f32 0.0, %v2174
      %2176 = vmatmul.bf16.gmra.mxu0 %v2107
      %v2177 = vpop.f32.mrf.mxu0
      %v2178 = vadd.f32 0.0, %v2177
      %v2179 = vpop.f32.mrf.mxu0
      %v2180 = vadd.f32 0.0, %v2179
      %2181 = vmatmul.bf16.gmra.mxu0 %v2110
      %v2182 = vpop.f32.mrf.mxu0
      %v2183 = vadd.f32 0.0, %v2182
      %v2184 = vpop.f32.mrf.mxu0
      %v2185 = vadd.f32 0.0, %v2184
      %2186 = vmatmul.bf16.gmra.mxu0 %v2113
      %v2187 = vpop.f32.mrf.mxu0
      %v2188 = vadd.f32 0.0, %v2187
      %v2189 = vpop.f32.mrf.mxu0
      %v2190 = vadd.f32 0.0, %v2189
      %2191 = vmatmul.bf16.gmra.mxu0 %v2116
      %v2192 = vpop.f32.mrf.mxu0
      %v2193 = vadd.f32 0.0, %v2192
      %v2194 = vpop.f32.mrf.mxu0
      %v2195 = vadd.f32 0.0, %v2194
      %2196 = vmatmul.bf16.gmra.mxu0 %v2119
      %v2197 = vpop.f32.mrf.mxu0
      %v2198 = vadd.f32 0.0, %v2197
      %v2199 = vpop.f32.mrf.mxu0
      %v2200 = vadd.f32 0.0, %v2199
      %2201 = vmatmul.bf16.gmra.mxu0 %v2122
      %v2202 = vpop.f32.mrf.mxu0
      %v2203 = vadd.f32 0.0, %v2202
      %v2204 = vpop.f32.mrf.mxu0
      %v2205 = vadd.f32 0.0, %v2204
      %2206 = vmatmul.bf16.gmra.mxu0 %v2125
      %v2207 = vpop.f32.mrf.mxu0
      %v2208 = vadd.f32 0.0, %v2207
      %v2209 = vpop.f32.mrf.mxu0
      %v2210 = vadd.f32 0.0, %v2209
      %2211 = vmatmul.bf16.gmra.mxu0 %v2128
      %v2212 = vpop.f32.mrf.mxu0
      %v2213 = vadd.f32 0.0, %v2212
      %v2214 = vpop.f32.mrf.mxu0
      %v2215 = vadd.f32 0.0, %v2214
      %2216 = vmatmul.bf16.gmra.mxu0 %v2131
      %v2217 = vpop.f32.mrf.mxu0
      %v2218 = vadd.f32 0.0, %v2217
      %v2219 = vpop.f32.mrf.mxu0
      %v2220 = vadd.f32 0.0, %v2219
      %2221 = vdwg.mxu0
      %v2222 = vadd.f32 %v1988, %v2143
      %v2223 = vadd.f32 %v1989, %v2145
      %v2224 = vadd.f32 %v1990, %v2148
      %v2225 = vadd.f32 %v1991, %v2150
      %v2226 = vadd.f32 %v1992, %v2153
      %v2227 = vadd.f32 %v1993, %v2155
      %v2228 = vadd.f32 %v1994, %v2158
      %v2229 = vadd.f32 %v1995, %v2160
      %v2230 = vadd.f32 %v1996, %v2163
      %v2231 = vadd.f32 %v1997, %v2165
      %v2232 = vadd.f32 %v1998, %v2168
      %v2233 = vadd.f32 %v1999, %v2170
      %v2234 = vadd.f32 %v2000, %v2173
      %v2235 = vadd.f32 %v2001, %v2175
      %v2236 = vadd.f32 %v2002, %v2178
      %v2237 = vadd.f32 %v2003, %v2180
      %v2238 = vadd.f32 %v2004, %v2183
      %v2239 = vadd.f32 %v2005, %v2185
      %v2240 = vadd.f32 %v2006, %v2188
      %v2241 = vadd.f32 %v2007, %v2190
      %v2242 = vadd.f32 %v2008, %v2193
      %v2243 = vadd.f32 %v2009, %v2195
      %v2244 = vadd.f32 %v2010, %v2198
      %v2245 = vadd.f32 %v2011, %v2200
      %v2246 = vadd.f32 %v2012, %v2203
      %v2247 = vadd.f32 %v2013, %v2205
      %v2248 = vadd.f32 %v2014, %v2208
      %v2249 = vadd.f32 %v2015, %v2210
      %v2250 = vadd.f32 %v2016, %v2213
      %v2251 = vadd.f32 %v2017, %v2215
      %v2252 = vadd.f32 %v2018, %v2218
      %v2253 = vadd.f32 %v2019, %v2220
      %v2254 = vld [vmem:[%s1785 + $0x2] sm:$0xff]
      %v2255 = vld [vmem:[%s1785 + $0xa] sm:$0xff]
      %v2256 = vld [vmem:[%s1785 + $0x1a] sm:$0xff]
      %v2257 = vld [vmem:[%s1785 + $0x22] sm:$0xff]
      %v2258 = vld [vmem:[%s1785 + $0x32] sm:$0xff]
      %v2259 = vld [vmem:[%s1785 + $0x3a] sm:$0xff]
      %v2260 = vld [vmem:[%s1785 + $0x4a] sm:$0xff]
      %v2261 = vld [vmem:[%s1785 + $0x52] sm:$0xff]
      %v2262 = vld [vmem:[%s1785 + $0x62] sm:$0xff]
      %v2263 = vld [vmem:[%s1785 + $0x6a] sm:$0xff]
      %v2264 = vld [vmem:[%s1785 + $0x7a] sm:$0xff]
      %v2265 = vld [vmem:[%s1785 + $0x82] sm:$0xff]
      %v2266 = vld [vmem:[%s1785 + $0x92] sm:$0xff]
      %v2267 = vld [vmem:[%s1785 + $0x9a] sm:$0xff]
      %v2268 = vld [vmem:[%s1785 + $0xaa] sm:$0xff]
      %v2269 = vld [vmem:[%s1785 + $0xb2] sm:$0xff]
      %v2270 = vld [vmem:[%s1785 + $0xc2] sm:$0xff]
      %v2271 = vld [vmem:[%s1785 + $0xca] sm:$0xff]
      %v2272 = vld [vmem:[%s1785 + $0xda] sm:$0xff]
      %v2273 = vld [vmem:[%s1785 + $0xe2] sm:$0xff]
      %v2274 = vld [vmem:[%s1785 + $0xf2] sm:$0xff]
      %v2275 = vld [vmem:[%s1785 + $0xfa] sm:$0xff]
      %v2276 = vld [vmem:[%s1785 + $0x10a] sm:$0xff]
      %v2277 = vld [vmem:[%s1785 + $0x112] sm:$0xff]
      %v2278 = vld [vmem:[%s1785 + $0x122] sm:$0xff]
      %v2279 = vld [vmem:[%s1785 + $0x12a] sm:$0xff]
      %v2280 = vld [vmem:[%s1785 + $0x13a] sm:$0xff]
      %v2281 = vld [vmem:[%s1785 + $0x142] sm:$0xff]
      %v2282 = vld [vmem:[%s1785 + $0x152] sm:$0xff]
      %v2283 = vld [vmem:[%s1785 + $0x15a] sm:$0xff]
      %v2284 = vld [vmem:[%s1785 + $0x16a] sm:$0xff]
      %v2285 = vld [vmem:[%s1785 + $0x172] sm:$0xff]
      %v2286 = vpack.c.bf16 %v2255, %v2254
      %v2287 = vpack.c.bf16 %v2257, %v2256
      %v2288 = vpack.c.bf16 %v2259, %v2258
      %v2289 = vpack.c.bf16 %v2261, %v2260
      %v2290 = vpack.c.bf16 %v2263, %v2262
      %v2291 = vpack.c.bf16 %v2265, %v2264
      %v2292 = vpack.c.bf16 %v2267, %v2266
      %v2293 = vpack.c.bf16 %v2269, %v2268
      %v2294 = vpack.c.bf16 %v2271, %v2270
      %v2295 = vpack.c.bf16 %v2273, %v2272
      %v2296 = vpack.c.bf16 %v2275, %v2274
      %v2297 = vpack.c.bf16 %v2277, %v2276
      %v2298 = vpack.c.bf16 %v2279, %v2278
      %v2299 = vpack.c.bf16 %v2281, %v2280
      %v2300 = vpack.c.bf16 %v2283, %v2282
      %v2301 = vpack.c.bf16 %v2285, %v2284
      %s2302 = scalar_lea.vmem %s3, 128
      %v2303 = vld [vmem:[%s2302] sm:$0xf]
      %v2304 = vld [vmem:[%s2302 + $0x4] sm:$0xf]
      %v2305 = vld [vmem:[%s2302 + $0x8] sm:$0xf]
      %v2306 = vld [vmem:[%s2302 + $0xc] sm:$0xf]
      %v2311 = vunpack.c.l.b16 %v2303
      %v2312 = vunpack.c.l.b16 %v2304
      %v2313 = vunpack.c.l.b16 %v2305
      %v2314 = vunpack.c.l.b16 %v2306
      %v2315 = vpack.c.b16 %v2312, %v2311
      %v2316 = vpack.c.b16 %v2314, %v2313
      %v2320 = vsel %vm367, %v2286, 0
      %v2323 = vsel %vm367, %v2287, 0
      %v2326 = vsel %vm367, %v2288, 0
      %v2329 = vsel %vm367, %v2289, 0
      %v2332 = vsel %vm367, %v2290, 0
      %v2335 = vsel %vm367, %v2291, 0
      %v2338 = vsel %vm367, %v2292, 0
      %v2341 = vsel %vm367, %v2293, 0
      %v2344 = vsel %vm367, %v2294, 0
      %v2347 = vsel %vm367, %v2295, 0
      %v2350 = vsel %vm367, %v2296, 0
      %v2353 = vsel %vm367, %v2297, 0
      %v2356 = vsel %vm367, %v2298, 0
      %v2359 = vsel %vm367, %v2299, 0
      %v2362 = vsel %vm367, %v2300, 0
      %v2365 = vsel %vm367, %v2301, 0
      %2367 = vmatpush.bf16.msra.mxu0 0
      %2368 = vmatpush.bf16.msra.mxu0 0
      %2369 = vmatpush.bf16.msra.mxu0 0
      %2370 = vmatpush.bf16.msra.mxu0 0
      %2371 = vmatpush.bf16.msra.mxu0 0
      %2372 = vmatpush.bf16.msra.mxu0 0
      %2373 = vmatpush.bf16.msra.mxu0 %v2316
      %2374 = vmatpush.bf16.msra.mxu0 %v2315
      %2375 = vmatmul.bf16.gmra.mxu0 %v2320
      %v2376 = vpop.f32.mrf.mxu0
      %v2377 = vadd.f32 0.0, %v2376
      %v2378 = vpop.f32.mrf.mxu0
      %v2379 = vadd.f32 0.0, %v2378
      %2380 = vmatmul.bf16.gmra.mxu0 %v2323
      %v2381 = vpop.f32.mrf.mxu0
      %v2382 = vadd.f32 0.0, %v2381
      %v2383 = vpop.f32.mrf.mxu0
      %v2384 = vadd.f32 0.0, %v2383
      %2385 = vmatmul.bf16.gmra.mxu0 %v2326
      %v2386 = vpop.f32.mrf.mxu0
      %v2387 = vadd.f32 0.0, %v2386
      %v2388 = vpop.f32.mrf.mxu0
      %v2389 = vadd.f32 0.0, %v2388
      %2390 = vmatmul.bf16.gmra.mxu0 %v2329
      %v2391 = vpop.f32.mrf.mxu0
      %v2392 = vadd.f32 0.0, %v2391
      %v2393 = vpop.f32.mrf.mxu0
      %v2394 = vadd.f32 0.0, %v2393
      %2395 = vmatmul.bf16.gmra.mxu0 %v2332
      %v2396 = vpop.f32.mrf.mxu0
      %v2397 = vadd.f32 0.0, %v2396
      %v2398 = vpop.f32.mrf.mxu0
      %v2399 = vadd.f32 0.0, %v2398
      %2400 = vmatmul.bf16.gmra.mxu0 %v2335
      %v2401 = vpop.f32.mrf.mxu0
      %v2402 = vadd.f32 0.0, %v2401
      %v2403 = vpop.f32.mrf.mxu0
      %v2404 = vadd.f32 0.0, %v2403
      %2405 = vmatmul.bf16.gmra.mxu0 %v2338
      %v2406 = vpop.f32.mrf.mxu0
      %v2407 = vadd.f32 0.0, %v2406
      %v2408 = vpop.f32.mrf.mxu0
      %v2409 = vadd.f32 0.0, %v2408
      %2410 = vmatmul.bf16.gmra.mxu0 %v2341
      %v2411 = vpop.f32.mrf.mxu0
      %v2412 = vadd.f32 0.0, %v2411
      %v2413 = vpop.f32.mrf.mxu0
      %v2414 = vadd.f32 0.0, %v2413
      %2415 = vmatmul.bf16.gmra.mxu0 %v2344
      %v2416 = vpop.f32.mrf.mxu0
      %v2417 = vadd.f32 0.0, %v2416
      %v2418 = vpop.f32.mrf.mxu0
      %v2419 = vadd.f32 0.0, %v2418
      %2420 = vmatmul.bf16.gmra.mxu0 %v2347
      %v2421 = vpop.f32.mrf.mxu0
      %v2422 = vadd.f32 0.0, %v2421
      %v2423 = vpop.f32.mrf.mxu0
      %v2424 = vadd.f32 0.0, %v2423
      %2425 = vmatmul.bf16.gmra.mxu0 %v2350
      %v2426 = vpop.f32.mrf.mxu0
      %v2427 = vadd.f32 0.0, %v2426
      %v2428 = vpop.f32.mrf.mxu0
      %v2429 = vadd.f32 0.0, %v2428
      %2430 = vmatmul.bf16.gmra.mxu0 %v2353
      %v2431 = vpop.f32.mrf.mxu0
      %v2432 = vadd.f32 0.0, %v2431
      %v2433 = vpop.f32.mrf.mxu0
      %v2434 = vadd.f32 0.0, %v2433
      %2435 = vmatmul.bf16.gmra.mxu0 %v2356
      %v2436 = vpop.f32.mrf.mxu0
      %v2437 = vadd.f32 0.0, %v2436
      %v2438 = vpop.f32.mrf.mxu0
      %v2439 = vadd.f32 0.0, %v2438
      %2440 = vmatmul.bf16.gmra.mxu0 %v2359
      %v2441 = vpop.f32.mrf.mxu0
      %v2442 = vadd.f32 0.0, %v2441
      %v2443 = vpop.f32.mrf.mxu0
      %v2444 = vadd.f32 0.0, %v2443
      %2445 = vmatmul.bf16.gmra.mxu0 %v2362
      %v2446 = vpop.f32.mrf.mxu0
      %v2447 = vadd.f32 0.0, %v2446
      %v2448 = vpop.f32.mrf.mxu0
      %v2449 = vadd.f32 0.0, %v2448
      %2450 = vmatmul.bf16.gmra.mxu0 %v2365
      %v2451 = vpop.f32.mrf.mxu0
      %v2452 = vadd.f32 0.0, %v2451
      %v2453 = vpop.f32.mrf.mxu0
      %v2454 = vadd.f32 0.0, %v2453
      %2455 = vdwg.mxu0
      %v2456 = vadd.f32 %v2222, %v2377
      %v2457 = vadd.f32 %v2223, %v2379
      %v2458 = vadd.f32 %v2224, %v2382
      %v2459 = vadd.f32 %v2225, %v2384
      %v2460 = vadd.f32 %v2226, %v2387
      %v2461 = vadd.f32 %v2227, %v2389
      %v2462 = vadd.f32 %v2228, %v2392
      %v2463 = vadd.f32 %v2229, %v2394
      %v2464 = vadd.f32 %v2230, %v2397
      %v2465 = vadd.f32 %v2231, %v2399
      %v2466 = vadd.f32 %v2232, %v2402
      %v2467 = vadd.f32 %v2233, %v2404
      %v2468 = vadd.f32 %v2234, %v2407
      %v2469 = vadd.f32 %v2235, %v2409
      %v2470 = vadd.f32 %v2236, %v2412
      %v2471 = vadd.f32 %v2237, %v2414
      %v2472 = vadd.f32 %v2238, %v2417
      %v2473 = vadd.f32 %v2239, %v2419
      %v2474 = vadd.f32 %v2240, %v2422
      %v2475 = vadd.f32 %v2241, %v2424
      %v2476 = vadd.f32 %v2242, %v2427
      %v2477 = vadd.f32 %v2243, %v2429
      %v2478 = vadd.f32 %v2244, %v2432
      %v2479 = vadd.f32 %v2245, %v2434
      %v2480 = vadd.f32 %v2246, %v2437
      %v2481 = vadd.f32 %v2247, %v2439
      %v2482 = vadd.f32 %v2248, %v2442
      %v2483 = vadd.f32 %v2249, %v2444
      %v2484 = vadd.f32 %v2250, %v2447
      %v2485 = vadd.f32 %v2251, %v2449
      %v2486 = vadd.f32 %v2252, %v2452
      %v2487 = vadd.f32 %v2253, %v2454
      %2488 = vst.msk [vmem:[%s197] sm:$0xff] %vm367, %v2456
      %2489 = vst.msk [vmem:[%s197 + $0x8] sm:$0xff] %vm367, %v2457
      %2490 = vst.msk [vmem:[%s197 + $0x10] sm:$0xff] %vm367, %v2458
      %2491 = vst.msk [vmem:[%s197 + $0x18] sm:$0xff] %vm367, %v2459
      %2492 = vst.msk [vmem:[%s197 + $0x20] sm:$0xff] %vm367, %v2460
      %2493 = vst.msk [vmem:[%s197 + $0x28] sm:$0xff] %vm367, %v2461
      %2494 = vst.msk [vmem:[%s197 + $0x30] sm:$0xff] %vm367, %v2462
      %2495 = vst.msk [vmem:[%s197 + $0x38] sm:$0xff] %vm367, %v2463
      %2496 = vst.msk [vmem:[%s197 + $0x40] sm:$0xff] %vm367, %v2464
      %2497 = vst.msk [vmem:[%s197 + $0x48] sm:$0xff] %vm367, %v2465
      %2498 = vst.msk [vmem:[%s197 + $0x50] sm:$0xff] %vm367, %v2466
      %2499 = vst.msk [vmem:[%s197 + $0x58] sm:$0xff] %vm367, %v2467
      %2500 = vst.msk [vmem:[%s197 + $0x60] sm:$0xff] %vm367, %v2468
      %2501 = vst.msk [vmem:[%s197 + $0x68] sm:$0xff] %vm367, %v2469
      %2502 = vst.msk [vmem:[%s197 + $0x70] sm:$0xff] %vm367, %v2470
      %2503 = vst.msk [vmem:[%s197 + $0x78] sm:$0xff] %vm367, %v2471
      %2504 = vst.msk [vmem:[%s197 + $0x80] sm:$0xff] %vm367, %v2472
      %2505 = vst.msk [vmem:[%s197 + $0x88] sm:$0xff] %vm367, %v2473
      %2506 = vst.msk [vmem:[%s197 + $0x90] sm:$0xff] %vm367, %v2474
      %2507 = vst.msk [vmem:[%s197 + $0x98] sm:$0xff] %vm367, %v2475
      %2508 = vst.msk [vmem:[%s197 + $0xa0] sm:$0xff] %vm367, %v2476
      %2509 = vst.msk [vmem:[%s197 + $0xa8] sm:$0xff] %vm367, %v2477
      %2510 = vst.msk [vmem:[%s197 + $0xb0] sm:$0xff] %vm367, %v2478
      %2511 = vst.msk [vmem:[%s197 + $0xb8] sm:$0xff] %vm367, %v2479
      %2512 = vst.msk [vmem:[%s197 + $0xc0] sm:$0xff] %vm367, %v2480
      %2513 = vst.msk [vmem:[%s197 + $0xc8] sm:$0xff] %vm367, %v2481
      %2514 = vst.msk [vmem:[%s197 + $0xd0] sm:$0xff] %vm367, %v2482
      %2515 = vst.msk [vmem:[%s197 + $0xd8] sm:$0xff] %vm367, %v2483
      %2516 = vst.msk [vmem:[%s197 + $0xe0] sm:$0xff] %vm367, %v2484
      %2517 = vst.msk [vmem:[%s197 + $0xe8] sm:$0xff] %vm367, %v2485
      %2518 = vst.msk [vmem:[%s197 + $0xf0] sm:$0xff] %vm367, %v2486
      %2519 = vst.msk [vmem:[%s197 + $0xf8] sm:$0xff] %vm367, %v2487
      %p2520 = scmp.lt.s32.totalorder %s15, 1
      %s2521 = scalar_select %p2520, %s15, 1
      %s2522 = smul.addr %s2521, 32
      %s2523 = smul.addr %s2522, 8
      %s2524 = scalar_lea.vmem %s4, %s2523
      // Predicated region
      $region37: #{upsampling_sequence_forward.3} parent=35 // pred_check
        %p2525 = pneg %p122
      $region38: #{upsampling_sequence_forward.3} parent=35 // pred_check_branch
        %2527 = sbr.rel (%p2525) target = $region40
      $region39: #{upsampling_sequence_forward.3} parent=35 // pred_region
        _
      $region40: #{upsampling_sequence_forward.3} parent=35 // pred_fallthru
        _
    $region36: #{upsampling_sequence_forward.3} parent=5 // pred_fallthru
      _
    %p2528 = scmp.le.s32.totalorder 2, %s10
    // Predicated region
    $region41: #{upsampling_sequence_forward.3} parent=5 // pred_check
      %p2529 = pneg %p2528
    $region42: #{upsampling_sequence_forward.3} parent=5 // pred_check_branch
      %2531 = sbr.rel (%p2529) target = $region44
    $region43: #{upsampling_sequence_forward.3} parent=5 // pred_region
      %s2532 = ssub.s32 %s10, 2
      // Predicated region
      $region45: #{upsampling_sequence_forward.3} parent=43 // pred_check
        %p2533 = pneg %p128
      $region46: #{upsampling_sequence_forward.3} parent=43 // pred_check_branch
        %2535 = sbr.rel (%p2533) target = $region48
      $region47: #{upsampling_sequence_forward.3} parent=43 // pred_region
        %p2536 = scmp.lt.s32.totalorder %s16, 1
        %s2537 = scalar_select %p2536, %s16, 1
        %s2538 = smul.addr %s2537, 32
        %s2539 = smul.addr %s2538, 8
        %s2540 = scalar_lea.vmem %s4, %s2539
      $region48: #{upsampling_sequence_forward.3} parent=43 // pred_fallthru
        _
    $region44: #{upsampling_sequence_forward.3} parent=5 // pred_fallthru
      _
  $region6: #{upsampling_sequence_forward.3} parent=0 // loop_footer
    %s14 = sadd.s32 1, %s10
  $region7: #{upsampling_sequence_forward.3} parent=0 // loop_footer_branch
    %9 = sbr.rel target = $region3
  $region8: #{upsampling_sequence_forward.3} parent=0 // loop_exit
    _

</llo_original>
